<compile_context>
chip_gen: v5e
topology: v5e:2x2
jax: 0.10.0
libtpu: 0.0.40
codegen_flags: <defaults>
</compile_context>

<pallas_src>
import math
import numpy as np

import jax
import jax.numpy as jnp
from jax.experimental import pallas as pl
from jax.experimental.pallas import tpu as pltpu

# ---- hyper-parameters mirroring NSE(theta_dim=D, x_dim=L), FNet(128, n_layers=1) ----
THETA_DIM = 4          # D
X_DIM = 8              # L
EMB = 128              # dim_embedding
HALF = EMB // 2        # _FBlock out_channels (128 // 2**1)
N_GROUPS = 16
BETA_MIN = 0.1
BETA_MAX = 40.0
BETA_D = BETA_MAX - BETA_MIN
M_PE = 1000
EPS_T = 1e-5
GN_EPS = 1e-5
SKIP_SCALE = 0.5 ** 0.5
SIGMA_C = math.exp(-16.0)


def _round_up(v, m):
    return (v + m - 1) // m * m


# --------------------- packed one-row parameter slab layout -------------------
# Each field is padded to a 128-lane boundary so in-kernel slices are lane-tile
# aligned (no relayout).  Biases of summed matmuls are pre-combined.
_VEC_FIELDS = (
    ("b_incond", 2 * EMB),                 # [b_in | b_cond]
    ("div2", EMB), ("phase", EMB),
    ("b_e0", 2 * EMB), ("g_e", 2 * EMB), ("be_e", 2 * EMB), ("b_e1", EMB),
    ("g_n0", EMB), ("b_n0", EMB),
    ("b_c0af", HALF),                      # b_c0 + b_af
    ("g_n1", HALF), ("b_n1", HALF),
    ("b_c1sk", HALF),                      # b_c1 + b_sk
    ("g_fin", HALF), ("b_fin", HALF),
)


def _build_vec_layout():
    layout, off = {}, 0
    for name, width in _VEC_FIELDS:
        layout[name] = (off, width)
        off += _round_up(width, 128)
    return layout, off


_VEC_LAYOUT, VEC_TOTAL = _build_vec_layout()


# ---------------- GroupNorm averaging matrix (per channel width) --------------
def _gn_p(c, groups=N_GROUPS):
    cg = c // groups
    same = (np.arange(c)[:, None] // cg == np.arange(c)[None, :] // cg)
    # Block-diagonal averaging matrix; entries 0 or 1/cg (powers of two -> exact bf16).
    return jnp.asarray(same.astype(np.float32) / cg, jnp.bfloat16)


def _pack_vec(p):
    """Pack all one-row parameters + PE buffers into a single (1, VEC_TOTAL) slab."""
    f32 = lambda a: jnp.asarray(a, jnp.float32)
    div = f32(p["div"])
    vals = {
        "b_incond": jnp.concatenate([f32(p["b_in"]), f32(p["b_cond"])]),
        # cat(sin(a), cos(a)) == sin(cat(a, a) + [0, pi/2]) -> lane-dense, no concat in-kernel.
        "div2": jnp.concatenate([div, div]),
        "phase": jnp.concatenate([jnp.zeros((HALF,), jnp.float32),
                                  jnp.full((HALF,), 0.5 * math.pi, jnp.float32)]),
        "b_e0": f32(p["b_e0"]), "g_e": f32(p["g_e"]), "be_e": f32(p["be_e"]),
        "b_e1": f32(p["b_e1"]),
        "g_n0": f32(p["g_n0"]), "b_n0": f32(p["b_n0"]),
        "b_c0af": f32(p["b_c0"]) + f32(p["b_af"]),
        "g_n1": f32(p["g_n1"]), "b_n1": f32(p["b_n1"]),
        "b_c1sk": f32(p["b_c1"]) + f32(p["b_sk"]),
        "g_fin": f32(p["g_fin"]), "b_fin": f32(p["b_fin"]),
    }
    slab = jnp.zeros((1, VEC_TOTAL), jnp.float32)
    for name, width in _VEC_FIELDS:
        off, _ = _VEC_LAYOUT[name]
        slab = slab.at[0, off:off + width].set(vals[name])
    return slab


# --------------------------------- kernel -----------------------------------
def nse_loss_kernel(
    packed_ref, t_ref,                          # tiled activations
    vec_ref,                                    # packed one-row params (1, VEC_TOTAL) f32
    rhs_in_ref, w_e0_ref, w_e1_ref,             # bf16 (merged) weights ...
    w_c0af_ref, w_c1sk_ref, w_fin_ref,
    p256_ref, p128_ref, p64_ref,                # GroupNorm averaging matrices (bf16)
    out_ref,                                    # (TB, 128) lane-dense per-row squared error
):
    def vf(name):                               # lazy, 128-aligned slab slice (load at use point)
        off, width = _VEC_LAYOUT[name]
        return vec_ref[:, off:off + width]

    def mm(a, w_ref):                           # bf16 operands at the MXU, f32 accumulate
        return jnp.dot(a.astype(jnp.bfloat16), w_ref[...],
                       preferred_element_type=jnp.float32)

    def silu(v):
        # sigmoid = exp (EUP) + approximate reciprocal (EUP); avoids a VALU f32 divide.
        return v * pl.reciprocal(1.0 + jnp.exp(-v), approx=True)

    def gn(h, p_ref, gname, bname):
        # mean and variance via single-pass bf16 matmuls against the block-diagonal
        # averaging matrix P (entries exact in bf16); dot(d*d, P) is already the
        # per-group variance broadcast to all channels -> lane-wide rsqrt on the EUP.
        mean = mm(h, p_ref)
        d = h - mean
        inv = jax.lax.rsqrt(mm(d * d, p_ref) + GN_EPS)
        return d * inv * vf(gname) + vf(bname)

    packed = packed_ref[...]                    # (TB, 384) f32
    t = t_ref[...]                              # (TB, 1)   f32
    theta_l = packed[:, 0:EMB]                  # theta in lanes 0:4, rest 0
    eps_l = packed[:, EMB:2 * EMB]              # eps   in lanes 0:4, rest 0
    x_l = packed[:, 2 * EMB:3 * EMB]            # x     in lanes 4:12, rest 0

    # ---- VP-SDE forward noising (NSE.alpha / NSE.sigma) ----
    log_alpha = 0.5 * BETA_D * t * t + BETA_MIN * t
    alpha_t = jnp.exp(-0.5 * log_alpha)
    sigma_t = jnp.sqrt(1.0 - alpha_t + SIGMA_C)
    lhs_in = jnp.sqrt(alpha_t) * theta_l + sigma_t * eps_l + x_l    # [theta_t | x | 0] (TB,128)

    # ---- FNet input / cond layers: one block-diagonal matmul ----
    res = mm(lhs_in, rhs_in_ref) + vf("b_incond")                   # (TB, 256) = [theta_emb | x_emb]
    theta_emb = res[:, :EMB]
    x_emb = res[:, EMB:]

    # time embedding: [sin(t*div), cos(t*div)] computed lane-dense via phase offset
    t_emb = jnp.sin(t * vf("div2") + vf("phase"))                   # (TB, 128)

    # ---- embedding_map ----
    h = mm(t_emb + x_emb, w_e0_ref) + vf("b_e0")                    # (TB, 256)
    h = silu(gn(h, p256_ref, "g_e", "be_e"))
    emb = mm(h, w_e1_ref) + vf("b_e1")                              # (TB, 128)

    # ---- _FBlock (in=EMB, out=EMB//2); conv0+affine and conv1+skip each merged ----
    orig = theta_emb
    h0 = silu(gn(theta_emb, p128_ref, "g_n0", "b_n0"))              # (TB, 128)
    lhs_a = jnp.concatenate([h0.astype(jnp.bfloat16),
                             emb.astype(jnp.bfloat16)], axis=-1)    # (TB, 256)
    h = mm(lhs_a, w_c0af_ref) + vf("b_c0af")                        # conv0(h0) + affine(emb)
    h1 = silu(gn(h, p64_ref, "g_n1", "b_n1"))                       # (TB, 64)
    # dropout(p=0.1) is identity in eval mode.
    # TODO(synk): training-mode dropout mask via pltpu.prng_random_bits if needed.
    lhs_b = jnp.concatenate([h1.astype(jnp.bfloat16),
                             jnp.zeros((h1.shape[0], HALF), jnp.bfloat16),
                             orig.astype(jnp.bfloat16)], axis=-1)   # (TB, 256)
    h = (mm(lhs_b, w_c1sk_ref) + vf("b_c1sk")) * SKIP_SCALE         # conv1(h1) + skip(orig)

    # ---- final layer (GroupNorm -> SiLU -> Linear, no bias; output padded to 128 lanes) ----
    hf = silu(gn(h, p64_ref, "g_fin", "b_fin"))
    eps_est = mm(hf, w_fin_ref)                                     # (TB, 128), lanes 4: are 0

    err = eps_est - eps_l                                           # lanes 4: are exactly 0
    out_ref[...] = err * err                                        # lane-dense per-row sq error


# -------------------------------- wrapper ------------------------------------
def nse_loss(theta, x, t, eps, params, *, block_batch=512):
    """Batch-tiled fused NSE DSM loss.

    block_batch guidance: v5e 512-1024, v6e 1024-2048, v7x <= 1024 (64 MiB
    physical VMEM; keep the grid >= 2 steps so both TensorCores get work).
    The 512 default is safe on all generations.
    """
    n = theta.shape[0]
    tb = _round_up(min(block_batch, n), 8)
    # Keep at least 2 grid steps when possible so megacore (v7x) splits the batch.
    tb = max(8, min(tb, _round_up((n + 1) // 2, 8)))
    n_pad = _round_up(n, tb)
    num_tiles = n_pad // tb

    # ---- pack theta / eps / x into one (N, 384) f32 array (one DMA per tile) ----
    packed = jnp.zeros((n_pad, 3 * EMB), jnp.float32)
    packed = packed.at[:n, 0:THETA_DIM].set(theta.astype(jnp.float32))
    packed = packed.at[:n, EMB:EMB + THETA_DIM].set(eps.astype(jnp.float32))
    packed = packed.at[:n, 2 * EMB + THETA_DIM:2 * EMB + THETA_DIM + X_DIM].set(
        x.astype(jnp.float32))
    t_pad = jnp.zeros((n_pad, 1), jnp.float32).at[:n].set(t.astype(jnp.float32))

    # ---- constants: packed slab + merged bf16 weights + GN averaging matrices ----
    bft = jnp.bfloat16
    slab = _pack_vec(params)
    rhs_in = jnp.zeros((EMB, 2 * EMB), bft)
    rhs_in = rhs_in.at[0:THETA_DIM, 0:EMB].set(params["w_in"].astype(bft))
    rhs_in = rhs_in.at[THETA_DIM:THETA_DIM + X_DIM, EMB:2 * EMB].set(
        params["w_cond"].astype(bft))
    w_c0af = jnp.concatenate([params["w_c0"].astype(bft),
                              params["w_af"].astype(bft)], axis=0)        # (256, 64)
    w_c1sk = jnp.concatenate([params["w_c1"].astype(bft),
                              jnp.zeros((HALF, HALF), bft),
                              params["w_sk"].astype(bft)], axis=0)        # (256, 64)
    w_finp = jnp.zeros((HALF, EMB), bft).at[:, 0:THETA_DIM].set(
        params["w_fin"].astype(bft))                                      # (64, 128)
    const_args = (slab, rhs_in,
                  params["w_e0"].astype(bft), params["w_e1"].astype(bft),
                  w_c0af, w_c1sk, w_finp,
                  _gn_p(2 * EMB), _gn_p(EMB), _gn_p(HALF))

    in_specs = [
        pl.BlockSpec((tb, 3 * EMB), lambda i: (i, 0)),
        pl.BlockSpec((tb, 1), lambda i: (i, 0)),
    ]
    # Constant index_map -> parameters are fetched once and stay VMEM-resident.
    # (Single-buffering them via pipeline_mode was considered; skipped for portability —
    #  the resident constants are < 1 MiB in bf16.)
    in_specs += [pl.BlockSpec(a.shape, lambda i: (0, 0)) for a in const_args]

    # VMEM budget scales with the tile size (floor 32 MiB, cap 100 MiB).
    vmem_limit = int(min(100 * 2**20, max(32 * 2**20, 4 * 2**20 + tb * 20 * 1024)))

    row_sq = pl.pallas_call(
        nse_loss_kernel,
        out_shape=jax.ShapeDtypeStruct((n_pad, EMB), jnp.float32),
        grid=(num_tiles,),
        in_specs=in_specs,
        out_specs=pl.BlockSpec((tb, EMB), lambda i: (i, 0)),
        compiler_params=pltpu.CompilerParams(
            dimension_semantics=("parallel",),       # v7x: both TensorCores split the batch
            vmem_limit_bytes=vmem_limit,
        ),
    )(packed, t_pad, *const_args)

    # Lanes >= THETA_DIM and padded rows are exactly zero / dropped here.
    return jnp.sum(row_sq[:n]) / n


# --------------------------- deterministic params ----------------------------
def init_params(key):
    """torch.nn.Linear-style init. Weights are stored bf16 (halved DMA/VMEM);
    the reference uses the same bf16-representable values upcast to f32."""
    def linear(k, fan_in, fan_out, bias=True):
        kw, kb = jax.random.split(k)
        bound = 1.0 / math.sqrt(fan_in)
        w = jax.random.uniform(kw, (fan_in, fan_out), jnp.float32,
                               -bound, bound).astype(jnp.bfloat16)
        b = (jax.random.uniform(kb, (fan_out,), jnp.float32, -bound, bound)
             if bias else None)
        return w, b

    ks = jax.random.split(key, 9)
    p = {}
    p["w_in"], p["b_in"] = linear(ks[0], THETA_DIM, EMB)              # FNet.input_layer
    p["w_cond"], p["b_cond"] = linear(ks[1], X_DIM, EMB)              # FNet.cond_layer
    p["div"] = 1.0 / (M_PE ** (2.0 * jnp.arange(0, EMB, 2, dtype=jnp.float32) / EMB))
    p["w_e0"], p["b_e0"] = linear(ks[2], EMB, 2 * EMB)                # embedding_map Linear 0
    p["g_e"] = jnp.ones((2 * EMB,), jnp.float32)                      # embedding_map GroupNorm
    p["be_e"] = jnp.zeros((2 * EMB,), jnp.float32)
    p["w_e1"], p["b_e1"] = linear(ks[3], 2 * EMB, EMB)                # embedding_map Linear 1
    p["g_n0"] = jnp.ones((EMB,), jnp.float32)                         # _FBlock.norm0
    p["b_n0"] = jnp.zeros((EMB,), jnp.float32)
    p["w_c0"], p["b_c0"] = linear(ks[4], EMB, HALF)                   # _FBlock.conv0
    p["w_af"], p["b_af"] = linear(ks[5], EMB, HALF)                   # _FBlock.affine
    p["g_n1"] = jnp.ones((HALF,), jnp.float32)                        # _FBlock.norm1
    p["b_n1"] = jnp.zeros((HALF,), jnp.float32)
    p["w_c1"], p["b_c1"] = linear(ks[6], HALF, HALF)                  # _FBlock.conv1
    p["w_sk"], p["b_sk"] = linear(ks[7], EMB, HALF)                   # _FBlock.skip
    p["g_fin"] = jnp.ones((HALF,), jnp.float32)                       # final GroupNorm
    p["b_fin"] = jnp.zeros((HALF,), jnp.float32)
    p["w_fin"], _ = linear(ks[8], HALF, THETA_DIM, bias=False)        # final Linear (no bias)
    return p


# ------------------------------ plain-JAX reference ---------------------------
def reference_loss(theta, x, t, eps, params):
    p = params
    f32 = lambda a: jnp.asarray(a, jnp.float32)

    def gn(h, gamma, beta):
        n, c = h.shape
        hg = h.reshape(n, N_GROUPS, c // N_GROUPS)
        mu = hg.mean(-1, keepdims=True)
        var = ((hg - mu) ** 2).mean(-1, keepdims=True)
        hn = ((hg - mu) / jnp.sqrt(var + GN_EPS)).reshape(n, c)
        return hn * gamma + beta

    silu = lambda v: v * jax.nn.sigmoid(v)
    mm = lambda a, w: jnp.dot(a, f32(w), precision=jax.lax.Precision.HIGHEST)

    log_alpha = 0.5 * BETA_D * t * t + BETA_MIN * t
    alpha_t = jnp.exp(-0.5 * log_alpha)
    sigma_t = jnp.sqrt(1.0 - alpha_t + SIGMA_C)
    theta_t = jnp.sqrt(alpha_t) * theta + sigma_t * eps

    theta_emb = mm(theta_t, p["w_in"]) + p["b_in"]
    x_emb = mm(x, p["w_cond"]) + p["b_cond"]
    arg = t * p["div"]
    t_emb = jnp.concatenate([jnp.sin(arg), jnp.cos(arg)], axis=-1)
    h = mm(t_emb + x_emb, p["w_e0"]) + p["b_e0"]
    emb = mm(silu(gn(h, p["g_e"], p["be_e"])), p["w_e1"]) + p["b_e1"]
    orig = theta_emb
    h = mm(silu(gn(theta_emb, p["g_n0"], p["b_n0"])), p["w_c0"]) + p["b_c0"]
    h = h + mm(emb, p["w_af"]) + p["b_af"]
    h = mm(silu(gn(h, p["g_n1"], p["b_n1"])), p["w_c1"]) + p["b_c1"]
    h = (h + mm(orig, p["w_sk"]) + p["b_sk"]) * SKIP_SCALE
    eps_est = mm(silu(gn(h, p["g_fin"], p["b_fin"])), p["w_fin"])
    return jnp.mean(jnp.sum((eps_est - eps) ** 2, axis=-1))


if __name__ == "__main__":
    N = 128
    key = jax.random.PRNGKey(0)
    k_theta, k_x, k_t, k_eps, k_params = jax.random.split(key, 5)

    theta = jax.random.normal(k_theta, (N, THETA_DIM), jnp.float32)
    x = jax.random.normal(k_x, (N, X_DIM), jnp.float32)
    # stochastic part of the DSM loss (t ~ U(eps_t, 1), eps ~ N(0, I)), drawn here:
    t = EPS_T + (1.0 - EPS_T) * jax.random.uniform(k_t, (N, 1), jnp.float32)
    eps = jax.random.normal(k_eps, (N, THETA_DIM), jnp.float32)
    params = init_params(k_params)

    # block_batch=64 -> 2 grid steps at N=128, exercising the batch pipeline.
    loss = jax.block_until_ready(nse_loss(theta, x, t, eps, params, block_batch=64))
    ref = jax.block_until_ready(reference_loss(theta, x, t, eps, params))

    assert bool(jnp.isfinite(loss)), loss
    assert abs(float(loss) - float(ref)) < 5e-2 * max(1.0, abs(float(ref))), (float(loss), float(ref))
    print("KERNEL_OK")
</pallas_src>

<mosaic_0001>
module attributes {stable_mosaic.version = 11 : i64} {
  func.func @nse_loss_kernel(%arg0: i32, %arg1: memref<64x384xf32, #tpu.memory_space<vmem>>, %arg2: memref<64x1xf32, #tpu.memory_space<vmem>>, %arg3: memref<1x2432xf32, #tpu.memory_space<vmem>>, %arg4: memref<128x256xbf16, #tpu.memory_space<vmem>>, %arg5: memref<128x256xbf16, #tpu.memory_space<vmem>>, %arg6: memref<256x128xbf16, #tpu.memory_space<vmem>>, %arg7: memref<256x64xbf16, #tpu.memory_space<vmem>>, %arg8: memref<256x64xbf16, #tpu.memory_space<vmem>>, %arg9: memref<64x128xbf16, #tpu.memory_space<vmem>>, %arg10: memref<256x256xbf16, #tpu.memory_space<vmem>>, %arg11: memref<128x128xbf16, #tpu.memory_space<vmem>>, %arg12: memref<64x64xbf16, #tpu.memory_space<vmem>>, %arg13: memref<64x128xf32, #tpu.memory_space<vmem>>) attributes {dimension_semantics = [#tpu.dimension_semantics<parallel>], iteration_bounds = array<i64: 2>, scalar_prefetch = 0 : i64, scratch_operands = 0 : i64, tpu.core_type = #tpu.core_type<tc>, window_params = [{transform_indices = @transform_0, window_bounds = array<i64: 64, 384>}, {transform_indices = @transform_1, window_bounds = array<i64: 64, 1>}, {pipeline_mode = #tpu.pipeline_mode<synchronous>, transform_indices = @transform_2, window_bounds = array<i64: 1, 2432>}, {pipeline_mode = #tpu.pipeline_mode<synchronous>, transform_indices = @transform_3, window_bounds = array<i64: 128, 256>}, {pipeline_mode = #tpu.pipeline_mode<synchronous>, transform_indices = @transform_4, window_bounds = array<i64: 128, 256>}, {pipeline_mode = #tpu.pipeline_mode<synchronous>, transform_indices = @transform_5, window_bounds = array<i64: 256, 128>}, {pipeline_mode = #tpu.pipeline_mode<synchronous>, transform_indices = @transform_6, window_bounds = array<i64: 256, 64>}, {pipeline_mode = #tpu.pipeline_mode<synchronous>, transform_indices = @transform_7, window_bounds = array<i64: 256, 64>}, {pipeline_mode = #tpu.pipeline_mode<synchronous>, transform_indices = @transform_8, window_bounds = array<i64: 64, 128>}, {pipeline_mode = #tpu.pipeline_mode<synchronous>, transform_indices = @transform_9, window_bounds = array<i64: 256, 256>}, {pipeline_mode = #tpu.pipeline_mode<synchronous>, transform_indices = @transform_10, window_bounds = array<i64: 128, 128>}, {pipeline_mode = #tpu.pipeline_mode<synchronous>, transform_indices = @transform_11, window_bounds = array<i64: 64, 64>}, {transform_indices = @transform_12, window_bounds = array<i64: 64, 128>}]} {
    %c0 = arith.constant 0 : index
    %c0_0 = arith.constant 0 : index
    %0 = vector.load %arg1[%c0, %c0_0] : memref<64x384xf32, #tpu.memory_space<vmem>>, vector<64x384xf32>
    %c0_1 = arith.constant 0 : index
    %c0_2 = arith.constant 0 : index
    %1 = vector.load %arg2[%c0_1, %c0_2] : memref<64x1xf32, #tpu.memory_space<vmem>>, vector<64x1xf32>
    %2 = vector.extract_strided_slice %0 {offsets = [0, 0], sizes = [64, 128], strides = [1, 1]} : vector<64x384xf32> to vector<64x128xf32>
    %3 = vector.extract_strided_slice %0 {offsets = [0, 128], sizes = [64, 128], strides = [1, 1]} : vector<64x384xf32> to vector<64x128xf32>
    %4 = vector.extract_strided_slice %0 {offsets = [0, 256], sizes = [64, 128], strides = [1, 1]} : vector<64x384xf32> to vector<64x128xf32>
    %cst = arith.constant 1.995000e+01 : f32
    %5 = vector.broadcast %cst : f32 to vector<64x1xf32>
    %6 = arith.mulf %5, %1 : vector<64x1xf32>
    %7 = arith.mulf %6, %1 : vector<64x1xf32>
    %cst_3 = arith.constant 1.000000e-01 : f32
    %8 = vector.broadcast %cst_3 : f32 to vector<64x1xf32>
    %9 = arith.mulf %8, %1 : vector<64x1xf32>
    %10 = arith.addf %7, %9 : vector<64x1xf32>
    %cst_4 = arith.constant -5.000000e-01 : f32
    %11 = vector.broadcast %cst_4 : f32 to vector<64x1xf32>
    %12 = arith.mulf %11, %10 : vector<64x1xf32>
    %13 = math.exp %12 : vector<64x1xf32>
    %cst_5 = arith.constant 1.000000e+00 : f32
    %14 = vector.broadcast %cst_5 : f32 to vector<64x1xf32>
    %15 = arith.subf %14, %13 : vector<64x1xf32>
    %cst_6 = arith.constant 1.12535176E-7 : f32
    %16 = vector.broadcast %cst_6 : f32 to vector<64x1xf32>
    %17 = arith.addf %15, %16 : vector<64x1xf32>
    %18 = math.sqrt %17 : vector<64x1xf32>
    %19 = math.sqrt %13 : vector<64x1xf32>
    %20 = vector.broadcast %19 : vector<64x1xf32> to vector<64x128xf32>
    %21 = arith.mulf %20, %2 : vector<64x128xf32>
    %22 = vector.broadcast %18 : vector<64x1xf32> to vector<64x128xf32>
    %23 = arith.mulf %22, %3 : vector<64x128xf32>
    %24 = arith.addf %21, %23 : vector<64x128xf32>
    %25 = arith.addf %24, %4 : vector<64x128xf32>
    %26 = arith.truncf %25 : vector<64x128xf32> to vector<64x128xbf16>
    %c0_7 = arith.constant 0 : index
    %c0_8 = arith.constant 0 : index
    %27 = vector.load %arg4[%c0_7, %c0_8] : memref<128x256xbf16, #tpu.memory_space<vmem>>, vector<128x256xbf16>
    %cst_9 = arith.constant dense<0.000000e+00> : vector<64x256xf32>
    %28 = tpu.matmul %26, %27, %cst_9 {dimension_numbers = #tpu.dot_dimension_numbers<[1], [0], [0], [1], [0, 0, 1, 1], [], []>} : vector<64x128xbf16>, vector<128x256xbf16>, vector<64x256xf32> -> vector<64x256xf32>
    %c0_10 = arith.constant 0 : index
    %c0_11 = arith.constant 0 : index
    %29 = vector.load %arg3[%c0_10, %c0_11] : memref<1x2432xf32, #tpu.memory_space<vmem>>, vector<1x256xf32>
    %30 = vector.broadcast %29 : vector<1x256xf32> to vector<64x256xf32>
    %31 = arith.addf %28, %30 : vector<64x256xf32>
    %32 = vector.extract_strided_slice %31 {offsets = [0, 0], sizes = [64, 128], strides = [1, 1]} : vector<64x256xf32> to vector<64x128xf32>
    %33 = vector.extract_strided_slice %31 {offsets = [0, 128], sizes = [64, 128], strides = [1, 1]} : vector<64x256xf32> to vector<64x128xf32>
    %c0_12 = arith.constant 0 : index
    %c256 = arith.constant 256 : index
    %34 = vector.load %arg3[%c0_12, %c256] : memref<1x2432xf32, #tpu.memory_space<vmem>>, vector<1x128xf32>
    %35 = vector.broadcast %1 : vector<64x1xf32> to vector<64x128xf32>
    %36 = vector.broadcast %34 : vector<1x128xf32> to vector<64x128xf32>
    %37 = arith.mulf %35, %36 : vector<64x128xf32>
    %c0_13 = arith.constant 0 : index
    %c384 = arith.constant 384 : index
    %38 = vector.load %arg3[%c0_13, %c384] : memref<1x2432xf32, #tpu.memory_space<vmem>>, vector<1x128xf32>
    %39 = vector.broadcast %38 : vector<1x128xf32> to vector<64x128xf32>
    %40 = arith.addf %37, %39 : vector<64x128xf32>
    %41 = math.sin %40 : vector<64x128xf32>
    %42 = arith.addf %41, %33 : vector<64x128xf32>
    %43 = arith.truncf %42 : vector<64x128xf32> to vector<64x128xbf16>
    %c0_14 = arith.constant 0 : index
    %c0_15 = arith.constant 0 : index
    %44 = vector.load %arg5[%c0_14, %c0_15] : memref<128x256xbf16, #tpu.memory_space<vmem>>, vector<128x256xbf16>
    %cst_16 = arith.constant dense<0.000000e+00> : vector<64x256xf32>
    %45 = tpu.matmul %43, %44, %cst_16 {dimension_numbers = #tpu.dot_dimension_numbers<[1], [0], [0], [1], [0, 0, 1, 1], [], []>} : vector<64x128xbf16>, vector<128x256xbf16>, vector<64x256xf32> -> vector<64x256xf32>
    %c0_17 = arith.constant 0 : index
    %c512 = arith.constant 512 : index
    %46 = vector.load %arg3[%c0_17, %c512] : memref<1x2432xf32, #tpu.memory_space<vmem>>, vector<1x256xf32>
    %47 = vector.broadcast %46 : vector<1x256xf32> to vector<64x256xf32>
    %48 = arith.addf %45, %47 : vector<64x256xf32>
    %49 = arith.truncf %48 : vector<64x256xf32> to vector<64x256xbf16>
    %c0_18 = arith.constant 0 : index
    %c0_19 = arith.constant 0 : index
    %50 = vector.load %arg10[%c0_18, %c0_19] : memref<256x256xbf16, #tpu.memory_space<vmem>>, vector<256x256xbf16>
    %cst_20 = arith.constant dense<0.000000e+00> : vector<64x256xf32>
    %51 = tpu.matmul %49, %50, %cst_20 {dimension_numbers = #tpu.dot_dimension_numbers<[1], [0], [0], [1], [0, 0, 1, 1], [], []>} : vector<64x256xbf16>, vector<256x256xbf16>, vector<64x256xf32> -> vector<64x256xf32>
    %52 = arith.subf %48, %51 : vector<64x256xf32>
    %53 = arith.mulf %52, %52 : vector<64x256xf32>
    %54 = arith.truncf %53 : vector<64x256xf32> to vector<64x256xbf16>
    %c0_21 = arith.constant 0 : index
    %c0_22 = arith.constant 0 : index
    %55 = vector.load %arg10[%c0_21, %c0_22] : memref<256x256xbf16, #tpu.memory_space<vmem>>, vector<256x256xbf16>
    %cst_23 = arith.constant dense<0.000000e+00> : vector<64x256xf32>
    %56 = tpu.matmul %54, %55, %cst_23 {dimension_numbers = #tpu.dot_dimension_numbers<[1], [0], [0], [1], [0, 0, 1, 1], [], []>} : vector<64x256xbf16>, vector<256x256xbf16>, vector<64x256xf32> -> vector<64x256xf32>
    %cst_24 = arith.constant 9.99999974E-6 : f32
    %57 = vector.broadcast %cst_24 : f32 to vector<64x256xf32>
    %58 = arith.addf %56, %57 : vector<64x256xf32>
    %59 = math.rsqrt %58 : vector<64x256xf32>
    %60 = arith.mulf %52, %59 : vector<64x256xf32>
    %c0_25 = arith.constant 0 : index
    %c768 = arith.constant 768 : index
    %61 = vector.load %arg3[%c0_25, %c768] : memref<1x2432xf32, #tpu.memory_space<vmem>>, vector<1x256xf32>
    %62 = vector.broadcast %61 : vector<1x256xf32> to vector<64x256xf32>
    %63 = arith.mulf %60, %62 : vector<64x256xf32>
    %c0_26 = arith.constant 0 : index
    %c1024 = arith.constant 1024 : index
    %64 = vector.load %arg3[%c0_26, %c1024] : memref<1x2432xf32, #tpu.memory_space<vmem>>, vector<1x256xf32>
    %65 = vector.broadcast %64 : vector<1x256xf32> to vector<64x256xf32>
    %66 = arith.addf %63, %65 : vector<64x256xf32>
    %cst_27 = arith.constant 0.000000e+00 : f32
    %67 = vector.broadcast %cst_27 : f32 to vector<64x256xf32>
    %68 = arith.subf %67, %66 : vector<64x256xf32>
    %69 = math.exp %68 : vector<64x256xf32>
    %cst_28 = arith.constant 1.000000e+00 : f32
    %70 = vector.broadcast %cst_28 : f32 to vector<64x256xf32>
    %71 = arith.addf %70, %69 : vector<64x256xf32>
    %72 = tpu.reciprocal %71 {approx = true} : vector<64x256xf32> -> vector<64x256xf32>
    %73 = arith.mulf %66, %72 : vector<64x256xf32>
    %74 = arith.truncf %73 : vector<64x256xf32> to vector<64x256xbf16>
    %c0_29 = arith.constant 0 : index
    %c0_30 = arith.constant 0 : index
    %75 = vector.load %arg6[%c0_29, %c0_30] : memref<256x128xbf16, #tpu.memory_space<vmem>>, vector<256x128xbf16>
    %cst_31 = arith.constant dense<0.000000e+00> : vector<64x128xf32>
    %76 = tpu.matmul %74, %75, %cst_31 {dimension_numbers = #tpu.dot_dimension_numbers<[1], [0], [0], [1], [0, 0, 1, 1], [], []>} : vector<64x256xbf16>, vector<256x128xbf16>, vector<64x128xf32> -> vector<64x128xf32>
    %c0_32 = arith.constant 0 : index
    %c1280 = arith.constant 1280 : index
    %77 = vector.load %arg3[%c0_32, %c1280] : memref<1x2432xf32, #tpu.memory_space<vmem>>, vector<1x128xf32>
    %78 = vector.broadcast %77 : vector<1x128xf32> to vector<64x128xf32>
    %79 = arith.addf %76, %78 : vector<64x128xf32>
    %80 = arith.truncf %32 : vector<64x128xf32> to vector<64x128xbf16>
    %c0_33 = arith.constant 0 : index
    %c0_34 = arith.constant 0 : index
    %81 = vector.load %arg11[%c0_33, %c0_34] : memref<128x128xbf16, #tpu.memory_space<vmem>>, vector<128x128xbf16>
    %cst_35 = arith.constant dense<0.000000e+00> : vector<64x128xf32>
    %82 = tpu.matmul %80, %81, %cst_35 {dimension_numbers = #tpu.dot_dimension_numbers<[1], [0], [0], [1], [0, 0, 1, 1], [], []>} : vector<64x128xbf16>, vector<128x128xbf16>, vector<64x128xf32> -> vector<64x128xf32>
    %83 = arith.subf %32, %82 : vector<64x128xf32>
    %84 = arith.mulf %83, %83 : vector<64x128xf32>
    %85 = arith.truncf %84 : vector<64x128xf32> to vector<64x128xbf16>
    %c0_36 = arith.constant 0 : index
    %c0_37 = arith.constant 0 : index
    %86 = vector.load %arg11[%c0_36, %c0_37] : memref<128x128xbf16, #tpu.memory_space<vmem>>, vector<128x128xbf16>
    %cst_38 = arith.constant dense<0.000000e+00> : vector<64x128xf32>
    %87 = tpu.matmul %85, %86, %cst_38 {dimension_numbers = #tpu.dot_dimension_numbers<[1], [0], [0], [1], [0, 0, 1, 1], [], []>} : vector<64x128xbf16>, vector<128x128xbf16>, vector<64x128xf32> -> vector<64x128xf32>
    %cst_39 = arith.constant 9.99999974E-6 : f32
    %88 = vector.broadcast %cst_39 : f32 to vector<64x128xf32>
    %89 = arith.addf %87, %88 : vector<64x128xf32>
    %90 = math.rsqrt %89 : vector<64x128xf32>
    %91 = arith.mulf %83, %90 : vector<64x128xf32>
    %c0_40 = arith.constant 0 : index
    %c1408 = arith.constant 1408 : index
    %92 = vector.load %arg3[%c0_40, %c1408] : memref<1x2432xf32, #tpu.memory_space<vmem>>, vector<1x128xf32>
    %93 = vector.broadcast %92 : vector<1x128xf32> to vector<64x128xf32>
    %94 = arith.mulf %91, %93 : vector<64x128xf32>
    %c0_41 = arith.constant 0 : index
    %c1536 = arith.constant 1536 : index
    %95 = vector.load %arg3[%c0_41, %c1536] : memref<1x2432xf32, #tpu.memory_space<vmem>>, vector<1x128xf32>
    %96 = vector.broadcast %95 : vector<1x128xf32> to vector<64x128xf32>
    %97 = arith.addf %94, %96 : vector<64x128xf32>
    %cst_42 = arith.constant 0.000000e+00 : f32
    %98 = vector.broadcast %cst_42 : f32 to vector<64x128xf32>
    %99 = arith.subf %98, %97 : vector<64x128xf32>
    %100 = math.exp %99 : vector<64x128xf32>
    %cst_43 = arith.constant 1.000000e+00 : f32
    %101 = vector.broadcast %cst_43 : f32 to vector<64x128xf32>
    %102 = arith.addf %101, %100 : vector<64x128xf32>
    %103 = tpu.reciprocal %102 {approx = true} : vector<64x128xf32> -> vector<64x128xf32>
    %104 = arith.mulf %97, %103 : vector<64x128xf32>
    %105 = arith.truncf %104 : vector<64x128xf32> to vector<64x128xbf16>
    %106 = arith.truncf %79 : vector<64x128xf32> to vector<64x128xbf16>
    %107 = tpu.concatenate %105, %106 in 1 : vector<64x128xbf16>, vector<64x128xbf16> -> vector<64x256xbf16>
    %c0_44 = arith.constant 0 : index
    %c0_45 = arith.constant 0 : index
    %108 = vector.load %arg7[%c0_44, %c0_45] : memref<256x64xbf16, #tpu.memory_space<vmem>>, vector<256x64xbf16>
    %cst_46 = arith.constant dense<0.000000e+00> : vector<64x64xf32>
    %109 = tpu.matmul %107, %108, %cst_46 {dimension_numbers = #tpu.dot_dimension_numbers<[1], [0], [0], [1], [0, 0, 1, 1], [], []>} : vector<64x256xbf16>, vector<256x64xbf16>, vector<64x64xf32> -> vector<64x64xf32>
    %c0_47 = arith.constant 0 : index
    %c1664 = arith.constant 1664 : index
    %110 = vector.load %arg3[%c0_47, %c1664] : memref<1x2432xf32, #tpu.memory_space<vmem>>, vector<1x64xf32>
    %111 = vector.broadcast %110 : vector<1x64xf32> to vector<64x64xf32>
    %112 = arith.addf %109, %111 : vector<64x64xf32>
    %113 = arith.truncf %112 : vector<64x64xf32> to vector<64x64xbf16>
    %c0_48 = arith.constant 0 : index
    %c0_49 = arith.constant 0 : index
    %114 = vector.load %arg12[%c0_48, %c0_49] : memref<64x64xbf16, #tpu.memory_space<vmem>>, vector<64x64xbf16>
    %cst_50 = arith.constant dense<0.000000e+00> : vector<64x64xf32>
    %115 = tpu.matmul %113, %114, %cst_50 {dimension_numbers = #tpu.dot_dimension_numbers<[1], [0], [0], [1], [0, 0, 1, 1], [], []>} : vector<64x64xbf16>, vector<64x64xbf16>, vector<64x64xf32> -> vector<64x64xf32>
    %116 = arith.subf %112, %115 : vector<64x64xf32>
    %117 = arith.mulf %116, %116 : vector<64x64xf32>
    %118 = arith.truncf %117 : vector<64x64xf32> to vector<64x64xbf16>
    %c0_51 = arith.constant 0 : index
    %c0_52 = arith.constant 0 : index
    %119 = vector.load %arg12[%c0_51, %c0_52] : memref<64x64xbf16, #tpu.memory_space<vmem>>, vector<64x64xbf16>
    %cst_53 = arith.constant dense<0.000000e+00> : vector<64x64xf32>
    %120 = tpu.matmul %118, %119, %cst_53 {dimension_numbers = #tpu.dot_dimension_numbers<[1], [0], [0], [1], [0, 0, 1, 1], [], []>} : vector<64x64xbf16>, vector<64x64xbf16>, vector<64x64xf32> -> vector<64x64xf32>
    %cst_54 = arith.constant 9.99999974E-6 : f32
    %121 = vector.broadcast %cst_54 : f32 to vector<64x64xf32>
    %122 = arith.addf %120, %121 : vector<64x64xf32>
    %123 = math.rsqrt %122 : vector<64x64xf32>
    %124 = arith.mulf %116, %123 : vector<64x64xf32>
    %c0_55 = arith.constant 0 : index
    %c1792 = arith.constant 1792 : index
    %125 = vector.load %arg3[%c0_55, %c1792] : memref<1x2432xf32, #tpu.memory_space<vmem>>, vector<1x64xf32>
    %126 = vector.broadcast %125 : vector<1x64xf32> to vector<64x64xf32>
    %127 = arith.mulf %124, %126 : vector<64x64xf32>
    %c0_56 = arith.constant 0 : index
    %c1920 = arith.constant 1920 : index
    %128 = vector.load %arg3[%c0_56, %c1920] : memref<1x2432xf32, #tpu.memory_space<vmem>>, vector<1x64xf32>
    %129 = vector.broadcast %128 : vector<1x64xf32> to vector<64x64xf32>
    %130 = arith.addf %127, %129 : vector<64x64xf32>
    %cst_57 = arith.constant 0.000000e+00 : f32
    %131 = vector.broadcast %cst_57 : f32 to vector<64x64xf32>
    %132 = arith.subf %131, %130 : vector<64x64xf32>
    %133 = math.exp %132 : vector<64x64xf32>
    %cst_58 = arith.constant 1.000000e+00 : f32
    %134 = vector.broadcast %cst_58 : f32 to vector<64x64xf32>
    %135 = arith.addf %134, %133 : vector<64x64xf32>
    %136 = tpu.reciprocal %135 {approx = true} : vector<64x64xf32> -> vector<64x64xf32>
    %137 = arith.mulf %130, %136 : vector<64x64xf32>
    %138 = arith.truncf %137 : vector<64x64xf32> to vector<64x64xbf16>
    %cst_59 = arith.constant 0.000000e+00 : bf16
    %139 = vector.broadcast %cst_59 : bf16 to vector<64x64xbf16>
    %140 = arith.truncf %32 : vector<64x128xf32> to vector<64x128xbf16>
    %141 = tpu.concatenate %138, %139, %140 in 1 : vector<64x64xbf16>, vector<64x64xbf16>, vector<64x128xbf16> -> vector<64x256xbf16>
    %c0_60 = arith.constant 0 : index
    %c0_61 = arith.constant 0 : index
    %142 = vector.load %arg8[%c0_60, %c0_61] : memref<256x64xbf16, #tpu.memory_space<vmem>>, vector<256x64xbf16>
    %cst_62 = arith.constant dense<0.000000e+00> : vector<64x64xf32>
    %143 = tpu.matmul %141, %142, %cst_62 {dimension_numbers = #tpu.dot_dimension_numbers<[1], [0], [0], [1], [0, 0, 1, 1], [], []>} : vector<64x256xbf16>, vector<256x64xbf16>, vector<64x64xf32> -> vector<64x64xf32>
    %c0_63 = arith.constant 0 : index
    %c2048 = arith.constant 2048 : index
    %144 = vector.load %arg3[%c0_63, %c2048] : memref<1x2432xf32, #tpu.memory_space<vmem>>, vector<1x64xf32>
    %145 = vector.broadcast %144 : vector<1x64xf32> to vector<64x64xf32>
    %146 = arith.addf %143, %145 : vector<64x64xf32>
    %cst_64 = arith.constant 0.707106769 : f32
    %147 = vector.broadcast %cst_64 : f32 to vector<64x64xf32>
    %148 = arith.mulf %146, %147 : vector<64x64xf32>
    %149 = arith.truncf %148 : vector<64x64xf32> to vector<64x64xbf16>
    %c0_65 = arith.constant 0 : index
    %c0_66 = arith.constant 0 : index
    %150 = vector.load %arg12[%c0_65, %c0_66] : memref<64x64xbf16, #tpu.memory_space<vmem>>, vector<64x64xbf16>
    %cst_67 = arith.constant dense<0.000000e+00> : vector<64x64xf32>
    %151 = tpu.matmul %149, %150, %cst_67 {dimension_numbers = #tpu.dot_dimension_numbers<[1], [0], [0], [1], [0, 0, 1, 1], [], []>} : vector<64x64xbf16>, vector<64x64xbf16>, vector<64x64xf32> -> vector<64x64xf32>
    %152 = arith.subf %148, %151 : vector<64x64xf32>
    %153 = arith.mulf %152, %152 : vector<64x64xf32>
    %154 = arith.truncf %153 : vector<64x64xf32> to vector<64x64xbf16>
    %c0_68 = arith.constant 0 : index
    %c0_69 = arith.constant 0 : index
    %155 = vector.load %arg12[%c0_68, %c0_69] : memref<64x64xbf16, #tpu.memory_space<vmem>>, vector<64x64xbf16>
    %cst_70 = arith.constant dense<0.000000e+00> : vector<64x64xf32>
    %156 = tpu.matmul %154, %155, %cst_70 {dimension_numbers = #tpu.dot_dimension_numbers<[1], [0], [0], [1], [0, 0, 1, 1], [], []>} : vector<64x64xbf16>, vector<64x64xbf16>, vector<64x64xf32> -> vector<64x64xf32>
    %cst_71 = arith.constant 9.99999974E-6 : f32
    %157 = vector.broadcast %cst_71 : f32 to vector<64x64xf32>
    %158 = arith.addf %156, %157 : vector<64x64xf32>
    %159 = math.rsqrt %158 : vector<64x64xf32>
    %160 = arith.mulf %152, %159 : vector<64x64xf32>
    %c0_72 = arith.constant 0 : index
    %c2176 = arith.constant 2176 : index
    %161 = vector.load %arg3[%c0_72, %c2176] : memref<1x2432xf32, #tpu.memory_space<vmem>>, vector<1x64xf32>
    %162 = vector.broadcast %161 : vector<1x64xf32> to vector<64x64xf32>
    %163 = arith.mulf %160, %162 : vector<64x64xf32>
    %c0_73 = arith.constant 0 : index
    %c2304 = arith.constant 2304 : index
    %164 = vector.load %arg3[%c0_73, %c2304] : memref<1x2432xf32, #tpu.memory_space<vmem>>, vector<1x64xf32>
    %165 = vector.broadcast %164 : vector<1x64xf32> to vector<64x64xf32>
    %166 = arith.addf %163, %165 : vector<64x64xf32>
    %cst_74 = arith.constant 0.000000e+00 : f32
    %167 = vector.broadcast %cst_74 : f32 to vector<64x64xf32>
    %168 = arith.subf %167, %166 : vector<64x64xf32>
    %169 = math.exp %168 : vector<64x64xf32>
    %cst_75 = arith.constant 1.000000e+00 : f32
    %170 = vector.broadcast %cst_75 : f32 to vector<64x64xf32>
    %171 = arith.addf %170, %169 : vector<64x64xf32>
    %172 = tpu.reciprocal %171 {approx = true} : vector<64x64xf32> -> vector<64x64xf32>
    %173 = arith.mulf %166, %172 : vector<64x64xf32>
    %174 = arith.truncf %173 : vector<64x64xf32> to vector<64x64xbf16>
    %c0_76 = arith.constant 0 : index
    %c0_77 = arith.constant 0 : index
    %175 = vector.load %arg9[%c0_76, %c0_77] : memref<64x128xbf16, #tpu.memory_space<vmem>>, vector<64x128xbf16>
    %cst_78 = arith.constant dense<0.000000e+00> : vector<64x128xf32>
    %176 = tpu.matmul %174, %175, %cst_78 {dimension_numbers = #tpu.dot_dimension_numbers<[1], [0], [0], [1], [0, 0, 1, 1], [], []>} : vector<64x64xbf16>, vector<64x128xbf16>, vector<64x128xf32> -> vector<64x128xf32>
    %177 = arith.subf %176, %3 : vector<64x128xf32>
    %178 = arith.mulf %177, %177 : vector<64x128xf32>
    %c0_79 = arith.constant 0 : index
    %c0_80 = arith.constant 0 : index
    %179 = vector.load %arg13[%c0_79, %c0_80] : memref<64x128xf32, #tpu.memory_space<vmem>>, vector<64x128xf32>
    tpu.vector_store %arg13[%c0_79, %c0_80], %178 {strides = array<i32>} : memref<64x128xf32, #tpu.memory_space<vmem>>, vector<64x128xf32>,
    return
  }
  func.func @transform_0(%arg0: i32) -> (i32, i32) {
    %c0_i32 = arith.constant 0 : i32
    %c0_i32_0 = arith.constant 0 : i32
    return %arg0, %c0_i32 : i32, i32
  }
  func.func @transform_1(%arg0: i32) -> (i32, i32) {
    %c0_i32 = arith.constant 0 : i32
    %c0_i32_0 = arith.constant 0 : i32
    return %arg0, %c0_i32 : i32, i32
  }
  func.func @transform_2(%arg0: i32) -> (i32, i32) {
    %c0_i32 = arith.constant 0 : i32
    %c0_i32_0 = arith.constant 0 : i32
    %c0_i32_1 = arith.constant 0 : i32
    return %c0_i32, %c0_i32_0 : i32, i32
  }
  func.func @transform_3(%arg0: i32) -> (i32, i32) {
    %c0_i32 = arith.constant 0 : i32
    %c0_i32_0 = arith.constant 0 : i32
    %c0_i32_1 = arith.constant 0 : i32
    return %c0_i32, %c0_i32_0 : i32, i32
  }
  func.func @transform_4(%arg0: i32) -> (i32, i32) {
    %c0_i32 = arith.constant 0 : i32
    %c0_i32_0 = arith.constant 0 : i32
    %c0_i32_1 = arith.constant 0 : i32
    return %c0_i32, %c0_i32_0 : i32, i32
  }
  func.func @transform_5(%arg0: i32) -> (i32, i32) {
    %c0_i32 = arith.constant 0 : i32
    %c0_i32_0 = arith.constant 0 : i32
    %c0_i32_1 = arith.constant 0 : i32
    return %c0_i32, %c0_i32_0 : i32, i32
  }
  func.func @transform_6(%arg0: i32) -> (i32, i32) {
    %c0_i32 = arith.constant 0 : i32
    %c0_i32_0 = arith.constant 0 : i32
    %c0_i32_1 = arith.constant 0 : i32
    return %c0_i32, %c0_i32_0 : i32, i32
  }
  func.func @transform_7(%arg0: i32) -> (i32, i32) {
    %c0_i32 = arith.constant 0 : i32
    %c0_i32_0 = arith.constant 0 : i32
    %c0_i32_1 = arith.constant 0 : i32
    return %c0_i32, %c0_i32_0 : i32, i32
  }
  func.func @transform_8(%arg0: i32) -> (i32, i32) {
    %c0_i32 = arith.constant 0 : i32
    %c0_i32_0 = arith.constant 0 : i32
    %c0_i32_1 = arith.constant 0 : i32
    return %c0_i32, %c0_i32_0 : i32, i32
  }
  func.func @transform_9(%arg0: i32) -> (i32, i32) {
    %c0_i32 = arith.constant 0 : i32
    %c0_i32_0 = arith.constant 0 : i32
    %c0_i32_1 = arith.constant 0 : i32
    return %c0_i32, %c0_i32_0 : i32, i32
  }
  func.func @transform_10(%arg0: i32) -> (i32, i32) {
    %c0_i32 = arith.constant 0 : i32
    %c0_i32_0 = arith.constant 0 : i32
    %c0_i32_1 = arith.constant 0 : i32
    return %c0_i32, %c0_i32_0 : i32, i32
  }
  func.func @transform_11(%arg0: i32) -> (i32, i32) {
    %c0_i32 = arith.constant 0 : i32
    %c0_i32_0 = arith.constant 0 : i32
    %c0_i32_1 = arith.constant 0 : i32
    return %c0_i32, %c0_i32_0 : i32, i32
  }
  func.func @transform_12(%arg0: i32) -> (i32, i32) {
    %c0_i32 = arith.constant 0 : i32
    %c0_i32_0 = arith.constant 0 : i32
    return %arg0, %c0_i32 : i32, i32
  }
}

</mosaic_0001>

<llo_original>
// kernel: tpu_custom_call.1
$region0: #{tpu_custom_call.1}
  #allocation0 [shape = 'u32[]', space=smem, size = 0x4, offset = 0x4, fixed_abs, tag = 'smem constant byte address 0x4 - core index']
  #allocation1 [shape = 'u32[72,128]{1,0:T(1,128)}', space=vmem, size = 0x9000, scoped, tag = 'internal scratch']
  %s0 = inlined_call_operand.hbm [shape: f32[128,384], index: 0, kind: input, shape index: {}]
  %s1 = inlined_call_operand.vmem [shape: f32[128,1], index: 1, kind: input, shape index: {}]
  %s2 = inlined_call_operand.hbm [shape: f32[1,2432], index: 2, kind: input, shape index: {}]
  %s3 = inlined_call_operand.vmem [shape: bf16[128,256], index: 3, kind: input, shape index: {}]
  %s4 = inlined_call_operand.hbm [shape: bf16[128,256], index: 4, kind: input, shape index: {}]
  %s5 = inlined_call_operand.hbm [shape: bf16[256,128], index: 5, kind: input, shape index: {}]
  %s6 = inlined_call_operand.vmem [shape: bf16[256,64], index: 6, kind: input, shape index: {}]
  %s7 = inlined_call_operand.vmem [shape: bf16[256,64], index: 7, kind: input, shape index: {}]
  %s8 = inlined_call_operand.hbm [shape: bf16[64,128], index: 8, kind: input, shape index: {}]
  %s9 = inlined_call_operand.vmem [shape: bf16[256,256], index: 9, kind: input, shape index: {}]
  %s10 = inlined_call_operand.hbm [shape: bf16[128,128], index: 10, kind: input, shape index: {}]
  %s11 = inlined_call_operand.hbm [shape: bf16[64,64], index: 11, kind: input, shape index: {}]
  %s12 = inlined_call_operand.hbm [shape: f32[128,128], index: 12, kind: output, shape index: {}]
  %s13 = sld [smem:[#allocation0]]
  $region109: #{tpu_custom_call.1} parent=0
    _
  %s15 = ssub.s32 1, %s13
  %s16 = scalar_select 0, %s15, %s13
  $region1: #{tpu_custom_call.1} parent=0
    #allocation2 [shape = 'u8[196608]{0}', space=vmem, size = 0x30000, scoped, tag = 'input window, operand 0']
    #allocation3 [shape = 's32[2]{0}', space=sflag, size = 0x8, scoped, tag = 'scoped memory for tpu_custom_call.1']
    #allocation4 [shape = 's32[2]{0}', space=sflag, size = 0x8, scoped, tag = 'scoped memory for tpu_custom_call.1']
    #allocation5 [shape = 'u8[9728]{0}', space=vmem, size = 0x2800, scoped, tag = 'input window, operand 2, single buffered']
    #allocation6 [shape = 's32[1]{0}', space=sflag, size = 0x4, scoped, tag = 'scoped memory for tpu_custom_call.1']
    #allocation7 [shape = 'u8[65536]{0}', space=vmem, size = 0x10000, scoped, tag = 'input window, operand 4, single buffered']
    #allocation8 [shape = 'u8[65536]{0}', space=vmem, size = 0x10000, scoped, tag = 'input window, operand 5, single buffered']
    #allocation9 [shape = 's32[1]{0}', space=sflag, size = 0x4, scoped, tag = 'scoped memory for tpu_custom_call.1']
    #allocation10 [shape = 'u8[16384]{0}', space=vmem, size = 0x4000, scoped, tag = 'input window, operand 8, single buffered']
    #allocation11 [shape = 'u8[32768]{0}', space=vmem, size = 0x8000, scoped, tag = 'input window, operand 10, single buffered']
    #allocation12 [shape = 's32[1]{0}', space=sflag, size = 0x4, scoped, tag = 'scoped memory for tpu_custom_call.1']
    #allocation13 [shape = 'u8[16384]{0}', space=vmem, size = 0x4000, scoped, tag = 'input window, operand 11, single buffered']
    #allocation14 [shape = 'u8[65536]{0}', space=vmem, size = 0x10000, scoped, tag = 'output window, operand 0']
    %17 = vsyncpa [#allocation3], 0
    %s18 = scalar_lea.sflag [#allocation3], 1
    %19 = vsyncpa %s18, 0
    %20 = vsyncpa [#allocation6], 0
    %21 = vsyncpa [#allocation9], 0
    %22 = vsyncpa [#allocation12], 0
    %23 = vsyncpa [#allocation4], 0
    %s24 = scalar_lea.sflag [#allocation4], 1
    %25 = vsyncpa %s24, 0
    loop: start=0, step=1, limit=4
    $region2: #{tpu_custom_call.1} parent=1 // loop_pre_header
      _
    $region3: #{tpu_custom_call.1} parent=1 // loop_header
      %s27 = sphi 0, %s31
      %p28 = scmp.ge.s32.totalorder %s27, 4
      %s37 = sphi 0, %s39
      %s40 = sphi 0, %s37
      %s41 = sphi 0, %s40
      %s57 = sphi 0, %s41
      %s63 = sphi 0, %s65
      %s66 = sphi 0, %s63
      %s67 = sphi 0, %s66
      %s83 = sphi 0, %s67
      %s87 = sphi 0, %s87
      %s89 = sphi 0, %s87
      %s90 = sphi 0, %s89
      %s104 = sphi 0, %s90
      %s108 = sphi 0, %s108
      %s110 = sphi 0, %s108
      %s111 = sphi 0, %s110
      %s125 = sphi 0, %s111
      %s129 = sphi 0, %s129
      %s131 = sphi 0, %s129
      %s132 = sphi 0, %s131
      %s146 = sphi 0, %s132
      %s150 = sphi 0, %s150
      %s152 = sphi 0, %s150
      %s153 = sphi 0, %s152
      %s167 = sphi 0, %s153
      %s171 = sphi 0, %s171
      %s173 = sphi 0, %s171
      %s174 = sphi 0, %s173
      %s188 = sphi 0, %s174
      %s192 = sphi 0, %s192
      %s194 = sphi 0, %s192
      %s195 = sphi 0, %s194
      %s209 = sphi 0, %s195
      %s213 = sphi 0, %s213
      %s215 = sphi 0, %s213
      %s216 = sphi 0, %s215
      %s230 = sphi 0, %s216
      %s234 = sphi 0, %s234
      %s236 = sphi 0, %s234
      %s237 = sphi 0, %s236
      %s251 = sphi 0, %s237
      %s255 = sphi 0, %s255
      %s257 = sphi 0, %s255
      %s258 = sphi 0, %s257
      %s272 = sphi 0, %s258
      %s276 = sphi 0, %s276
      %s278 = sphi 0, %s276
      %s279 = sphi 0, %s278
      %s293 = sphi 0, %s279
      %s299 = sphi 0, %s301
      %s302 = sphi 0, %s299
      %s303 = sphi 0, %s302
      %s319 = sphi 0, %s303
    $region4: #{tpu_custom_call.1} parent=1 // loop_header_branch
      %30 = sbr.rel (%p28) target = $region8
    $region5: #{tpu_custom_call.1} parent=1 // loop_body
      %s32 = ssub.s32 %s27, 1
      %s33 = ssub.s32 %s27, 2
      %s34 = sadd.s32 %s27, 1
      %s35 = ssub.s32 %s27, %s34
      %p36 = scmp.eq.s32.totalorder %s35, 0
      %s38 = sadd.s32 %s37, 1
      %s39 = scalar_select %p36, %s37, %s38
      %p42 = pneg %p36
      %p43 = scmp.eq.s32.totalorder %s27, 1
      %p44 = por %p42, %p43
      %p45 = scmp.ne.s32.totalorder %s37, %s40
      %p46 = scmp.eq.s32.totalorder %s27, 0
      %p47 = por %p45, %p46
      %p48 = scmp.ne.s32.totalorder %s37, %s40
      %p49 = scmp.eq.s32.totalorder %s32, 1
      %p50 = por %p48, %p49
      %p51 = scmp.ne.s32.totalorder %s40, %s41
      %p52 = scmp.eq.s32.totalorder %s32, 0
      %p53 = por %p51, %p52
      %p54 = scmp.ne.s32.totalorder %s40, %s41
      %p55 = scmp.eq.s32.totalorder %s33, 1
      %p56 = por %p54, %p55
      %p58 = scmp.ne.s32.totalorder %s41, %s57
      %p59 = scmp.eq.s32.totalorder %s33, 0
      %p60 = por %p58, %p59
      %s61 = ssub.s32 %s27, %s34
      %p62 = scmp.eq.s32.totalorder %s61, 0
      %s64 = sadd.s32 %s63, 1
      %s65 = scalar_select %p62, %s63, %s64
      %p68 = pneg %p62
      %p69 = scmp.eq.s32.totalorder %s27, 1
      %p70 = por %p68, %p69
      %p71 = scmp.ne.s32.totalorder %s63, %s66
      %p72 = scmp.eq.s32.totalorder %s27, 0
      %p73 = por %p71, %p72
      %p74 = scmp.ne.s32.totalorder %s63, %s66
      %p75 = scmp.eq.s32.totalorder %s32, 1
      %p76 = por %p74, %p75
      %p77 = scmp.ne.s32.totalorder %s66, %s67
      %p78 = scmp.eq.s32.totalorder %s32, 0
      %p79 = por %p77, %p78
      %p80 = scmp.ne.s32.totalorder %s66, %s67
      %p81 = scmp.eq.s32.totalorder %s33, 1
      %p82 = por %p80, %p81
      %p84 = scmp.ne.s32.totalorder %s67, %s83
      %p85 = scmp.eq.s32.totalorder %s33, 0
      %p86 = por %p84, %p85
      %s88 = sadd.s32 %s87, 1
      %p91 = scmp.eq.s32.totalorder %s27, 1
      %p92 = scmp.ne.s32.totalorder %s87, %s89
      %p93 = scmp.eq.s32.totalorder %s27, 0
      %p94 = por %p92, %p93
      %p95 = scmp.ne.s32.totalorder %s87, %s89
      %p96 = scmp.eq.s32.totalorder %s32, 1
      %p97 = por %p95, %p96
      %p98 = scmp.ne.s32.totalorder %s89, %s90
      %p99 = scmp.eq.s32.totalorder %s32, 0
      %p100 = por %p98, %p99
      %p101 = scmp.ne.s32.totalorder %s89, %s90
      %p102 = scmp.eq.s32.totalorder %s33, 1
      %p103 = por %p101, %p102
      %p105 = scmp.ne.s32.totalorder %s90, %s104
      %p106 = scmp.eq.s32.totalorder %s33, 0
      %p107 = por %p105, %p106
      %s109 = sadd.s32 %s108, 1
      %p112 = scmp.eq.s32.totalorder %s27, 1
      %p113 = scmp.ne.s32.totalorder %s108, %s110
      %p114 = scmp.eq.s32.totalorder %s27, 0
      %p115 = por %p113, %p114
      %p116 = scmp.ne.s32.totalorder %s108, %s110
      %p117 = scmp.eq.s32.totalorder %s32, 1
      %p118 = por %p116, %p117
      %p119 = scmp.ne.s32.totalorder %s110, %s111
      %p120 = scmp.eq.s32.totalorder %s32, 0
      %p121 = por %p119, %p120
      %p122 = scmp.ne.s32.totalorder %s110, %s111
      %p123 = scmp.eq.s32.totalorder %s33, 1
      %p124 = por %p122, %p123
      %p126 = scmp.ne.s32.totalorder %s111, %s125
      %p127 = scmp.eq.s32.totalorder %s33, 0
      %p128 = por %p126, %p127
      %s130 = sadd.s32 %s129, 1
      %p133 = scmp.eq.s32.totalorder %s27, 1
      %p134 = scmp.ne.s32.totalorder %s129, %s131
      %p135 = scmp.eq.s32.totalorder %s27, 0
      %p136 = por %p134, %p135
      %p137 = scmp.ne.s32.totalorder %s129, %s131
      %p138 = scmp.eq.s32.totalorder %s32, 1
      %p139 = por %p137, %p138
      %p140 = scmp.ne.s32.totalorder %s131, %s132
      %p141 = scmp.eq.s32.totalorder %s32, 0
      %p142 = por %p140, %p141
      %p143 = scmp.ne.s32.totalorder %s131, %s132
      %p144 = scmp.eq.s32.totalorder %s33, 1
      %p145 = por %p143, %p144
      %p147 = scmp.ne.s32.totalorder %s132, %s146
      %p148 = scmp.eq.s32.totalorder %s33, 0
      %p149 = por %p147, %p148
      %s151 = sadd.s32 %s150, 1
      %p154 = scmp.eq.s32.totalorder %s27, 1
      %p155 = scmp.ne.s32.totalorder %s150, %s152
      %p156 = scmp.eq.s32.totalorder %s27, 0
      %p157 = por %p155, %p156
      %p158 = scmp.ne.s32.totalorder %s150, %s152
      %p159 = scmp.eq.s32.totalorder %s32, 1
      %p160 = por %p158, %p159
      %p161 = scmp.ne.s32.totalorder %s152, %s153
      %p162 = scmp.eq.s32.totalorder %s32, 0
      %p163 = por %p161, %p162
      %p164 = scmp.ne.s32.totalorder %s152, %s153
      %p165 = scmp.eq.s32.totalorder %s33, 1
      %p166 = por %p164, %p165
      %p168 = scmp.ne.s32.totalorder %s153, %s167
      %p169 = scmp.eq.s32.totalorder %s33, 0
      %p170 = por %p168, %p169
      %s172 = sadd.s32 %s171, 1
      %p175 = scmp.eq.s32.totalorder %s27, 1
      %p176 = scmp.ne.s32.totalorder %s171, %s173
      %p177 = scmp.eq.s32.totalorder %s27, 0
      %p178 = por %p176, %p177
      %p179 = scmp.ne.s32.totalorder %s171, %s173
      %p180 = scmp.eq.s32.totalorder %s32, 1
      %p181 = por %p179, %p180
      %p182 = scmp.ne.s32.totalorder %s173, %s174
      %p183 = scmp.eq.s32.totalorder %s32, 0
      %p184 = por %p182, %p183
      %p185 = scmp.ne.s32.totalorder %s173, %s174
      %p186 = scmp.eq.s32.totalorder %s33, 1
      %p187 = por %p185, %p186
      %p189 = scmp.ne.s32.totalorder %s174, %s188
      %p190 = scmp.eq.s32.totalorder %s33, 0
      %p191 = por %p189, %p190
      %s193 = sadd.s32 %s192, 1
      %p196 = scmp.eq.s32.totalorder %s27, 1
      %p197 = scmp.ne.s32.totalorder %s192, %s194
      %p198 = scmp.eq.s32.totalorder %s27, 0
      %p199 = por %p197, %p198
      %p200 = scmp.ne.s32.totalorder %s192, %s194
      %p201 = scmp.eq.s32.totalorder %s32, 1
      %p202 = por %p200, %p201
      %p203 = scmp.ne.s32.totalorder %s194, %s195
      %p204 = scmp.eq.s32.totalorder %s32, 0
      %p205 = por %p203, %p204
      %p206 = scmp.ne.s32.totalorder %s194, %s195
      %p207 = scmp.eq.s32.totalorder %s33, 1
      %p208 = por %p206, %p207
      %p210 = scmp.ne.s32.totalorder %s195, %s209
      %p211 = scmp.eq.s32.totalorder %s33, 0
      %p212 = por %p210, %p211
      %s214 = sadd.s32 %s213, 1
      %p217 = scmp.eq.s32.totalorder %s27, 1
      %p218 = scmp.ne.s32.totalorder %s213, %s215
      %p219 = scmp.eq.s32.totalorder %s27, 0
      %p220 = por %p218, %p219
      %p221 = scmp.ne.s32.totalorder %s213, %s215
      %p222 = scmp.eq.s32.totalorder %s32, 1
      %p223 = por %p221, %p222
      %p224 = scmp.ne.s32.totalorder %s215, %s216
      %p225 = scmp.eq.s32.totalorder %s32, 0
      %p226 = por %p224, %p225
      %p227 = scmp.ne.s32.totalorder %s215, %s216
      %p228 = scmp.eq.s32.totalorder %s33, 1
      %p229 = por %p227, %p228
      %p231 = scmp.ne.s32.totalorder %s216, %s230
      %p232 = scmp.eq.s32.totalorder %s33, 0
      %p233 = por %p231, %p232
      %s235 = sadd.s32 %s234, 1
      %p238 = scmp.eq.s32.totalorder %s27, 1
      %p239 = scmp.ne.s32.totalorder %s234, %s236
      %p240 = scmp.eq.s32.totalorder %s27, 0
      %p241 = por %p239, %p240
      %p242 = scmp.ne.s32.totalorder %s234, %s236
      %p243 = scmp.eq.s32.totalorder %s32, 1
      %p244 = por %p242, %p243
      %p245 = scmp.ne.s32.totalorder %s236, %s237
      %p246 = scmp.eq.s32.totalorder %s32, 0
      %p247 = por %p245, %p246
      %p248 = scmp.ne.s32.totalorder %s236, %s237
      %p249 = scmp.eq.s32.totalorder %s33, 1
      %p250 = por %p248, %p249
      %p252 = scmp.ne.s32.totalorder %s237, %s251
      %p253 = scmp.eq.s32.totalorder %s33, 0
      %p254 = por %p252, %p253
      %s256 = sadd.s32 %s255, 1
      %p259 = scmp.eq.s32.totalorder %s27, 1
      %p260 = scmp.ne.s32.totalorder %s255, %s257
      %p261 = scmp.eq.s32.totalorder %s27, 0
      %p262 = por %p260, %p261
      %p263 = scmp.ne.s32.totalorder %s255, %s257
      %p264 = scmp.eq.s32.totalorder %s32, 1
      %p265 = por %p263, %p264
      %p266 = scmp.ne.s32.totalorder %s257, %s258
      %p267 = scmp.eq.s32.totalorder %s32, 0
      %p268 = por %p266, %p267
      %p269 = scmp.ne.s32.totalorder %s257, %s258
      %p270 = scmp.eq.s32.totalorder %s33, 1
      %p271 = por %p269, %p270
      %p273 = scmp.ne.s32.totalorder %s258, %s272
      %p274 = scmp.eq.s32.totalorder %s33, 0
      %p275 = por %p273, %p274
      %s277 = sadd.s32 %s276, 1
      %p280 = scmp.eq.s32.totalorder %s27, 1
      %p281 = scmp.ne.s32.totalorder %s276, %s278
      %p282 = scmp.eq.s32.totalorder %s27, 0
      %p283 = por %p281, %p282
      %p284 = scmp.ne.s32.totalorder %s276, %s278
      %p285 = scmp.eq.s32.totalorder %s32, 1
      %p286 = por %p284, %p285
      %p287 = scmp.ne.s32.totalorder %s278, %s279
      %p288 = scmp.eq.s32.totalorder %s32, 0
      %p289 = por %p287, %p288
      %p290 = scmp.ne.s32.totalorder %s278, %s279
      %p291 = scmp.eq.s32.totalorder %s33, 1
      %p292 = por %p290, %p291
      %p294 = scmp.ne.s32.totalorder %s279, %s293
      %p295 = scmp.eq.s32.totalorder %s33, 0
      %p296 = por %p294, %p295
      %s297 = ssub.s32 %s27, %s34
      %p298 = scmp.eq.s32.totalorder %s297, 0
      %s300 = sadd.s32 %s299, 1
      %s301 = scalar_select %p298, %s299, %s300
      %p304 = pneg %p298
      %p305 = scmp.eq.s32.totalorder %s27, 1
      %p306 = por %p304, %p305
      %p307 = scmp.ne.s32.totalorder %s299, %s302
      %p308 = scmp.eq.s32.totalorder %s27, 0
      %p309 = por %p307, %p308
      %p310 = scmp.ne.s32.totalorder %s299, %s302
      %p311 = scmp.eq.s32.totalorder %s32, 1
      %p312 = por %p310, %p311
      %p313 = scmp.ne.s32.totalorder %s302, %s303
      %p314 = scmp.eq.s32.totalorder %s32, 0
      %p315 = por %p313, %p314
      %p316 = scmp.ne.s32.totalorder %s302, %s303
      %p317 = scmp.eq.s32.totalorder %s33, 1
      %p318 = por %p316, %p317
      %p320 = scmp.ne.s32.totalorder %s303, %s319
      %p321 = scmp.eq.s32.totalorder %s33, 0
      %p322 = por %p320, %p321
      %p323 = scmp.le.s32.totalorder 1, %s27
      %p324 = scmp.lt.s32.totalorder %s27, 3
      %p325 = pnand %p323, %p324
      %p326 = pneg %p325
      // Predicated region
      $region9: #{tpu_custom_call.1} parent=5 // pred_check
        _
      $region10: #{tpu_custom_call.1} parent=5 // pred_check_branch
        %328 = sbr.rel (%p325) target = $region12
      $region11: #{tpu_custom_call.1} parent=5 // pred_region
        %s329 = ssub.s32 %s27, 1
        // Predicated region
        $region13: #{tpu_custom_call.1} parent=11 // pred_check
          %p330 = pneg %p100
        $region14: #{tpu_custom_call.1} parent=11 // pred_check_branch
          %332 = sbr.rel (%p330) target = $region16
        $region15: #{tpu_custom_call.1} parent=11 // pred_region
          %334 = vsyncadd [#allocation6], 0
          %s336 = sshll.u32 %s2, 4
          %s337 = int_to_ptr.hbm [resolvable:$true] %s336
          %s338 = sshll.u32 [#allocation5], 4
          %s339 = int_to_ptr.vmem [resolvable:$true] %s338
          %341 = dma.hbm_to_vmem [thread:$0]  %s337, 304, %s339, [#allocation6]
        $region16: #{tpu_custom_call.1} parent=11 // pred_fallthru
          _
        // Predicated region
        $region17: #{tpu_custom_call.1} parent=11 // pred_check
          %p342 = pneg %p121
        $region18: #{tpu_custom_call.1} parent=11 // pred_check_branch
          %344 = sbr.rel (%p342) target = $region20
        $region19: #{tpu_custom_call.1} parent=11 // pred_region
          _
        $region20: #{tpu_custom_call.1} parent=11 // pred_fallthru
          _
        // Predicated region
        $region21: #{tpu_custom_call.1} parent=11 // pred_check
          %p345 = pneg %p142
        $region22: #{tpu_custom_call.1} parent=11 // pred_check_branch
          %347 = sbr.rel (%p345) target = $region24
        $region23: #{tpu_custom_call.1} parent=11 // pred_region
          %349 = vsyncadd [#allocation6], 0
          %s350 = sshll.u32 %s4, 4
          %s351 = int_to_ptr.hbm [resolvable:$true] %s350
          %s352 = sshll.u32 [#allocation7], 4
          %s353 = int_to_ptr.vmem [resolvable:$true] %s352
          %358 = dma.hbm_to_vmem [thread:$0]  %s351, 2048, %s353, [#allocation6], 128, 128, 8
        $region24: #{tpu_custom_call.1} parent=11 // pred_fallthru
          _
        // Predicated region
        $region25: #{tpu_custom_call.1} parent=11 // pred_check
          %p359 = pneg %p163
        $region26: #{tpu_custom_call.1} parent=11 // pred_check_branch
          %361 = sbr.rel (%p359) target = $region28
        $region27: #{tpu_custom_call.1} parent=11 // pred_region
          %363 = vsyncadd [#allocation9], 0
          %s364 = sshll.u32 %s5, 4
          %s365 = int_to_ptr.hbm [resolvable:$true] %s364
          %s366 = sshll.u32 [#allocation8], 4
          %s367 = int_to_ptr.vmem [resolvable:$true] %s366
          %372 = dma.hbm_to_vmem [thread:$0]  %s365, 2048, %s367, [#allocation9], 64, 64, 4
        $region28: #{tpu_custom_call.1} parent=11 // pred_fallthru
          _
        // Predicated region
        $region29: #{tpu_custom_call.1} parent=11 // pred_check
          %p373 = pneg %p184
        $region30: #{tpu_custom_call.1} parent=11 // pred_check_branch
          %375 = sbr.rel (%p373) target = $region32
        $region31: #{tpu_custom_call.1} parent=11 // pred_region
          _
        $region32: #{tpu_custom_call.1} parent=11 // pred_fallthru
          _
        // Predicated region
        $region33: #{tpu_custom_call.1} parent=11 // pred_check
          %p376 = pneg %p205
        $region34: #{tpu_custom_call.1} parent=11 // pred_check_branch
          %378 = sbr.rel (%p376) target = $region36
        $region35: #{tpu_custom_call.1} parent=11 // pred_region
          _
        $region36: #{tpu_custom_call.1} parent=11 // pred_fallthru
          _
        // Predicated region
        $region37: #{tpu_custom_call.1} parent=11 // pred_check
          %p379 = pneg %p226
        $region38: #{tpu_custom_call.1} parent=11 // pred_check_branch
          %381 = sbr.rel (%p379) target = $region40
        $region39: #{tpu_custom_call.1} parent=11 // pred_region
          %383 = vsyncadd [#allocation9], 0
          %s384 = sshll.u32 %s8, 4
          %s385 = int_to_ptr.hbm [resolvable:$true] %s384
          %s386 = sshll.u32 [#allocation10], 4
          %s387 = int_to_ptr.vmem [resolvable:$true] %s386
          %392 = dma.hbm_to_vmem [thread:$0]  %s385, 512, %s387, [#allocation9], 64, 64, 4
        $region40: #{tpu_custom_call.1} parent=11 // pred_fallthru
          _
        // Predicated region
        $region41: #{tpu_custom_call.1} parent=11 // pred_check
          %p393 = pneg %p247
        $region42: #{tpu_custom_call.1} parent=11 // pred_check_branch
          %395 = sbr.rel (%p393) target = $region44
        $region43: #{tpu_custom_call.1} parent=11 // pred_region
          _
        $region44: #{tpu_custom_call.1} parent=11 // pred_fallthru
          _
        // Predicated region
        $region45: #{tpu_custom_call.1} parent=11 // pred_check
          %p396 = pneg %p268
        $region46: #{tpu_custom_call.1} parent=11 // pred_check_branch
          %398 = sbr.rel (%p396) target = $region48
        $region47: #{tpu_custom_call.1} parent=11 // pred_region
          %400 = vsyncadd [#allocation12], 0
          %s401 = sshll.u32 %s10, 4
          %s402 = int_to_ptr.hbm [resolvable:$true] %s401
          %s403 = sshll.u32 [#allocation11], 4
          %s404 = int_to_ptr.vmem [resolvable:$true] %s403
          %409 = dma.hbm_to_vmem [thread:$0]  %s402, 1024, %s404, [#allocation12], 64, 64, 4
        $region48: #{tpu_custom_call.1} parent=11 // pred_fallthru
          _
        // Predicated region
        $region49: #{tpu_custom_call.1} parent=11 // pred_check
          %p410 = pneg %p289
        $region50: #{tpu_custom_call.1} parent=11 // pred_check_branch
          %412 = sbr.rel (%p410) target = $region52
        $region51: #{tpu_custom_call.1} parent=11 // pred_region
          %414 = vsyncadd [#allocation12], 0
          %s415 = sshll.u32 %s11, 4
          %s416 = int_to_ptr.hbm [resolvable:$true] %s415
          %s417 = sshll.u32 [#allocation13], 4
          %s418 = int_to_ptr.vmem [resolvable:$true] %s417
          %423 = dma.hbm_to_vmem [thread:$0]  %s416, 512, %s418, [#allocation12], 64, 64, 4
        $region52: #{tpu_custom_call.1} parent=11 // pred_fallthru
          _
      $region12: #{tpu_custom_call.1} parent=5 // pred_fallthru
        _
      %p424 = scmp.lt.s32.totalorder %s27, 2
      // Predicated region
      $region53: #{tpu_custom_call.1} parent=5 // pred_check
        %p425 = pneg %p424
      $region54: #{tpu_custom_call.1} parent=5 // pred_check_branch
        %427 = sbr.rel (%p425) target = $region56
      $region55: #{tpu_custom_call.1} parent=5 // pred_region
        // Predicated region
        $region57: #{tpu_custom_call.1} parent=55 // pred_check
          %p428 = pneg %p47
        $region58: #{tpu_custom_call.1} parent=55 // pred_check_branch
          %430 = sbr.rel (%p428) target = $region60
        $region59: #{tpu_custom_call.1} parent=55 // pred_region
          %s431 = sand.u32 %s37, 1
          %s432 = scalar_lea.sflag [#allocation3], %s431
          %s433 = sand.u32 %s37, 1
          %s434 = smul.addr %s433, 192
          %s435 = scalar_lea.vmem [#allocation2], %s434
          %s436 = smul.u32 8, %s27
          %438 = vsyncadd %s432, 0
          %s439 = smul.addr %s436, 3
          %s440 = smul.addr %s439, 8
          %s441 = scalar_lea.hbm %s0, %s440
          %s442 = sshll.u32 %s441, 4
          %s443 = int_to_ptr.hbm [resolvable:$true] %s442
          %s444 = sshll.u32 %s435, 4
          %s445 = int_to_ptr.vmem [resolvable:$true] %s444
          %450 = dma.hbm_to_vmem [thread:$0]  %s443, 3072, %s445, %s432, 384, 384, 24
        $region60: #{tpu_custom_call.1} parent=55 // pred_fallthru
          _
        // Predicated region
        $region61: #{tpu_custom_call.1} parent=55 // pred_check
          %p451 = pneg %p73
        $region62: #{tpu_custom_call.1} parent=55 // pred_check_branch
          %453 = sbr.rel (%p451) target = $region64
        $region63: #{tpu_custom_call.1} parent=55 // pred_region
          %s454 = smul.u32 8, %s27
          %p455 = scmp.lt.s32.totalorder %s454, 15
          %s456 = scalar_select %p455, %s454, 15
          %s457 = smul.addr %s456, 8
          %s458 = scalar_lea.vmem %s1, %s457
          %s459 = smul.u32 8, %s27
        $region64: #{tpu_custom_call.1} parent=55 // pred_fallthru
          _
      $region56: #{tpu_custom_call.1} parent=5 // pred_fallthru
        _
      %p460 = scmp.le.s32.totalorder 1, %s27
      %p461 = scmp.lt.s32.totalorder %s27, 3
      %p462 = pnand %p460, %p461
      %p463 = pneg %p462
      // Predicated region
      $region65: #{tpu_custom_call.1} parent=5 // pred_check
        _
      $region66: #{tpu_custom_call.1} parent=5 // pred_check_branch
        %465 = sbr.rel (%p462) target = $region68
      $region67: #{tpu_custom_call.1} parent=5 // pred_region
        %s466 = ssub.s32 %s27, 1
        %s467 = sand.u32 %s40, 1
        %s468 = scalar_lea.sflag [#allocation3], %s467
        %s469 = sand.u32 %s40, 1
        %s470 = smul.addr %s469, 192
        %s471 = scalar_lea.vmem [#allocation2], %s470
        // Predicated region
        $region69: #{tpu_custom_call.1} parent=67 // pred_check
          %p472 = pneg %p53
        $region70: #{tpu_custom_call.1} parent=67 // pred_check_branch
          %474 = sbr.rel (%p472) target = $region72
        $region71: #{tpu_custom_call.1} parent=67 // pred_region
          %476 = dma.done %s468, 3072
        $region72: #{tpu_custom_call.1} parent=67 // pred_fallthru
          _
        // Predicated region
        $region73: #{tpu_custom_call.1} parent=67 // pred_check
          %p477 = pneg %p100
        $region74: #{tpu_custom_call.1} parent=67 // pred_check_branch
          %479 = sbr.rel (%p477) target = $region76
        $region75: #{tpu_custom_call.1} parent=67 // pred_region
          %481 = dma.done [#allocation6], 304
        $region76: #{tpu_custom_call.1} parent=67 // pred_fallthru
          _
        // Predicated region
        $region77: #{tpu_custom_call.1} parent=67 // pred_check
          %p482 = pneg %p142
        $region78: #{tpu_custom_call.1} parent=67 // pred_check_branch
          %484 = sbr.rel (%p482) target = $region80
        $region79: #{tpu_custom_call.1} parent=67 // pred_region
          %486 = dma.done [#allocation6], 2048
        $region80: #{tpu_custom_call.1} parent=67 // pred_fallthru
          _
        // Predicated region
        $region81: #{tpu_custom_call.1} parent=67 // pred_check
          %p487 = pneg %p163
        $region82: #{tpu_custom_call.1} parent=67 // pred_check_branch
          %489 = sbr.rel (%p487) target = $region84
        $region83: #{tpu_custom_call.1} parent=67 // pred_region
          %491 = dma.done [#allocation9], 2048
        $region84: #{tpu_custom_call.1} parent=67 // pred_fallthru
          _
        // Predicated region
        $region85: #{tpu_custom_call.1} parent=67 // pred_check
          %p492 = pneg %p226
        $region86: #{tpu_custom_call.1} parent=67 // pred_check_branch
          %494 = sbr.rel (%p492) target = $region88
        $region87: #{tpu_custom_call.1} parent=67 // pred_region
          %496 = dma.done [#allocation9], 512
        $region88: #{tpu_custom_call.1} parent=67 // pred_fallthru
          _
        // Predicated region
        $region89: #{tpu_custom_call.1} parent=67 // pred_check
          %p497 = pneg %p268
        $region90: #{tpu_custom_call.1} parent=67 // pred_check_branch
          %499 = sbr.rel (%p497) target = $region92
        $region91: #{tpu_custom_call.1} parent=67 // pred_region
          %501 = dma.done [#allocation12], 1024
        $region92: #{tpu_custom_call.1} parent=67 // pred_fallthru
          _
        // Predicated region
        $region93: #{tpu_custom_call.1} parent=67 // pred_check
          %p502 = pneg %p289
        $region94: #{tpu_custom_call.1} parent=67 // pred_check_branch
          %504 = sbr.rel (%p502) target = $region96
        $region95: #{tpu_custom_call.1} parent=67 // pred_region
          %506 = dma.done [#allocation12], 512
        $region96: #{tpu_custom_call.1} parent=67 // pred_fallthru
          _
        %s507 = sand.u32 %s40, 1
        %s508 = scalar_lea.sflag [#allocation3], %s507
        %s509 = sand.u32 %s40, 1
        %s510 = smul.addr %s509, 192
        %s511 = scalar_lea.vmem [#allocation2], %s510
        %p512 = pneg %p53
        %p513 = pneg %p50
        %s514 = smul.u32 8, %s32
        %p515 = scmp.lt.s32.totalorder %s514, 15
        %s516 = scalar_select %p515, %s514, 15
        %s517 = smul.addr %s516, 8
        %s518 = scalar_lea.vmem %s1, %s517
        %p519 = pneg %p79
        %p520 = pneg %p76
        %p521 = pneg %p100
        %p522 = pneg %p97
        %p523 = pneg %p121
        %p524 = pneg %p118
        %p525 = pneg %p142
        %p526 = pneg %p139
        %p527 = pneg %p163
        %p528 = pneg %p160
        %p529 = pneg %p184
        %p530 = pneg %p181
        %p531 = pneg %p205
        %p532 = pneg %p202
        %p533 = pneg %p226
        %p534 = pneg %p223
        %p535 = pneg %p247
        %p536 = pneg %p244
        %p537 = pneg %p268
        %p538 = pneg %p265
        %p539 = pneg %p289
        %p540 = pneg %p286
        %p541 = pneg %p315
        %p542 = pneg %p312
        %s543 = sand.u32 %s302, 1
        %s544 = scalar_lea.sflag [#allocation4], %s543
        %s545 = sand.u32 %s302, 1
        %s546 = smul.addr %s545, 64
        %s547 = scalar_lea.vmem [#allocation14], %s546
        %s548 = smul.u32 8, %s32
        %s549 = smul.u32 8, %s32
        %p550 = scmp.lt.s32.totalorder %s549, 15
        %s551 = scalar_select %p550, %s549, 15
        %s552 = smul.addr %s551, 8
        %s553 = scalar_lea.vmem %s1, %s552
        %s554 = smul.u32 8, %s32
        %s555 = smul.u32 8, %s32
        %v557 = vld [vmem:[%s471] sm:$0xff]
        %v558 = vld [vmem:[%s471 + $0x8] sm:$0xff]
        %v559 = vld [vmem:[%s471 + $0x10] sm:$0xff]
        %v560 = vld [vmem:[%s471 + $0x18] sm:$0xff]
        %v561 = vld [vmem:[%s471 + $0x20] sm:$0xff]
        %v562 = vld [vmem:[%s471 + $0x28] sm:$0xff]
        %v563 = vld [vmem:[%s471 + $0x30] sm:$0xff]
        %v564 = vld [vmem:[%s471 + $0x38] sm:$0xff]
        %v565 = vld [vmem:[%s471 + $0x40] sm:$0xff]
        %v566 = vld [vmem:[%s471 + $0x48] sm:$0xff]
        %v567 = vld [vmem:[%s471 + $0x50] sm:$0xff]
        %v568 = vld [vmem:[%s471 + $0x58] sm:$0xff]
        %v569 = vld [vmem:[%s471 + $0x60] sm:$0xff]
        %v570 = vld [vmem:[%s471 + $0x68] sm:$0xff]
        %v571 = vld [vmem:[%s471 + $0x70] sm:$0xff]
        %v572 = vld [vmem:[%s471 + $0x78] sm:$0xff]
        %v573 = vld [vmem:[%s471 + $0x80] sm:$0xff]
        %v574 = vld [vmem:[%s471 + $0x88] sm:$0xff]
        %v575 = vld [vmem:[%s471 + $0x90] sm:$0xff]
        %v576 = vld [vmem:[%s471 + $0x98] sm:$0xff]
        %v577 = vld [vmem:[%s471 + $0xa0] sm:$0xff]
        %v578 = vld [vmem:[%s471 + $0xa8] sm:$0xff]
        %v579 = vld [vmem:[%s471 + $0xb0] sm:$0xff]
        %v580 = vld [vmem:[%s471 + $0xb8] sm:$0xff]
        %v581 = vld [vmem:[%s553] sm:$0xff]
        %v582 = vld [vmem:[%s553 + $0x8] sm:$0xff]
        %v583 = vld [vmem:[%s553 + $0x10] sm:$0xff]
        %v584 = vld [vmem:[%s553 + $0x18] sm:$0xff]
        %v585 = vld [vmem:[%s553 + $0x20] sm:$0xff]
        %v586 = vld [vmem:[%s553 + $0x28] sm:$0xff]
        %v587 = vld [vmem:[%s553 + $0x30] sm:$0xff]
        %v588 = vld [vmem:[%s553 + $0x38] sm:$0xff]
        %v589 = vmul.f32 %v581, 19.95
        %v590 = vmul.f32 %v582, 19.95
        %v591 = vmul.f32 %v583, 19.95
        %v592 = vmul.f32 %v584, 19.95
        %v593 = vmul.f32 %v585, 19.95
        %v594 = vmul.f32 %v586, 19.95
        %v595 = vmul.f32 %v587, 19.95
        %v596 = vmul.f32 %v588, 19.95
        %v597 = vmul.f32 %v589, %v581
        %v598 = vmul.f32 %v590, %v582
        %v599 = vmul.f32 %v591, %v583
        %v600 = vmul.f32 %v592, %v584
        %v601 = vmul.f32 %v593, %v585
        %v602 = vmul.f32 %v594, %v586
        %v603 = vmul.f32 %v595, %v587
        %v604 = vmul.f32 %v596, %v588
        %v605 = vmul.f32 %v581, 0.1
        %v606 = vmul.f32 %v582, 0.1
        %v607 = vmul.f32 %v583, 0.1
        %v608 = vmul.f32 %v584, 0.1
        %v609 = vmul.f32 %v585, 0.1
        %v610 = vmul.f32 %v586, 0.1
        %v611 = vmul.f32 %v587, 0.1
        %v612 = vmul.f32 %v588, 0.1
        %v613 = vadd.f32 %v597, %v605
        %v614 = vadd.f32 %v598, %v606
        %v615 = vadd.f32 %v599, %v607
        %v616 = vadd.f32 %v600, %v608
        %v617 = vadd.f32 %v601, %v609
        %v618 = vadd.f32 %v602, %v610
        %v619 = vadd.f32 %v603, %v611
        %v620 = vadd.f32 %v604, %v612
        %v621 = vmul.f32 %v613, -0.5
        %v622 = vmul.f32 %v614, -0.5
        %v623 = vmul.f32 %v615, -0.5
        %v624 = vmul.f32 %v616, -0.5
        %v625 = vmul.f32 %v617, -0.5
        %v626 = vmul.f32 %v618, -0.5
        %v627 = vmul.f32 %v619, -0.5
        %v628 = vmul.f32 %v620, -0.5
        %v629 = vmul.f32 %v621, 1.442695
        %v630 = vpow.pop %v629
        %v631 = vmul.f32 %v622, 1.442695
        %v632 = vpow.pop %v631
        %v633 = vmul.f32 %v623, 1.442695
        %v634 = vpow.pop %v633
        %v635 = vmul.f32 %v624, 1.442695
        %v636 = vpow.pop %v635
        %v637 = vmul.f32 %v625, 1.442695
        %v638 = vpow.pop %v637
        %v639 = vmul.f32 %v626, 1.442695
        %v640 = vpow.pop %v639
        %v641 = vmul.f32 %v627, 1.442695
        %v642 = vpow.pop %v641
        %v643 = vmul.f32 %v628, 1.442695
        %v644 = vpow.pop %v643
        %v645 = vsub.f32 1.0, %v630
        %v646 = vsub.f32 1.0, %v632
        %v647 = vsub.f32 1.0, %v634
        %v648 = vsub.f32 1.0, %v636
        %v649 = vsub.f32 1.0, %v638
        %v650 = vsub.f32 1.0, %v640
        %v651 = vsub.f32 1.0, %v642
        %v652 = vsub.f32 1.0, %v644
        %v653 = vadd.f32 %v645, 1.12535176e-07
        %v654 = vadd.f32 %v646, 1.12535176e-07
        %v655 = vadd.f32 %v647, 1.12535176e-07
        %v656 = vadd.f32 %v648, 1.12535176e-07
        %v657 = vadd.f32 %v649, 1.12535176e-07
        %v658 = vadd.f32 %v650, 1.12535176e-07
        %v659 = vadd.f32 %v651, 1.12535176e-07
        %v660 = vadd.f32 %v652, 1.12535176e-07
        %v661 = vrsqrt.pop %v653
        %v662 = vmul.f32 %v661, %v653
        %v663 = vmul.f32 %v662, %v661
        %v664 = vmul.f32 0.5, %v663
        %v665 = vsub.f32 1.5, %v664
        %v666 = vmul.f32 %v661, %v665
        %v667 = vmul.f32 %v653, %v666
        %vm668 = vcmp.eq.f32.partialorder %v653, inf
        %v669 = vsel %vm668, %v653, %v667
        %vm670 = vcmp.eq.f32.partialorder %v653, 0.0
        %v671 = vand.u32 %v653, 2147483648
        %v672 = vsel %vm670, %v671, %v669
        %v673 = vrsqrt.pop %v654
        %v674 = vmul.f32 %v673, %v654
        %v675 = vmul.f32 %v674, %v673
        %v676 = vmul.f32 0.5, %v675
        %v677 = vsub.f32 1.5, %v676
        %v678 = vmul.f32 %v673, %v677
        %v679 = vmul.f32 %v654, %v678
        %vm680 = vcmp.eq.f32.partialorder %v654, inf
        %v681 = vsel %vm680, %v654, %v679
        %vm682 = vcmp.eq.f32.partialorder %v654, 0.0
        %v683 = vand.u32 %v654, 2147483648
        %v684 = vsel %vm682, %v683, %v681
        %v685 = vrsqrt.pop %v655
        %v686 = vmul.f32 %v685, %v655
        %v687 = vmul.f32 %v686, %v685
        %v688 = vmul.f32 0.5, %v687
        %v689 = vsub.f32 1.5, %v688
        %v690 = vmul.f32 %v685, %v689
        %v691 = vmul.f32 %v655, %v690
        %vm692 = vcmp.eq.f32.partialorder %v655, inf
        %v693 = vsel %vm692, %v655, %v691
        %vm694 = vcmp.eq.f32.partialorder %v655, 0.0
        %v695 = vand.u32 %v655, 2147483648
        %v696 = vsel %vm694, %v695, %v693
        %v697 = vrsqrt.pop %v656
        %v698 = vmul.f32 %v697, %v656
        %v699 = vmul.f32 %v698, %v697
        %v700 = vmul.f32 0.5, %v699
        %v701 = vsub.f32 1.5, %v700
        %v702 = vmul.f32 %v697, %v701
        %v703 = vmul.f32 %v656, %v702
        %vm704 = vcmp.eq.f32.partialorder %v656, inf
        %v705 = vsel %vm704, %v656, %v703
        %vm706 = vcmp.eq.f32.partialorder %v656, 0.0
        %v707 = vand.u32 %v656, 2147483648
        %v708 = vsel %vm706, %v707, %v705
        %v709 = vrsqrt.pop %v657
        %v710 = vmul.f32 %v709, %v657
        %v711 = vmul.f32 %v710, %v709
        %v712 = vmul.f32 0.5, %v711
        %v713 = vsub.f32 1.5, %v712
        %v714 = vmul.f32 %v709, %v713
        %v715 = vmul.f32 %v657, %v714
        %vm716 = vcmp.eq.f32.partialorder %v657, inf
        %v717 = vsel %vm716, %v657, %v715
        %vm718 = vcmp.eq.f32.partialorder %v657, 0.0
        %v719 = vand.u32 %v657, 2147483648
        %v720 = vsel %vm718, %v719, %v717
        %v721 = vrsqrt.pop %v658
        %v722 = vmul.f32 %v721, %v658
        %v723 = vmul.f32 %v722, %v721
        %v724 = vmul.f32 0.5, %v723
        %v725 = vsub.f32 1.5, %v724
        %v726 = vmul.f32 %v721, %v725
        %v727 = vmul.f32 %v658, %v726
        %vm728 = vcmp.eq.f32.partialorder %v658, inf
        %v729 = vsel %vm728, %v658, %v727
        %vm730 = vcmp.eq.f32.partialorder %v658, 0.0
        %v731 = vand.u32 %v658, 2147483648
        %v732 = vsel %vm730, %v731, %v729
        %v733 = vrsqrt.pop %v659
        %v734 = vmul.f32 %v733, %v659
        %v735 = vmul.f32 %v734, %v733
        %v736 = vmul.f32 0.5, %v735
        %v737 = vsub.f32 1.5, %v736
        %v738 = vmul.f32 %v733, %v737
        %v739 = vmul.f32 %v659, %v738
        %vm740 = vcmp.eq.f32.partialorder %v659, inf
        %v741 = vsel %vm740, %v659, %v739
        %vm742 = vcmp.eq.f32.partialorder %v659, 0.0
        %v743 = vand.u32 %v659, 2147483648
        %v744 = vsel %vm742, %v743, %v741
        %v745 = vrsqrt.pop %v660
        %v746 = vmul.f32 %v745, %v660
        %v747 = vmul.f32 %v746, %v745
        %v748 = vmul.f32 0.5, %v747
        %v749 = vsub.f32 1.5, %v748
        %v750 = vmul.f32 %v745, %v749
        %v751 = vmul.f32 %v660, %v750
        %vm752 = vcmp.eq.f32.partialorder %v660, inf
        %v753 = vsel %vm752, %v660, %v751
        %vm754 = vcmp.eq.f32.partialorder %v660, 0.0
        %v755 = vand.u32 %v660, 2147483648
        %v756 = vsel %vm754, %v755, %v753
        %v757 = vrsqrt.pop %v630
        %v758 = vmul.f32 %v757, %v630
        %v759 = vmul.f32 %v758, %v757
        %v760 = vmul.f32 0.5, %v759
        %v761 = vsub.f32 1.5, %v760
        %v762 = vmul.f32 %v757, %v761
        %v763 = vmul.f32 %v630, %v762
        %vm764 = vcmp.eq.f32.partialorder %v630, inf
        %v765 = vsel %vm764, %v630, %v763
        %vm766 = vcmp.eq.f32.partialorder %v630, 0.0
        %v767 = vand.u32 %v630, 2147483648
        %v768 = vsel %vm766, %v767, %v765
        %v769 = vrsqrt.pop %v632
        %v770 = vmul.f32 %v769, %v632
        %v771 = vmul.f32 %v770, %v769
        %v772 = vmul.f32 0.5, %v771
        %v773 = vsub.f32 1.5, %v772
        %v774 = vmul.f32 %v769, %v773
        %v775 = vmul.f32 %v632, %v774
        %vm776 = vcmp.eq.f32.partialorder %v632, inf
        %v777 = vsel %vm776, %v632, %v775
        %vm778 = vcmp.eq.f32.partialorder %v632, 0.0
        %v779 = vand.u32 %v632, 2147483648
        %v780 = vsel %vm778, %v779, %v777
        %v781 = vrsqrt.pop %v634
        %v782 = vmul.f32 %v781, %v634
        %v783 = vmul.f32 %v782, %v781
        %v784 = vmul.f32 0.5, %v783
        %v785 = vsub.f32 1.5, %v784
        %v786 = vmul.f32 %v781, %v785
        %v787 = vmul.f32 %v634, %v786
        %vm788 = vcmp.eq.f32.partialorder %v634, inf
        %v789 = vsel %vm788, %v634, %v787
        %vm790 = vcmp.eq.f32.partialorder %v634, 0.0
        %v791 = vand.u32 %v634, 2147483648
        %v792 = vsel %vm790, %v791, %v789
        %v793 = vrsqrt.pop %v636
        %v794 = vmul.f32 %v793, %v636
        %v795 = vmul.f32 %v794, %v793
        %v796 = vmul.f32 0.5, %v795
        %v797 = vsub.f32 1.5, %v796
        %v798 = vmul.f32 %v793, %v797
        %v799 = vmul.f32 %v636, %v798
        %vm800 = vcmp.eq.f32.partialorder %v636, inf
        %v801 = vsel %vm800, %v636, %v799
        %vm802 = vcmp.eq.f32.partialorder %v636, 0.0
        %v803 = vand.u32 %v636, 2147483648
        %v804 = vsel %vm802, %v803, %v801
        %v805 = vrsqrt.pop %v638
        %v806 = vmul.f32 %v805, %v638
        %v807 = vmul.f32 %v806, %v805
        %v808 = vmul.f32 0.5, %v807
        %v809 = vsub.f32 1.5, %v808
        %v810 = vmul.f32 %v805, %v809
        %v811 = vmul.f32 %v638, %v810
        %vm812 = vcmp.eq.f32.partialorder %v638, inf
        %v813 = vsel %vm812, %v638, %v811
        %vm814 = vcmp.eq.f32.partialorder %v638, 0.0
        %v815 = vand.u32 %v638, 2147483648
        %v816 = vsel %vm814, %v815, %v813
        %v817 = vrsqrt.pop %v640
        %v818 = vmul.f32 %v817, %v640
        %v819 = vmul.f32 %v818, %v817
        %v820 = vmul.f32 0.5, %v819
        %v821 = vsub.f32 1.5, %v820
        %v822 = vmul.f32 %v817, %v821
        %v823 = vmul.f32 %v640, %v822
        %vm824 = vcmp.eq.f32.partialorder %v640, inf
        %v825 = vsel %vm824, %v640, %v823
        %vm826 = vcmp.eq.f32.partialorder %v640, 0.0
        %v827 = vand.u32 %v640, 2147483648
        %v828 = vsel %vm826, %v827, %v825
        %v829 = vrsqrt.pop %v642
        %v830 = vmul.f32 %v829, %v642
        %v831 = vmul.f32 %v830, %v829
        %v832 = vmul.f32 0.5, %v831
        %v833 = vsub.f32 1.5, %v832
        %v834 = vmul.f32 %v829, %v833
        %v835 = vmul.f32 %v642, %v834
        %vm836 = vcmp.eq.f32.partialorder %v642, inf
        %v837 = vsel %vm836, %v642, %v835
        %vm838 = vcmp.eq.f32.partialorder %v642, 0.0
        %v839 = vand.u32 %v642, 2147483648
        %v840 = vsel %vm838, %v839, %v837
        %v841 = vrsqrt.pop %v644
        %v842 = vmul.f32 %v841, %v644
        %v843 = vmul.f32 %v842, %v841
        %v844 = vmul.f32 0.5, %v843
        %v845 = vsub.f32 1.5, %v844
        %v846 = vmul.f32 %v841, %v845
        %v847 = vmul.f32 %v644, %v846
        %vm848 = vcmp.eq.f32.partialorder %v644, inf
        %v849 = vsel %vm848, %v644, %v847
        %vm850 = vcmp.eq.f32.partialorder %v644, 0.0
        %v851 = vand.u32 %v644, 2147483648
        %v852 = vsel %vm850, %v851, %v849
        %854 = vset.pattern.permute.xlu0 0
        %855 = vperm.xlu0 %854, %v768
        %v856 = vpop.permute.xlu0 %855
        %859 = vset.pattern.permute.xlu0 0
        %860 = vperm.xlu0 %859, %v780
        %v861 = vpop.permute.xlu0 %860
        %864 = vset.pattern.permute.xlu0 0
        %865 = vperm.xlu0 %864, %v792
        %v866 = vpop.permute.xlu0 %865
        %869 = vset.pattern.permute.xlu0 0
        %870 = vperm.xlu0 %869, %v804
        %v871 = vpop.permute.xlu0 %870
        %874 = vset.pattern.permute.xlu0 0
        %875 = vperm.xlu0 %874, %v816
        %v876 = vpop.permute.xlu0 %875
        %879 = vset.pattern.permute.xlu0 0
        %880 = vperm.xlu0 %879, %v828
        %v881 = vpop.permute.xlu0 %880
        %884 = vset.pattern.permute.xlu0 0
        %885 = vperm.xlu0 %884, %v840
        %v886 = vpop.permute.xlu0 %885
        %889 = vset.pattern.permute.xlu0 0
        %890 = vperm.xlu0 %889, %v852
        %v891 = vpop.permute.xlu0 %890
        %v893 = vmul.f32 %v856, %v557
        %v894 = vmul.f32 %v861, %v560
        %v895 = vmul.f32 %v866, %v563
        %v896 = vmul.f32 %v871, %v566
        %v897 = vmul.f32 %v876, %v569
        %v898 = vmul.f32 %v881, %v572
        %v899 = vmul.f32 %v886, %v575
        %v900 = vmul.f32 %v891, %v578
        %902 = vset.pattern.permute.xlu0 0
        %903 = vperm.xlu0 %902, %v672
        %v904 = vpop.permute.xlu0 %903
        %907 = vset.pattern.permute.xlu0 0
        %908 = vperm.xlu0 %907, %v684
        %v909 = vpop.permute.xlu0 %908
        %912 = vset.pattern.permute.xlu0 0
        %913 = vperm.xlu0 %912, %v696
        %v914 = vpop.permute.xlu0 %913
        %917 = vset.pattern.permute.xlu0 0
        %918 = vperm.xlu0 %917, %v708
        %v919 = vpop.permute.xlu0 %918
        %922 = vset.pattern.permute.xlu0 0
        %923 = vperm.xlu0 %922, %v720
        %v924 = vpop.permute.xlu0 %923
        %927 = vset.pattern.permute.xlu0 0
        %928 = vperm.xlu0 %927, %v732
        %v929 = vpop.permute.xlu0 %928
        %932 = vset.pattern.permute.xlu0 0
        %933 = vperm.xlu0 %932, %v744
        %v934 = vpop.permute.xlu0 %933
        %937 = vset.pattern.permute.xlu0 0
        %938 = vperm.xlu0 %937, %v756
        %v939 = vpop.permute.xlu0 %938
        %v941 = vmul.f32 %v904, %v558
        %v942 = vmul.f32 %v909, %v561
        %v943 = vmul.f32 %v914, %v564
        %v944 = vmul.f32 %v919, %v567
        %v945 = vmul.f32 %v924, %v570
        %v946 = vmul.f32 %v929, %v573
        %v947 = vmul.f32 %v934, %v576
        %v948 = vmul.f32 %v939, %v579
        %v949 = vadd.f32 %v893, %v941
        %v950 = vadd.f32 %v894, %v942
        %v951 = vadd.f32 %v895, %v943
        %v952 = vadd.f32 %v896, %v944
        %v953 = vadd.f32 %v897, %v945
        %v954 = vadd.f32 %v898, %v946
        %v955 = vadd.f32 %v899, %v947
        %v956 = vadd.f32 %v900, %v948
        %v957 = vadd.f32 %v949, %v559
        %v958 = vadd.f32 %v950, %v562
        %v959 = vadd.f32 %v951, %v565
        %v960 = vadd.f32 %v952, %v568
        %v961 = vadd.f32 %v953, %v571
        %v962 = vadd.f32 %v954, %v574
        %v963 = vadd.f32 %v955, %v577
        %v964 = vadd.f32 %v956, %v580
        %v965 = vpack.c.bf16 %v958, %v957
        %v966 = vpack.c.bf16 %v960, %v959
        %v967 = vpack.c.bf16 %v962, %v961
        %v968 = vpack.c.bf16 %v964, %v963
        %v969 = vld [vmem:[%s3] sm:$0xff]
        %v970 = vld [vmem:[%s3 + $0x8] sm:$0xff]
        %v971 = vld [vmem:[%s3 + $0x10] sm:$0xff]
        %v972 = vld [vmem:[%s3 + $0x18] sm:$0xff]
        %v973 = vld [vmem:[%s3 + $0x20] sm:$0xff]
        %v974 = vld [vmem:[%s3 + $0x28] sm:$0xff]
        %v975 = vld [vmem:[%s3 + $0x30] sm:$0xff]
        %v976 = vld [vmem:[%s3 + $0x38] sm:$0xff]
        %v977 = vld [vmem:[%s3 + $0x40] sm:$0xff]
        %v978 = vld [vmem:[%s3 + $0x48] sm:$0xff]
        %v979 = vld [vmem:[%s3 + $0x50] sm:$0xff]
        %v980 = vld [vmem:[%s3 + $0x58] sm:$0xff]
        %v981 = vld [vmem:[%s3 + $0x60] sm:$0xff]
        %v982 = vld [vmem:[%s3 + $0x68] sm:$0xff]
        %v983 = vld [vmem:[%s3 + $0x70] sm:$0xff]
        %v984 = vld [vmem:[%s3 + $0x78] sm:$0xff]
        %v985 = vld [vmem:[#allocation5] sm:$0x3]
        %v987 = vperm.slane %v985, 0
        %v988 = vperm.slane %v985, 1
        %v1007 = vunpack.c.l.b16 %v969
        %v1008 = vunpack.c.h.b16 %v969
        %v1009 = vunpack.c.l.b16 %v970
        %v1010 = vunpack.c.h.b16 %v970
        %v1011 = vunpack.c.l.b16 %v971
        %v1012 = vunpack.c.h.b16 %v971
        %v1013 = vunpack.c.l.b16 %v972
        %v1014 = vunpack.c.h.b16 %v972
        %v1015 = vunpack.c.l.b16 %v973
        %v1016 = vunpack.c.h.b16 %v973
        %v1017 = vunpack.c.l.b16 %v974
        %v1018 = vunpack.c.h.b16 %v974
        %v1019 = vunpack.c.l.b16 %v975
        %v1020 = vunpack.c.h.b16 %v975
        %v1021 = vunpack.c.l.b16 %v976
        %v1022 = vunpack.c.h.b16 %v976
        %v1023 = vunpack.c.l.b16 %v977
        %v1024 = vunpack.c.h.b16 %v977
        %v1025 = vunpack.c.l.b16 %v978
        %v1026 = vunpack.c.h.b16 %v978
        %v1027 = vunpack.c.l.b16 %v979
        %v1028 = vunpack.c.h.b16 %v979
        %v1029 = vunpack.c.l.b16 %v980
        %v1030 = vunpack.c.h.b16 %v980
        %v1031 = vunpack.c.l.b16 %v981
        %v1032 = vunpack.c.h.b16 %v981
        %v1033 = vunpack.c.l.b16 %v982
        %v1034 = vunpack.c.h.b16 %v982
        %v1035 = vunpack.c.l.b16 %v983
        %v1036 = vunpack.c.h.b16 %v983
        %v1037 = vunpack.c.l.b16 %v984
        %v1038 = vunpack.c.h.b16 %v984
        %v1039 = vpack.c.b16 %v1009, %v1007
        %v1040 = vpack.c.b16 %v1010, %v1008
        %v1041 = vpack.c.b16 %v1013, %v1011
        %v1042 = vpack.c.b16 %v1014, %v1012
        %v1043 = vpack.c.b16 %v1017, %v1015
        %v1044 = vpack.c.b16 %v1018, %v1016
        %v1045 = vpack.c.b16 %v1021, %v1019
        %v1046 = vpack.c.b16 %v1022, %v1020
        %v1047 = vpack.c.b16 %v1025, %v1023
        %v1048 = vpack.c.b16 %v1026, %v1024
        %v1049 = vpack.c.b16 %v1029, %v1027
        %v1050 = vpack.c.b16 %v1030, %v1028
        %v1051 = vpack.c.b16 %v1033, %v1031
        %v1052 = vpack.c.b16 %v1034, %v1032
        %v1053 = vpack.c.b16 %v1037, %v1035
        %v1054 = vpack.c.b16 %v1038, %v1036
        %1071 = vmatpush.bf16.msra.mxu0 %v1053
        %1072 = vmatpush.bf16.msra.mxu0 %v1051
        %1073 = vmatpush.bf16.msra.mxu0 %v1049
        %1074 = vmatpush.bf16.msra.mxu0 %v1047
        %1075 = vmatpush.bf16.msra.mxu0 %v1045
        %1076 = vmatpush.bf16.msra.mxu0 %v1043
        %1077 = vmatpush.bf16.msra.mxu0 %v1041
        %1078 = vmatpush.bf16.msra.mxu0 %v1039
        %1079 = vmatmul.bf16.gmra.mxu0 %v965
        %v1080 = vpop.f32.mrf.mxu0
        %v1081 = vadd.f32 %v987, %v1080
        %v1082 = vpop.f32.mrf.mxu0
        %v1083 = vadd.f32 %v987, %v1082
        %1084 = vmatmul.bf16.gmra.mxu0 %v966
        %v1085 = vpop.f32.mrf.mxu0
        %v1086 = vadd.f32 %v987, %v1085
        %v1087 = vpop.f32.mrf.mxu0
        %v1088 = vadd.f32 %v987, %v1087
        %1089 = vmatmul.bf16.gmra.mxu0 %v967
        %v1090 = vpop.f32.mrf.mxu0
        %v1091 = vadd.f32 %v987, %v1090
        %v1092 = vpop.f32.mrf.mxu0
        %v1093 = vadd.f32 %v987, %v1092
        %1094 = vmatmul.bf16.gmra.mxu0 %v968
        %v1095 = vpop.f32.mrf.mxu0
        %v1096 = vadd.f32 %v987, %v1095
        %v1097 = vpop.f32.mrf.mxu0
        %v1098 = vadd.f32 %v987, %v1097
        %1099 = vdwg.mxu0
        %1100 = vmatpush.bf16.msra.mxu0 %v1054
        %1101 = vmatpush.bf16.msra.mxu0 %v1052
        %1102 = vmatpush.bf16.msra.mxu0 %v1050
        %1103 = vmatpush.bf16.msra.mxu0 %v1048
        %1104 = vmatpush.bf16.msra.mxu0 %v1046
        %1105 = vmatpush.bf16.msra.mxu0 %v1044
        %1106 = vmatpush.bf16.msra.mxu0 %v1042
        %1107 = vmatpush.bf16.msra.mxu0 %v1040
        %1108 = vmatmul.bf16.gmra.mxu0 %v965
        %v1109 = vpop.f32.mrf.mxu0
        %v1110 = vadd.f32 %v988, %v1109
        %v1111 = vpop.f32.mrf.mxu0
        %v1112 = vadd.f32 %v988, %v1111
        %1113 = vmatmul.bf16.gmra.mxu0 %v966
        %v1114 = vpop.f32.mrf.mxu0
        %v1115 = vadd.f32 %v988, %v1114
        %v1116 = vpop.f32.mrf.mxu0
        %v1117 = vadd.f32 %v988, %v1116
        %1118 = vmatmul.bf16.gmra.mxu0 %v967
        %v1119 = vpop.f32.mrf.mxu0
        %v1120 = vadd.f32 %v988, %v1119
        %v1121 = vpop.f32.mrf.mxu0
        %v1122 = vadd.f32 %v988, %v1121
        %1123 = vmatmul.bf16.gmra.mxu0 %v968
        %v1124 = vpop.f32.mrf.mxu0
        %v1125 = vadd.f32 %v988, %v1124
        %v1126 = vpop.f32.mrf.mxu0
        %v1127 = vadd.f32 %v988, %v1126
        %1128 = vdwg.mxu0
        %v1129 = vld [vmem:[#allocation5 + $0x2] sm:$0x1]
        %1131 = vset.pattern.permute.xlu0 0
        %1132 = vperm.xlu0 %1131, %v581
        %v1133 = vpop.permute.xlu0 %1132
        %1136 = vset.pattern.permute.xlu0 0
        %1137 = vperm.xlu0 %1136, %v582
        %v1138 = vpop.permute.xlu0 %1137
        %1141 = vset.pattern.permute.xlu0 0
        %1142 = vperm.xlu0 %1141, %v583
        %v1143 = vpop.permute.xlu0 %1142
        %1146 = vset.pattern.permute.xlu0 0
        %1147 = vperm.xlu0 %1146, %v584
        %v1148 = vpop.permute.xlu0 %1147
        %1151 = vset.pattern.permute.xlu0 0
        %1152 = vperm.xlu0 %1151, %v585
        %v1153 = vpop.permute.xlu0 %1152
        %1156 = vset.pattern.permute.xlu0 0
        %1157 = vperm.xlu0 %1156, %v586
        %v1158 = vpop.permute.xlu0 %1157
        %1161 = vset.pattern.permute.xlu0 0
        %1162 = vperm.xlu0 %1161, %v587
        %v1163 = vpop.permute.xlu0 %1162
        %1166 = vset.pattern.permute.xlu0 0
        %1167 = vperm.xlu0 %1166, %v588
        %v1168 = vpop.permute.xlu0 %1167
        %v1171 = vperm.slane %v1129, 0
        %v1173 = vmul.f32 %v1133, %v1171
        %v1174 = vmul.f32 %v1138, %v1171
        %v1175 = vmul.f32 %v1143, %v1171
        %v1176 = vmul.f32 %v1148, %v1171
        %v1177 = vmul.f32 %v1153, %v1171
        %v1178 = vmul.f32 %v1158, %v1171
        %v1179 = vmul.f32 %v1163, %v1171
        %v1180 = vmul.f32 %v1168, %v1171
        %v1181 = vld [vmem:[#allocation5 + $0x3] sm:$0x1]
        %v1183 = vperm.slane %v1181, 0
        %v1185 = vadd.f32 %v1173, %v1183
        %v1186 = vadd.f32 %v1174, %v1183
        %v1187 = vadd.f32 %v1175, %v1183
        %v1188 = vadd.f32 %v1176, %v1183
        %v1189 = vadd.f32 %v1177, %v1183
        %v1190 = vadd.f32 %v1178, %v1183
        %v1191 = vadd.f32 %v1179, %v1183
        %v1192 = vadd.f32 %v1180, %v1183
        %v1193 = vand.u32 2147483647, %v1185
        %vm1194 = vcmp.le.f32.partialorder %v1193, 0.7853982
        %vm1195 = vcmp.lt.s32.totalorder %v1185, 0
        %v1196 = vand.u32 %v1185, 2139095040
        %v1197 = vshrl.u32 %v1196, 23
        %v1198 = vsub.s32 %v1197, 127
        %v1199 = vand.u32 2147483647, %v1185
        %v1200 = vand.u32 %v1199, 8388607
        %v1201 = vor.u32 %v1200, 8388608
        %v1202 = vsub.s32 0, %v1201
        %v1203 = vadd.s32 %v1198, 1
        %vm1204 = vcmp.gt.s32.totalorder %v1203, 0
        %v1205 = vsel %vm1204, %v1203, 0
        %v1206 = vshrl.u32 %v1205, 5
        %v1207 = vand.u32 %v1205, 31
        %v1208 = vsub.s32 32, %v1207
        %v1209 = vshrl.u32 683565275, %v1208
        %v1210 = vshll.u32 683565275, %v1207
        %v1211 = vshrl.u32 2475754826, %v1208
        %v1212 = vor.u32 %v1210, %v1211
        %v1213 = vshll.u32 2475754826, %v1207
        %v1214 = vshrl.u32 2131351028, %v1208
        %v1215 = vor.u32 %v1213, %v1214
        %v1216 = vshll.u32 2131351028, %v1207
        %v1217 = vshrl.u32 2102212464, %v1208
        %v1218 = vor.u32 %v1216, %v1217
        %v1219 = vshll.u32 2102212464, %v1207
        %v1220 = vshrl.u32 920167782, %v1208
        %v1221 = vor.u32 %v1219, %v1220
        %v1222 = vshll.u32 920167782, %v1207
        %v1223 = vshrl.u32 1326507024, %v1208
        %v1224 = vor.u32 %v1222, %v1223
        %vm1225 = vcmp.lt.s32.totalorder %v1206, 1
        %vm1226 = vcmp.lt.s32.totalorder %v1206, 2
        %vm1227 = vcmp.lt.s32.totalorder %v1206, 3
        %vm1228 = vcmp.lt.s32.totalorder %v1206, 4
        %v1229 = vsel %vm1225, %v1209, %v1212
        %v1230 = vsel %vm1228, %v1218, 2102212464
        %v1231 = vsel %vm1227, %v1215, %v1230
        %v1232 = vsel %vm1226, %v1229, %v1231
        %v1233 = vsel %vm1225, %v1212, %v1215
        %v1234 = vsel %vm1228, %v1221, 920167782
        %v1235 = vsel %vm1227, %v1218, %v1234
        %v1236 = vsel %vm1226, %v1233, %v1235
        %v1237 = vsel %vm1225, %v1215, %v1218
        %v1238 = vsel %vm1228, %v1224, 1326507024
        %v1239 = vsel %vm1227, %v1221, %v1238
        %v1240 = vsel %vm1226, %v1237, %v1239
        %v1241 = vshll.u32 %v1201, 8
        %v1242 = vand.u32 %v1241, 65535
        %v1243 = vshrl.u32 %v1241, 16
        %v1244 = vand.u32 %v1240, 65535
        %v1245 = vshrl.u32 %v1240, 16
        %v1246 = vmul.u32 %v1242, %v1244
        %v1247 = vmul.u32 %v1242, %v1245
        %v1248 = vmul.u32 %v1243, %v1244
        %v1249 = vmul.u32 %v1243, %v1245
        %v1250 = vshll.u32 %v1247, 16
        %v1251 = vshrl.u32 %v1247, 16
        %v1252 = vshll.u32 %v1248, 16
        %v1253 = vshrl.u32 %v1248, 16
        %vm1254 = vc.u32 %v1246, %v1250
        %v1255 = vsel %vm1254, 1, 0
        %v1256 = vadd.s32 %v1246, %v1250
        %v1257 = vadd.s32 %v1249, %v1255
        %vm1258 = vc.u32 %v1256, %v1252
        %v1259 = vsel %vm1258, 1, 0
        %v1260 = vadd.s32 %v1256, %v1252
        %v1261 = vadd.s32 %v1257, %v1259
        %v1262 = vadd.s32 %v1261, %v1251
        %v1263 = vadd.s32 %v1262, %v1253
        %v1264 = vand.u32 %v1241, 65535
        %v1265 = vshrl.u32 %v1241, 16
        %v1266 = vand.u32 %v1236, 65535
        %v1267 = vshrl.u32 %v1236, 16
        %v1268 = vmul.u32 %v1264, %v1266
        %v1269 = vmul.u32 %v1264, %v1267
        %v1270 = vmul.u32 %v1265, %v1266
        %v1271 = vmul.u32 %v1265, %v1267
        %v1272 = vshll.u32 %v1269, 16
        %v1273 = vshrl.u32 %v1269, 16
        %v1274 = vshll.u32 %v1270, 16
        %v1275 = vshrl.u32 %v1270, 16
        %vm1276 = vc.u32 %v1268, %v1272
        %v1277 = vsel %vm1276, 1, 0
        %v1278 = vadd.s32 %v1268, %v1272
        %v1279 = vadd.s32 %v1271, %v1277
        %vm1280 = vc.u32 %v1278, %v1274
        %v1281 = vsel %vm1280, 1, 0
        %v1282 = vadd.s32 %v1278, %v1274
        %v1283 = vadd.s32 %v1279, %v1281
        %v1284 = vadd.s32 %v1283, %v1273
        %v1285 = vadd.s32 %v1284, %v1275
        %v1286 = vmul.u32 %v1241, %v1232
        %v1287 = vadd.s32 %v1263, %v1282
        %vm1288 = vc.u32 %v1263, %v1282
        %v1289 = vadd.s32 %v1285, 1
        %v1290 = vsel %vm1288, %v1289, %v1285
        %v1291 = vadd.s32 %v1286, %v1290
        %v1292 = vadd.s32 %v1291, 536870912
        %v1293 = vshrl.u32 %v1292, 30
        %v1294 = vshll.u32 %v1293, 30
        %v1295 = vsub.s32 %v1291, %v1294
        %vm1296 = vcmp.lt.s32.totalorder %v1295, 0
        %v1297 = vsub.s32 0, %v1295
        %v1298 = vsel %vm1296, %v1297, %v1295
        %v1299 = vclz %v1298
        %v1300 = vsub.s32 %v1299, 2
        %vm1301 = vcmp.gt.s32.totalorder 0, %v1300
        %v1302 = vsel %vm1301, 0, %v1300
        %v1303 = vsub.s32 32, %v1302
        %v1304 = vshll.u32 %v1295, %v1302
        %v1305 = vshrl.u32 %v1287, %v1303
        %v1306 = vor.u32 %v1304, %v1305
        %v1307 = vsub.s32 4294967266, %v1302
        %v1308 = vadd.s32 %v1307, 127
        %v1309 = vshll.u32 %v1308, 23
        %v1310 = vor.u32 4788187, %v1309
        %v1311 = vand.u32 2147483647, %v1310
        %v1313 = vcvt.s32.f32 %v1306
        %v1314 = vmul.f32 %v1313, %v1311
        %v1315 = vxor.u32 %v1314, 2147483648
        %v1316 = vsel %vm1195, %v1315, %v1314
        %v1317 = vsub.s32 4, %v1293
        %v1318 = vsel %vm1195, %v1317, %v1293
        %v1319 = vsel %vm1194, %v1185, %v1316
        %v1320 = vsel %vm1194, 0, %v1318
        %v1321 = vmul.f32 %v1319, %v1319
        %v1322 = vmul.f32 %v1321, -0.001358992
        %v1323 = vadd.f32 %v1322, 0.041655596
        %v1324 = vmul.f32 %v1321, %v1323
        %v1325 = vadd.f32 %v1324, -0.4999988
        %v1326 = vmul.f32 %v1321, %v1325
        %v1327 = vadd.f32 1.0, %v1326
        %v1328 = vmul.f32 %v1319, %v1319
        %v1329 = vmul.f32 %v1328, -0.00019511016
        %v1330 = vadd.f32 %v1329, 0.008332121
        %v1331 = vmul.f32 %v1328, %v1330
        %v1332 = vadd.f32 %v1331, -0.16666654
        %v1333 = vmul.f32 %v1328, %v1332
        %v1334 = vadd.f32 %v1333, 1.0
        %v1335 = vmul.f32 %v1334, %v1319
        %vm1336 = vweird.f32 %v1185
        %v1337 = vadd.s32 %v1320, 3
        %v1338 = vand.u32 %v1337, 3
        %vm1339 = vcmp.lt.s32.totalorder %v1338, 2
        %vm1340 = vcmp.eq.s32.totalorder %v1338, 0
        %v1341 = vxor.u32 %v1335, 2147483648
        %v1342 = vsel %vm1340, %v1327, %v1341
        %vm1343 = vcmp.eq.s32.totalorder %v1338, 2
        %v1344 = vxor.u32 %v1327, 2147483648
        %v1345 = vsel %vm1343, %v1344, %v1335
        %v1346 = vsel %vm1339, %v1342, %v1345
        %v1347 = vsel %vm1336, nan, %v1346
        %v1348 = vand.u32 2147483647, %v1186
        %vm1349 = vcmp.le.f32.partialorder %v1348, 0.7853982
        %vm1350 = vcmp.lt.s32.totalorder %v1186, 0
        %v1351 = vand.u32 %v1186, 2139095040
        %v1352 = vshrl.u32 %v1351, 23
        %v1353 = vsub.s32 %v1352, 127
        %v1354 = vand.u32 2147483647, %v1186
        %v1355 = vand.u32 %v1354, 8388607
        %v1356 = vor.u32 %v1355, 8388608
        %v1357 = vsub.s32 0, %v1356
        %v1358 = vadd.s32 %v1353, 1
        %vm1359 = vcmp.gt.s32.totalorder %v1358, 0
        %v1360 = vsel %vm1359, %v1358, 0
        %v1361 = vshrl.u32 %v1360, 5
        %v1362 = vand.u32 %v1360, 31
        %v1363 = vsub.s32 32, %v1362
        %v1364 = vshrl.u32 683565275, %v1363
        %v1365 = vshll.u32 683565275, %v1362
        %v1366 = vshrl.u32 2475754826, %v1363
        %v1367 = vor.u32 %v1365, %v1366
        %v1368 = vshll.u32 2475754826, %v1362
        %v1369 = vshrl.u32 2131351028, %v1363
        %v1370 = vor.u32 %v1368, %v1369
        %v1371 = vshll.u32 2131351028, %v1362
        %v1372 = vshrl.u32 2102212464, %v1363
        %v1373 = vor.u32 %v1371, %v1372
        %v1374 = vshll.u32 2102212464, %v1362
        %v1375 = vshrl.u32 920167782, %v1363
        %v1376 = vor.u32 %v1374, %v1375
        %v1377 = vshll.u32 920167782, %v1362
        %v1378 = vshrl.u32 1326507024, %v1363
        %v1379 = vor.u32 %v1377, %v1378
        %vm1380 = vcmp.lt.s32.totalorder %v1361, 1
        %vm1381 = vcmp.lt.s32.totalorder %v1361, 2
        %vm1382 = vcmp.lt.s32.totalorder %v1361, 3
        %vm1383 = vcmp.lt.s32.totalorder %v1361, 4
        %v1384 = vsel %vm1380, %v1364, %v1367
        %v1385 = vsel %vm1383, %v1373, 2102212464
        %v1386 = vsel %vm1382, %v1370, %v1385
        %v1387 = vsel %vm1381, %v1384, %v1386
        %v1388 = vsel %vm1380, %v1367, %v1370
        %v1389 = vsel %vm1383, %v1376, 920167782
        %v1390 = vsel %vm1382, %v1373, %v1389
        %v1391 = vsel %vm1381, %v1388, %v1390
        %v1392 = vsel %vm1380, %v1370, %v1373
        %v1393 = vsel %vm1383, %v1379, 1326507024
        %v1394 = vsel %vm1382, %v1376, %v1393
        %v1395 = vsel %vm1381, %v1392, %v1394
        %v1396 = vshll.u32 %v1356, 8
        %v1397 = vand.u32 %v1396, 65535
        %v1398 = vshrl.u32 %v1396, 16
        %v1399 = vand.u32 %v1395, 65535
        %v1400 = vshrl.u32 %v1395, 16
        %v1401 = vmul.u32 %v1397, %v1399
        %v1402 = vmul.u32 %v1397, %v1400
        %v1403 = vmul.u32 %v1398, %v1399
        %v1404 = vmul.u32 %v1398, %v1400
        %v1405 = vshll.u32 %v1402, 16
        %v1406 = vshrl.u32 %v1402, 16
        %v1407 = vshll.u32 %v1403, 16
        %v1408 = vshrl.u32 %v1403, 16
        %vm1409 = vc.u32 %v1401, %v1405
        %v1410 = vsel %vm1409, 1, 0
        %v1411 = vadd.s32 %v1401, %v1405
        %v1412 = vadd.s32 %v1404, %v1410
        %vm1413 = vc.u32 %v1411, %v1407
        %v1414 = vsel %vm1413, 1, 0
        %v1415 = vadd.s32 %v1411, %v1407
        %v1416 = vadd.s32 %v1412, %v1414
        %v1417 = vadd.s32 %v1416, %v1406
        %v1418 = vadd.s32 %v1417, %v1408
        %v1419 = vand.u32 %v1396, 65535
        %v1420 = vshrl.u32 %v1396, 16
        %v1421 = vand.u32 %v1391, 65535
        %v1422 = vshrl.u32 %v1391, 16
        %v1423 = vmul.u32 %v1419, %v1421
        %v1424 = vmul.u32 %v1419, %v1422
        %v1425 = vmul.u32 %v1420, %v1421
        %v1426 = vmul.u32 %v1420, %v1422
        %v1427 = vshll.u32 %v1424, 16
        %v1428 = vshrl.u32 %v1424, 16
        %v1429 = vshll.u32 %v1425, 16
        %v1430 = vshrl.u32 %v1425, 16
        %vm1431 = vc.u32 %v1423, %v1427
        %v1432 = vsel %vm1431, 1, 0
        %v1433 = vadd.s32 %v1423, %v1427
        %v1434 = vadd.s32 %v1426, %v1432
        %vm1435 = vc.u32 %v1433, %v1429
        %v1436 = vsel %vm1435, 1, 0
        %v1437 = vadd.s32 %v1433, %v1429
        %v1438 = vadd.s32 %v1434, %v1436
        %v1439 = vadd.s32 %v1438, %v1428
        %v1440 = vadd.s32 %v1439, %v1430
        %v1441 = vmul.u32 %v1396, %v1387
        %v1442 = vadd.s32 %v1418, %v1437
        %vm1443 = vc.u32 %v1418, %v1437
        %v1444 = vadd.s32 %v1440, 1
        %v1445 = vsel %vm1443, %v1444, %v1440
        %v1446 = vadd.s32 %v1441, %v1445
        %v1447 = vadd.s32 %v1446, 536870912
        %v1448 = vshrl.u32 %v1447, 30
        %v1449 = vshll.u32 %v1448, 30
        %v1450 = vsub.s32 %v1446, %v1449
        %vm1451 = vcmp.lt.s32.totalorder %v1450, 0
        %v1452 = vsub.s32 0, %v1450
        %v1453 = vsel %vm1451, %v1452, %v1450
        %v1454 = vclz %v1453
        %v1455 = vsub.s32 %v1454, 2
        %vm1456 = vcmp.gt.s32.totalorder 0, %v1455
        %v1457 = vsel %vm1456, 0, %v1455
        %v1458 = vsub.s32 32, %v1457
        %v1459 = vshll.u32 %v1450, %v1457
        %v1460 = vshrl.u32 %v1442, %v1458
        %v1461 = vor.u32 %v1459, %v1460
        %v1462 = vsub.s32 4294967266, %v1457
        %v1463 = vadd.s32 %v1462, 127
        %v1464 = vshll.u32 %v1463, 23
        %v1465 = vor.u32 4788187, %v1464
        %v1466 = vand.u32 2147483647, %v1465
        %v1468 = vcvt.s32.f32 %v1461
        %v1469 = vmul.f32 %v1468, %v1466
        %v1470 = vxor.u32 %v1469, 2147483648
        %v1471 = vsel %vm1350, %v1470, %v1469
        %v1472 = vsub.s32 4, %v1448
        %v1473 = vsel %vm1350, %v1472, %v1448
        %v1474 = vsel %vm1349, %v1186, %v1471
        %v1475 = vsel %vm1349, 0, %v1473
        %v1476 = vmul.f32 %v1474, %v1474
        %v1477 = vmul.f32 %v1476, -0.001358992
        %v1478 = vadd.f32 %v1477, 0.041655596
        %v1479 = vmul.f32 %v1476, %v1478
        %v1480 = vadd.f32 %v1479, -0.4999988
        %v1481 = vmul.f32 %v1476, %v1480
        %v1482 = vadd.f32 1.0, %v1481
        %v1483 = vmul.f32 %v1474, %v1474
        %v1484 = vmul.f32 %v1483, -0.00019511016
        %v1485 = vadd.f32 %v1484, 0.008332121
        %v1486 = vmul.f32 %v1483, %v1485
        %v1487 = vadd.f32 %v1486, -0.16666654
        %v1488 = vmul.f32 %v1483, %v1487
        %v1489 = vadd.f32 %v1488, 1.0
        %v1490 = vmul.f32 %v1489, %v1474
        %vm1491 = vweird.f32 %v1186
        %v1492 = vadd.s32 %v1475, 3
        %v1493 = vand.u32 %v1492, 3
        %vm1494 = vcmp.lt.s32.totalorder %v1493, 2
        %vm1495 = vcmp.eq.s32.totalorder %v1493, 0
        %v1496 = vxor.u32 %v1490, 2147483648
        %v1497 = vsel %vm1495, %v1482, %v1496
        %vm1498 = vcmp.eq.s32.totalorder %v1493, 2
        %v1499 = vxor.u32 %v1482, 2147483648
        %v1500 = vsel %vm1498, %v1499, %v1490
        %v1501 = vsel %vm1494, %v1497, %v1500
        %v1502 = vsel %vm1491, nan, %v1501
        %v1503 = vand.u32 2147483647, %v1187
        %vm1504 = vcmp.le.f32.partialorder %v1503, 0.7853982
        %vm1505 = vcmp.lt.s32.totalorder %v1187, 0
        %v1506 = vand.u32 %v1187, 2139095040
        %v1507 = vshrl.u32 %v1506, 23
        %v1508 = vsub.s32 %v1507, 127
        %v1509 = vand.u32 2147483647, %v1187
        %v1510 = vand.u32 %v1509, 8388607
        %v1511 = vor.u32 %v1510, 8388608
        %v1512 = vsub.s32 0, %v1511
        %v1513 = vadd.s32 %v1508, 1
        %vm1514 = vcmp.gt.s32.totalorder %v1513, 0
        %v1515 = vsel %vm1514, %v1513, 0
        %v1516 = vshrl.u32 %v1515, 5
        %v1517 = vand.u32 %v1515, 31
        %v1518 = vsub.s32 32, %v1517
        %v1519 = vshrl.u32 683565275, %v1518
        %v1520 = vshll.u32 683565275, %v1517
        %v1521 = vshrl.u32 2475754826, %v1518
        %v1522 = vor.u32 %v1520, %v1521
        %v1523 = vshll.u32 2475754826, %v1517
        %v1524 = vshrl.u32 2131351028, %v1518
        %v1525 = vor.u32 %v1523, %v1524
        %v1526 = vshll.u32 2131351028, %v1517
        %v1527 = vshrl.u32 2102212464, %v1518
        %v1528 = vor.u32 %v1526, %v1527
        %v1529 = vshll.u32 2102212464, %v1517
        %v1530 = vshrl.u32 920167782, %v1518
        %v1531 = vor.u32 %v1529, %v1530
        %v1532 = vshll.u32 920167782, %v1517
        %v1533 = vshrl.u32 1326507024, %v1518
        %v1534 = vor.u32 %v1532, %v1533
        %vm1535 = vcmp.lt.s32.totalorder %v1516, 1
        %vm1536 = vcmp.lt.s32.totalorder %v1516, 2
        %vm1537 = vcmp.lt.s32.totalorder %v1516, 3
        %vm1538 = vcmp.lt.s32.totalorder %v1516, 4
        %v1539 = vsel %vm1535, %v1519, %v1522
        %v1540 = vsel %vm1538, %v1528, 2102212464
        %v1541 = vsel %vm1537, %v1525, %v1540
        %v1542 = vsel %vm1536, %v1539, %v1541
        %v1543 = vsel %vm1535, %v1522, %v1525
        %v1544 = vsel %vm1538, %v1531, 920167782
        %v1545 = vsel %vm1537, %v1528, %v1544
        %v1546 = vsel %vm1536, %v1543, %v1545
        %v1547 = vsel %vm1535, %v1525, %v1528
        %v1548 = vsel %vm1538, %v1534, 1326507024
        %v1549 = vsel %vm1537, %v1531, %v1548
        %v1550 = vsel %vm1536, %v1547, %v1549
        %v1551 = vshll.u32 %v1511, 8
        %v1552 = vand.u32 %v1551, 65535
        %v1553 = vshrl.u32 %v1551, 16
        %v1554 = vand.u32 %v1550, 65535
        %v1555 = vshrl.u32 %v1550, 16
        %v1556 = vmul.u32 %v1552, %v1554
        %v1557 = vmul.u32 %v1552, %v1555
        %v1558 = vmul.u32 %v1553, %v1554
        %v1559 = vmul.u32 %v1553, %v1555
        %v1560 = vshll.u32 %v1557, 16
        %v1561 = vshrl.u32 %v1557, 16
        %v1562 = vshll.u32 %v1558, 16
        %v1563 = vshrl.u32 %v1558, 16
        %vm1564 = vc.u32 %v1556, %v1560
        %v1565 = vsel %vm1564, 1, 0
        %v1566 = vadd.s32 %v1556, %v1560
        %v1567 = vadd.s32 %v1559, %v1565
        %vm1568 = vc.u32 %v1566, %v1562
        %v1569 = vsel %vm1568, 1, 0
        %v1570 = vadd.s32 %v1566, %v1562
        %v1571 = vadd.s32 %v1567, %v1569
        %v1572 = vadd.s32 %v1571, %v1561
        %v1573 = vadd.s32 %v1572, %v1563
        %v1574 = vand.u32 %v1551, 65535
        %v1575 = vshrl.u32 %v1551, 16
        %v1576 = vand.u32 %v1546, 65535
        %v1577 = vshrl.u32 %v1546, 16
        %v1578 = vmul.u32 %v1574, %v1576
        %v1579 = vmul.u32 %v1574, %v1577
        %v1580 = vmul.u32 %v1575, %v1576
        %v1581 = vmul.u32 %v1575, %v1577
        %v1582 = vshll.u32 %v1579, 16
        %v1583 = vshrl.u32 %v1579, 16
        %v1584 = vshll.u32 %v1580, 16
        %v1585 = vshrl.u32 %v1580, 16
        %vm1586 = vc.u32 %v1578, %v1582
        %v1587 = vsel %vm1586, 1, 0
        %v1588 = vadd.s32 %v1578, %v1582
        %v1589 = vadd.s32 %v1581, %v1587
        %vm1590 = vc.u32 %v1588, %v1584
        %v1591 = vsel %vm1590, 1, 0
        %v1592 = vadd.s32 %v1588, %v1584
        %v1593 = vadd.s32 %v1589, %v1591
        %v1594 = vadd.s32 %v1593, %v1583
        %v1595 = vadd.s32 %v1594, %v1585
        %v1596 = vmul.u32 %v1551, %v1542
        %v1597 = vadd.s32 %v1573, %v1592
        %vm1598 = vc.u32 %v1573, %v1592
        %v1599 = vadd.s32 %v1595, 1
        %v1600 = vsel %vm1598, %v1599, %v1595
        %v1601 = vadd.s32 %v1596, %v1600
        %v1602 = vadd.s32 %v1601, 536870912
        %v1603 = vshrl.u32 %v1602, 30
        %v1604 = vshll.u32 %v1603, 30
        %v1605 = vsub.s32 %v1601, %v1604
        %vm1606 = vcmp.lt.s32.totalorder %v1605, 0
        %v1607 = vsub.s32 0, %v1605
        %v1608 = vsel %vm1606, %v1607, %v1605
        %v1609 = vclz %v1608
        %v1610 = vsub.s32 %v1609, 2
        %vm1611 = vcmp.gt.s32.totalorder 0, %v1610
        %v1612 = vsel %vm1611, 0, %v1610
        %v1613 = vsub.s32 32, %v1612
        %v1614 = vshll.u32 %v1605, %v1612
        %v1615 = vshrl.u32 %v1597, %v1613
        %v1616 = vor.u32 %v1614, %v1615
        %v1617 = vsub.s32 4294967266, %v1612
        %v1618 = vadd.s32 %v1617, 127
        %v1619 = vshll.u32 %v1618, 23
        %v1620 = vor.u32 4788187, %v1619
        %v1621 = vand.u32 2147483647, %v1620
        %v1623 = vcvt.s32.f32 %v1616
        %v1624 = vmul.f32 %v1623, %v1621
        %v1625 = vxor.u32 %v1624, 2147483648
        %v1626 = vsel %vm1505, %v1625, %v1624
        %v1627 = vsub.s32 4, %v1603
        %v1628 = vsel %vm1505, %v1627, %v1603
        %v1629 = vsel %vm1504, %v1187, %v1626
        %v1630 = vsel %vm1504, 0, %v1628
        %v1631 = vmul.f32 %v1629, %v1629
        %v1632 = vmul.f32 %v1631, -0.001358992
        %v1633 = vadd.f32 %v1632, 0.041655596
        %v1634 = vmul.f32 %v1631, %v1633
        %v1635 = vadd.f32 %v1634, -0.4999988
        %v1636 = vmul.f32 %v1631, %v1635
        %v1637 = vadd.f32 1.0, %v1636
        %v1638 = vmul.f32 %v1629, %v1629
        %v1639 = vmul.f32 %v1638, -0.00019511016
        %v1640 = vadd.f32 %v1639, 0.008332121
        %v1641 = vmul.f32 %v1638, %v1640
        %v1642 = vadd.f32 %v1641, -0.16666654
        %v1643 = vmul.f32 %v1638, %v1642
        %v1644 = vadd.f32 %v1643, 1.0
        %v1645 = vmul.f32 %v1644, %v1629
        %vm1646 = vweird.f32 %v1187
        %v1647 = vadd.s32 %v1630, 3
        %v1648 = vand.u32 %v1647, 3
        %vm1649 = vcmp.lt.s32.totalorder %v1648, 2
        %vm1650 = vcmp.eq.s32.totalorder %v1648, 0
        %v1651 = vxor.u32 %v1645, 2147483648
        %v1652 = vsel %vm1650, %v1637, %v1651
        %vm1653 = vcmp.eq.s32.totalorder %v1648, 2
        %v1654 = vxor.u32 %v1637, 2147483648
        %v1655 = vsel %vm1653, %v1654, %v1645
        %v1656 = vsel %vm1649, %v1652, %v1655
        %v1657 = vsel %vm1646, nan, %v1656
        %v1658 = vand.u32 2147483647, %v1188
        %vm1659 = vcmp.le.f32.partialorder %v1658, 0.7853982
        %vm1660 = vcmp.lt.s32.totalorder %v1188, 0
        %v1661 = vand.u32 %v1188, 2139095040
        %v1662 = vshrl.u32 %v1661, 23
        %v1663 = vsub.s32 %v1662, 127
        %v1664 = vand.u32 2147483647, %v1188
        %v1665 = vand.u32 %v1664, 8388607
        %v1666 = vor.u32 %v1665, 8388608
        %v1667 = vsub.s32 0, %v1666
        %v1668 = vadd.s32 %v1663, 1
        %vm1669 = vcmp.gt.s32.totalorder %v1668, 0
        %v1670 = vsel %vm1669, %v1668, 0
        %v1671 = vshrl.u32 %v1670, 5
        %v1672 = vand.u32 %v1670, 31
        %v1673 = vsub.s32 32, %v1672
        %v1674 = vshrl.u32 683565275, %v1673
        %v1675 = vshll.u32 683565275, %v1672
        %v1676 = vshrl.u32 2475754826, %v1673
        %v1677 = vor.u32 %v1675, %v1676
        %v1678 = vshll.u32 2475754826, %v1672
        %v1679 = vshrl.u32 2131351028, %v1673
        %v1680 = vor.u32 %v1678, %v1679
        %v1681 = vshll.u32 2131351028, %v1672
        %v1682 = vshrl.u32 2102212464, %v1673
        %v1683 = vor.u32 %v1681, %v1682
        %v1684 = vshll.u32 2102212464, %v1672
        %v1685 = vshrl.u32 920167782, %v1673
        %v1686 = vor.u32 %v1684, %v1685
        %v1687 = vshll.u32 920167782, %v1672
        %v1688 = vshrl.u32 1326507024, %v1673
        %v1689 = vor.u32 %v1687, %v1688
        %vm1690 = vcmp.lt.s32.totalorder %v1671, 1
        %vm1691 = vcmp.lt.s32.totalorder %v1671, 2
        %vm1692 = vcmp.lt.s32.totalorder %v1671, 3
        %vm1693 = vcmp.lt.s32.totalorder %v1671, 4
        %v1694 = vsel %vm1690, %v1674, %v1677
        %v1695 = vsel %vm1693, %v1683, 2102212464
        %v1696 = vsel %vm1692, %v1680, %v1695
        %v1697 = vsel %vm1691, %v1694, %v1696
        %v1698 = vsel %vm1690, %v1677, %v1680
        %v1699 = vsel %vm1693, %v1686, 920167782
        %v1700 = vsel %vm1692, %v1683, %v1699
        %v1701 = vsel %vm1691, %v1698, %v1700
        %v1702 = vsel %vm1690, %v1680, %v1683
        %v1703 = vsel %vm1693, %v1689, 1326507024
        %v1704 = vsel %vm1692, %v1686, %v1703
        %v1705 = vsel %vm1691, %v1702, %v1704
        %v1706 = vshll.u32 %v1666, 8
        %v1707 = vand.u32 %v1706, 65535
        %v1708 = vshrl.u32 %v1706, 16
        %v1709 = vand.u32 %v1705, 65535
        %v1710 = vshrl.u32 %v1705, 16
        %v1711 = vmul.u32 %v1707, %v1709
        %v1712 = vmul.u32 %v1707, %v1710
        %v1713 = vmul.u32 %v1708, %v1709
        %v1714 = vmul.u32 %v1708, %v1710
        %v1715 = vshll.u32 %v1712, 16
        %v1716 = vshrl.u32 %v1712, 16
        %v1717 = vshll.u32 %v1713, 16
        %v1718 = vshrl.u32 %v1713, 16
        %vm1719 = vc.u32 %v1711, %v1715
        %v1720 = vsel %vm1719, 1, 0
        %v1721 = vadd.s32 %v1711, %v1715
        %v1722 = vadd.s32 %v1714, %v1720
        %vm1723 = vc.u32 %v1721, %v1717
        %v1724 = vsel %vm1723, 1, 0
        %v1725 = vadd.s32 %v1721, %v1717
        %v1726 = vadd.s32 %v1722, %v1724
        %v1727 = vadd.s32 %v1726, %v1716
        %v1728 = vadd.s32 %v1727, %v1718
        %v1729 = vand.u32 %v1706, 65535
        %v1730 = vshrl.u32 %v1706, 16
        %v1731 = vand.u32 %v1701, 65535
        %v1732 = vshrl.u32 %v1701, 16
        %v1733 = vmul.u32 %v1729, %v1731
        %v1734 = vmul.u32 %v1729, %v1732
        %v1735 = vmul.u32 %v1730, %v1731
        %v1736 = vmul.u32 %v1730, %v1732
        %v1737 = vshll.u32 %v1734, 16
        %v1738 = vshrl.u32 %v1734, 16
        %v1739 = vshll.u32 %v1735, 16
        %v1740 = vshrl.u32 %v1735, 16
        %vm1741 = vc.u32 %v1733, %v1737
        %v1742 = vsel %vm1741, 1, 0
        %v1743 = vadd.s32 %v1733, %v1737
        %v1744 = vadd.s32 %v1736, %v1742
        %vm1745 = vc.u32 %v1743, %v1739
        %v1746 = vsel %vm1745, 1, 0
        %v1747 = vadd.s32 %v1743, %v1739
        %v1748 = vadd.s32 %v1744, %v1746
        %v1749 = vadd.s32 %v1748, %v1738
        %v1750 = vadd.s32 %v1749, %v1740
        %v1751 = vmul.u32 %v1706, %v1697
        %v1752 = vadd.s32 %v1728, %v1747
        %vm1753 = vc.u32 %v1728, %v1747
        %v1754 = vadd.s32 %v1750, 1
        %v1755 = vsel %vm1753, %v1754, %v1750
        %v1756 = vadd.s32 %v1751, %v1755
        %v1757 = vadd.s32 %v1756, 536870912
        %v1758 = vshrl.u32 %v1757, 30
        %v1759 = vshll.u32 %v1758, 30
        %v1760 = vsub.s32 %v1756, %v1759
        %vm1761 = vcmp.lt.s32.totalorder %v1760, 0
        %v1762 = vsub.s32 0, %v1760
        %v1763 = vsel %vm1761, %v1762, %v1760
        %v1764 = vclz %v1763
        %v1765 = vsub.s32 %v1764, 2
        %vm1766 = vcmp.gt.s32.totalorder 0, %v1765
        %v1767 = vsel %vm1766, 0, %v1765
        %v1768 = vsub.s32 32, %v1767
        %v1769 = vshll.u32 %v1760, %v1767
        %v1770 = vshrl.u32 %v1752, %v1768
        %v1771 = vor.u32 %v1769, %v1770
        %v1772 = vsub.s32 4294967266, %v1767
        %v1773 = vadd.s32 %v1772, 127
        %v1774 = vshll.u32 %v1773, 23
        %v1775 = vor.u32 4788187, %v1774
        %v1776 = vand.u32 2147483647, %v1775
        %v1778 = vcvt.s32.f32 %v1771
        %v1779 = vmul.f32 %v1778, %v1776
        %v1780 = vxor.u32 %v1779, 2147483648
        %v1781 = vsel %vm1660, %v1780, %v1779
        %v1782 = vsub.s32 4, %v1758
        %v1783 = vsel %vm1660, %v1782, %v1758
        %v1784 = vsel %vm1659, %v1188, %v1781
        %v1785 = vsel %vm1659, 0, %v1783
        %v1786 = vmul.f32 %v1784, %v1784
        %v1787 = vmul.f32 %v1786, -0.001358992
        %v1788 = vadd.f32 %v1787, 0.041655596
        %v1789 = vmul.f32 %v1786, %v1788
        %v1790 = vadd.f32 %v1789, -0.4999988
        %v1791 = vmul.f32 %v1786, %v1790
        %v1792 = vadd.f32 1.0, %v1791
        %v1793 = vmul.f32 %v1784, %v1784
        %v1794 = vmul.f32 %v1793, -0.00019511016
        %v1795 = vadd.f32 %v1794, 0.008332121
        %v1796 = vmul.f32 %v1793, %v1795
        %v1797 = vadd.f32 %v1796, -0.16666654
        %v1798 = vmul.f32 %v1793, %v1797
        %v1799 = vadd.f32 %v1798, 1.0
        %v1800 = vmul.f32 %v1799, %v1784
        %vm1801 = vweird.f32 %v1188
        %v1802 = vadd.s32 %v1785, 3
        %v1803 = vand.u32 %v1802, 3
        %vm1804 = vcmp.lt.s32.totalorder %v1803, 2
        %vm1805 = vcmp.eq.s32.totalorder %v1803, 0
        %v1806 = vxor.u32 %v1800, 2147483648
        %v1807 = vsel %vm1805, %v1792, %v1806
        %vm1808 = vcmp.eq.s32.totalorder %v1803, 2
        %v1809 = vxor.u32 %v1792, 2147483648
        %v1810 = vsel %vm1808, %v1809, %v1800
        %v1811 = vsel %vm1804, %v1807, %v1810
        %v1812 = vsel %vm1801, nan, %v1811
        %v1813 = vand.u32 2147483647, %v1189
        %vm1814 = vcmp.le.f32.partialorder %v1813, 0.7853982
        %vm1815 = vcmp.lt.s32.totalorder %v1189, 0
        %v1816 = vand.u32 %v1189, 2139095040
        %v1817 = vshrl.u32 %v1816, 23
        %v1818 = vsub.s32 %v1817, 127
        %v1819 = vand.u32 2147483647, %v1189
        %v1820 = vand.u32 %v1819, 8388607
        %v1821 = vor.u32 %v1820, 8388608
        %v1822 = vsub.s32 0, %v1821
        %v1823 = vadd.s32 %v1818, 1
        %vm1824 = vcmp.gt.s32.totalorder %v1823, 0
        %v1825 = vsel %vm1824, %v1823, 0
        %v1826 = vshrl.u32 %v1825, 5
        %v1827 = vand.u32 %v1825, 31
        %v1828 = vsub.s32 32, %v1827
        %v1829 = vshrl.u32 683565275, %v1828
        %v1830 = vshll.u32 683565275, %v1827
        %v1831 = vshrl.u32 2475754826, %v1828
        %v1832 = vor.u32 %v1830, %v1831
        %v1833 = vshll.u32 2475754826, %v1827
        %v1834 = vshrl.u32 2131351028, %v1828
        %v1835 = vor.u32 %v1833, %v1834
        %v1836 = vshll.u32 2131351028, %v1827
        %v1837 = vshrl.u32 2102212464, %v1828
        %v1838 = vor.u32 %v1836, %v1837
        %v1839 = vshll.u32 2102212464, %v1827
        %v1840 = vshrl.u32 920167782, %v1828
        %v1841 = vor.u32 %v1839, %v1840
        %v1842 = vshll.u32 920167782, %v1827
        %v1843 = vshrl.u32 1326507024, %v1828
        %v1844 = vor.u32 %v1842, %v1843
        %vm1845 = vcmp.lt.s32.totalorder %v1826, 1
        %vm1846 = vcmp.lt.s32.totalorder %v1826, 2
        %vm1847 = vcmp.lt.s32.totalorder %v1826, 3
        %vm1848 = vcmp.lt.s32.totalorder %v1826, 4
        %v1849 = vsel %vm1845, %v1829, %v1832
        %v1850 = vsel %vm1848, %v1838, 2102212464
        %v1851 = vsel %vm1847, %v1835, %v1850
        %v1852 = vsel %vm1846, %v1849, %v1851
        %v1853 = vsel %vm1845, %v1832, %v1835
        %v1854 = vsel %vm1848, %v1841, 920167782
        %v1855 = vsel %vm1847, %v1838, %v1854
        %v1856 = vsel %vm1846, %v1853, %v1855
        %v1857 = vsel %vm1845, %v1835, %v1838
        %v1858 = vsel %vm1848, %v1844, 1326507024
        %v1859 = vsel %vm1847, %v1841, %v1858
        %v1860 = vsel %vm1846, %v1857, %v1859
        %v1861 = vshll.u32 %v1821, 8
        %v1862 = vand.u32 %v1861, 65535
        %v1863 = vshrl.u32 %v1861, 16
        %v1864 = vand.u32 %v1860, 65535
        %v1865 = vshrl.u32 %v1860, 16
        %v1866 = vmul.u32 %v1862, %v1864
        %v1867 = vmul.u32 %v1862, %v1865
        %v1868 = vmul.u32 %v1863, %v1864
        %v1869 = vmul.u32 %v1863, %v1865
        %v1870 = vshll.u32 %v1867, 16
        %v1871 = vshrl.u32 %v1867, 16
        %v1872 = vshll.u32 %v1868, 16
        %v1873 = vshrl.u32 %v1868, 16
        %vm1874 = vc.u32 %v1866, %v1870
        %v1875 = vsel %vm1874, 1, 0
        %v1876 = vadd.s32 %v1866, %v1870
        %v1877 = vadd.s32 %v1869, %v1875
        %vm1878 = vc.u32 %v1876, %v1872
        %v1879 = vsel %vm1878, 1, 0
        %v1880 = vadd.s32 %v1876, %v1872
        %v1881 = vadd.s32 %v1877, %v1879
        %v1882 = vadd.s32 %v1881, %v1871
        %v1883 = vadd.s32 %v1882, %v1873
        %v1884 = vand.u32 %v1861, 65535
        %v1885 = vshrl.u32 %v1861, 16
        %v1886 = vand.u32 %v1856, 65535
        %v1887 = vshrl.u32 %v1856, 16
        %v1888 = vmul.u32 %v1884, %v1886
        %v1889 = vmul.u32 %v1884, %v1887
        %v1890 = vmul.u32 %v1885, %v1886
        %v1891 = vmul.u32 %v1885, %v1887
        %v1892 = vshll.u32 %v1889, 16
        %v1893 = vshrl.u32 %v1889, 16
        %v1894 = vshll.u32 %v1890, 16
        %v1895 = vshrl.u32 %v1890, 16
        %vm1896 = vc.u32 %v1888, %v1892
        %v1897 = vsel %vm1896, 1, 0
        %v1898 = vadd.s32 %v1888, %v1892
        %v1899 = vadd.s32 %v1891, %v1897
        %vm1900 = vc.u32 %v1898, %v1894
        %v1901 = vsel %vm1900, 1, 0
        %v1902 = vadd.s32 %v1898, %v1894
        %v1903 = vadd.s32 %v1899, %v1901
        %v1904 = vadd.s32 %v1903, %v1893
        %v1905 = vadd.s32 %v1904, %v1895
        %v1906 = vmul.u32 %v1861, %v1852
        %v1907 = vadd.s32 %v1883, %v1902
        %vm1908 = vc.u32 %v1883, %v1902
        %v1909 = vadd.s32 %v1905, 1
        %v1910 = vsel %vm1908, %v1909, %v1905
        %v1911 = vadd.s32 %v1906, %v1910
        %v1912 = vadd.s32 %v1911, 536870912
        %v1913 = vshrl.u32 %v1912, 30
        %v1914 = vshll.u32 %v1913, 30
        %v1915 = vsub.s32 %v1911, %v1914
        %vm1916 = vcmp.lt.s32.totalorder %v1915, 0
        %v1917 = vsub.s32 0, %v1915
        %v1918 = vsel %vm1916, %v1917, %v1915
        %v1919 = vclz %v1918
        %v1920 = vsub.s32 %v1919, 2
        %vm1921 = vcmp.gt.s32.totalorder 0, %v1920
        %v1922 = vsel %vm1921, 0, %v1920
        %v1923 = vsub.s32 32, %v1922
        %v1924 = vshll.u32 %v1915, %v1922
        %v1925 = vshrl.u32 %v1907, %v1923
        %v1926 = vor.u32 %v1924, %v1925
        %v1927 = vsub.s32 4294967266, %v1922
        %v1928 = vadd.s32 %v1927, 127
        %v1929 = vshll.u32 %v1928, 23
        %v1930 = vor.u32 4788187, %v1929
        %v1931 = vand.u32 2147483647, %v1930
        %v1933 = vcvt.s32.f32 %v1926
        %v1934 = vmul.f32 %v1933, %v1931
        %v1935 = vxor.u32 %v1934, 2147483648
        %v1936 = vsel %vm1815, %v1935, %v1934
        %v1937 = vsub.s32 4, %v1913
        %v1938 = vsel %vm1815, %v1937, %v1913
        %v1939 = vsel %vm1814, %v1189, %v1936
        %v1940 = vsel %vm1814, 0, %v1938
        %v1941 = vmul.f32 %v1939, %v1939
        %v1942 = vmul.f32 %v1941, -0.001358992
        %v1943 = vadd.f32 %v1942, 0.041655596
        %v1944 = vmul.f32 %v1941, %v1943
        %v1945 = vadd.f32 %v1944, -0.4999988
        %v1946 = vmul.f32 %v1941, %v1945
        %v1947 = vadd.f32 1.0, %v1946
        %v1948 = vmul.f32 %v1939, %v1939
        %v1949 = vmul.f32 %v1948, -0.00019511016
        %v1950 = vadd.f32 %v1949, 0.008332121
        %v1951 = vmul.f32 %v1948, %v1950
        %v1952 = vadd.f32 %v1951, -0.16666654
        %v1953 = vmul.f32 %v1948, %v1952
        %v1954 = vadd.f32 %v1953, 1.0
        %v1955 = vmul.f32 %v1954, %v1939
        %vm1956 = vweird.f32 %v1189
        %v1957 = vadd.s32 %v1940, 3
        %v1958 = vand.u32 %v1957, 3
        %vm1959 = vcmp.lt.s32.totalorder %v1958, 2
        %vm1960 = vcmp.eq.s32.totalorder %v1958, 0
        %v1961 = vxor.u32 %v1955, 2147483648
        %v1962 = vsel %vm1960, %v1947, %v1961
        %vm1963 = vcmp.eq.s32.totalorder %v1958, 2
        %v1964 = vxor.u32 %v1947, 2147483648
        %v1965 = vsel %vm1963, %v1964, %v1955
        %v1966 = vsel %vm1959, %v1962, %v1965
        %v1967 = vsel %vm1956, nan, %v1966
        %v1968 = vand.u32 2147483647, %v1190
        %vm1969 = vcmp.le.f32.partialorder %v1968, 0.7853982
        %vm1970 = vcmp.lt.s32.totalorder %v1190, 0
        %v1971 = vand.u32 %v1190, 2139095040
        %v1972 = vshrl.u32 %v1971, 23
        %v1973 = vsub.s32 %v1972, 127
        %v1974 = vand.u32 2147483647, %v1190
        %v1975 = vand.u32 %v1974, 8388607
        %v1976 = vor.u32 %v1975, 8388608
        %v1977 = vsub.s32 0, %v1976
        %v1978 = vadd.s32 %v1973, 1
        %vm1979 = vcmp.gt.s32.totalorder %v1978, 0
        %v1980 = vsel %vm1979, %v1978, 0
        %v1981 = vshrl.u32 %v1980, 5
        %v1982 = vand.u32 %v1980, 31
        %v1983 = vsub.s32 32, %v1982
        %v1984 = vshrl.u32 683565275, %v1983
        %v1985 = vshll.u32 683565275, %v1982
        %v1986 = vshrl.u32 2475754826, %v1983
        %v1987 = vor.u32 %v1985, %v1986
        %v1988 = vshll.u32 2475754826, %v1982
        %v1989 = vshrl.u32 2131351028, %v1983
        %v1990 = vor.u32 %v1988, %v1989
        %v1991 = vshll.u32 2131351028, %v1982
        %v1992 = vshrl.u32 2102212464, %v1983
        %v1993 = vor.u32 %v1991, %v1992
        %v1994 = vshll.u32 2102212464, %v1982
        %v1995 = vshrl.u32 920167782, %v1983
        %v1996 = vor.u32 %v1994, %v1995
        %v1997 = vshll.u32 920167782, %v1982
        %v1998 = vshrl.u32 1326507024, %v1983
        %v1999 = vor.u32 %v1997, %v1998
        %vm2000 = vcmp.lt.s32.totalorder %v1981, 1
        %vm2001 = vcmp.lt.s32.totalorder %v1981, 2
        %vm2002 = vcmp.lt.s32.totalorder %v1981, 3
        %vm2003 = vcmp.lt.s32.totalorder %v1981, 4
        %v2004 = vsel %vm2000, %v1984, %v1987
        %v2005 = vsel %vm2003, %v1993, 2102212464
        %v2006 = vsel %vm2002, %v1990, %v2005
        %v2007 = vsel %vm2001, %v2004, %v2006
        %v2008 = vsel %vm2000, %v1987, %v1990
        %v2009 = vsel %vm2003, %v1996, 920167782
        %v2010 = vsel %vm2002, %v1993, %v2009
        %v2011 = vsel %vm2001, %v2008, %v2010
        %v2012 = vsel %vm2000, %v1990, %v1993
        %v2013 = vsel %vm2003, %v1999, 1326507024
        %v2014 = vsel %vm2002, %v1996, %v2013
        %v2015 = vsel %vm2001, %v2012, %v2014
        %v2016 = vshll.u32 %v1976, 8
        %v2017 = vand.u32 %v2016, 65535
        %v2018 = vshrl.u32 %v2016, 16
        %v2019 = vand.u32 %v2015, 65535
        %v2020 = vshrl.u32 %v2015, 16
        %v2021 = vmul.u32 %v2017, %v2019
        %v2022 = vmul.u32 %v2017, %v2020
        %v2023 = vmul.u32 %v2018, %v2019
        %v2024 = vmul.u32 %v2018, %v2020
        %v2025 = vshll.u32 %v2022, 16
        %v2026 = vshrl.u32 %v2022, 16
        %v2027 = vshll.u32 %v2023, 16
        %v2028 = vshrl.u32 %v2023, 16
        %vm2029 = vc.u32 %v2021, %v2025
        %v2030 = vsel %vm2029, 1, 0
        %v2031 = vadd.s32 %v2021, %v2025
        %v2032 = vadd.s32 %v2024, %v2030
        %vm2033 = vc.u32 %v2031, %v2027
        %v2034 = vsel %vm2033, 1, 0
        %v2035 = vadd.s32 %v2031, %v2027
        %v2036 = vadd.s32 %v2032, %v2034
        %v2037 = vadd.s32 %v2036, %v2026
        %v2038 = vadd.s32 %v2037, %v2028
        %v2039 = vand.u32 %v2016, 65535
        %v2040 = vshrl.u32 %v2016, 16
        %v2041 = vand.u32 %v2011, 65535
        %v2042 = vshrl.u32 %v2011, 16
        %v2043 = vmul.u32 %v2039, %v2041
        %v2044 = vmul.u32 %v2039, %v2042
        %v2045 = vmul.u32 %v2040, %v2041
        %v2046 = vmul.u32 %v2040, %v2042
        %v2047 = vshll.u32 %v2044, 16
        %v2048 = vshrl.u32 %v2044, 16
        %v2049 = vshll.u32 %v2045, 16
        %v2050 = vshrl.u32 %v2045, 16
        %vm2051 = vc.u32 %v2043, %v2047
        %v2052 = vsel %vm2051, 1, 0
        %v2053 = vadd.s32 %v2043, %v2047
        %v2054 = vadd.s32 %v2046, %v2052
        %vm2055 = vc.u32 %v2053, %v2049
        %v2056 = vsel %vm2055, 1, 0
        %v2057 = vadd.s32 %v2053, %v2049
        %v2058 = vadd.s32 %v2054, %v2056
        %v2059 = vadd.s32 %v2058, %v2048
        %v2060 = vadd.s32 %v2059, %v2050
        %v2061 = vmul.u32 %v2016, %v2007
        %v2062 = vadd.s32 %v2038, %v2057
        %vm2063 = vc.u32 %v2038, %v2057
        %v2064 = vadd.s32 %v2060, 1
        %v2065 = vsel %vm2063, %v2064, %v2060
        %v2066 = vadd.s32 %v2061, %v2065
        %v2067 = vadd.s32 %v2066, 536870912
        %v2068 = vshrl.u32 %v2067, 30
        %v2069 = vshll.u32 %v2068, 30
        %v2070 = vsub.s32 %v2066, %v2069
        %vm2071 = vcmp.lt.s32.totalorder %v2070, 0
        %v2072 = vsub.s32 0, %v2070
        %v2073 = vsel %vm2071, %v2072, %v2070
        %v2074 = vclz %v2073
        %v2075 = vsub.s32 %v2074, 2
        %vm2076 = vcmp.gt.s32.totalorder 0, %v2075
        %v2077 = vsel %vm2076, 0, %v2075
        %v2078 = vsub.s32 32, %v2077
        %v2079 = vshll.u32 %v2070, %v2077
        %v2080 = vshrl.u32 %v2062, %v2078
        %v2081 = vor.u32 %v2079, %v2080
        %v2082 = vsub.s32 4294967266, %v2077
        %v2083 = vadd.s32 %v2082, 127
        %v2084 = vshll.u32 %v2083, 23
        %v2085 = vor.u32 4788187, %v2084
        %v2086 = vand.u32 2147483647, %v2085
        %v2088 = vcvt.s32.f32 %v2081
        %v2089 = vmul.f32 %v2088, %v2086
        %v2090 = vxor.u32 %v2089, 2147483648
        %v2091 = vsel %vm1970, %v2090, %v2089
        %v2092 = vsub.s32 4, %v2068
        %v2093 = vsel %vm1970, %v2092, %v2068
        %v2094 = vsel %vm1969, %v1190, %v2091
        %v2095 = vsel %vm1969, 0, %v2093
        %v2096 = vmul.f32 %v2094, %v2094
        %v2097 = vmul.f32 %v2096, -0.001358992
        %v2098 = vadd.f32 %v2097, 0.041655596
        %v2099 = vmul.f32 %v2096, %v2098
        %v2100 = vadd.f32 %v2099, -0.4999988
        %v2101 = vmul.f32 %v2096, %v2100
        %v2102 = vadd.f32 1.0, %v2101
        %v2103 = vmul.f32 %v2094, %v2094
        %v2104 = vmul.f32 %v2103, -0.00019511016
        %v2105 = vadd.f32 %v2104, 0.008332121
        %v2106 = vmul.f32 %v2103, %v2105
        %v2107 = vadd.f32 %v2106, -0.16666654
        %v2108 = vmul.f32 %v2103, %v2107
        %v2109 = vadd.f32 %v2108, 1.0
        %v2110 = vmul.f32 %v2109, %v2094
        %vm2111 = vweird.f32 %v1190
        %v2112 = vadd.s32 %v2095, 3
        %v2113 = vand.u32 %v2112, 3
        %vm2114 = vcmp.lt.s32.totalorder %v2113, 2
        %vm2115 = vcmp.eq.s32.totalorder %v2113, 0
        %v2116 = vxor.u32 %v2110, 2147483648
        %v2117 = vsel %vm2115, %v2102, %v2116
        %vm2118 = vcmp.eq.s32.totalorder %v2113, 2
        %v2119 = vxor.u32 %v2102, 2147483648
        %v2120 = vsel %vm2118, %v2119, %v2110
        %v2121 = vsel %vm2114, %v2117, %v2120
        %v2122 = vsel %vm2111, nan, %v2121
        %v2123 = vand.u32 2147483647, %v1191
        %vm2124 = vcmp.le.f32.partialorder %v2123, 0.7853982
        %vm2125 = vcmp.lt.s32.totalorder %v1191, 0
        %v2126 = vand.u32 %v1191, 2139095040
        %v2127 = vshrl.u32 %v2126, 23
        %v2128 = vsub.s32 %v2127, 127
        %v2129 = vand.u32 2147483647, %v1191
        %v2130 = vand.u32 %v2129, 8388607
        %v2131 = vor.u32 %v2130, 8388608
        %v2132 = vsub.s32 0, %v2131
        %v2133 = vadd.s32 %v2128, 1
        %vm2134 = vcmp.gt.s32.totalorder %v2133, 0
        %v2135 = vsel %vm2134, %v2133, 0
        %v2136 = vshrl.u32 %v2135, 5
        %v2137 = vand.u32 %v2135, 31
        %v2138 = vsub.s32 32, %v2137
        %v2139 = vshrl.u32 683565275, %v2138
        %v2140 = vshll.u32 683565275, %v2137
        %v2141 = vshrl.u32 2475754826, %v2138
        %v2142 = vor.u32 %v2140, %v2141
        %v2143 = vshll.u32 2475754826, %v2137
        %v2144 = vshrl.u32 2131351028, %v2138
        %v2145 = vor.u32 %v2143, %v2144
        %v2146 = vshll.u32 2131351028, %v2137
        %v2147 = vshrl.u32 2102212464, %v2138
        %v2148 = vor.u32 %v2146, %v2147
        %v2149 = vshll.u32 2102212464, %v2137
        %v2150 = vshrl.u32 920167782, %v2138
        %v2151 = vor.u32 %v2149, %v2150
        %v2152 = vshll.u32 920167782, %v2137
        %v2153 = vshrl.u32 1326507024, %v2138
        %v2154 = vor.u32 %v2152, %v2153
        %vm2155 = vcmp.lt.s32.totalorder %v2136, 1
        %vm2156 = vcmp.lt.s32.totalorder %v2136, 2
        %vm2157 = vcmp.lt.s32.totalorder %v2136, 3
        %vm2158 = vcmp.lt.s32.totalorder %v2136, 4
        %v2159 = vsel %vm2155, %v2139, %v2142
        %v2160 = vsel %vm2158, %v2148, 2102212464
        %v2161 = vsel %vm2157, %v2145, %v2160
        %v2162 = vsel %vm2156, %v2159, %v2161
        %v2163 = vsel %vm2155, %v2142, %v2145
        %v2164 = vsel %vm2158, %v2151, 920167782
        %v2165 = vsel %vm2157, %v2148, %v2164
        %v2166 = vsel %vm2156, %v2163, %v2165
        %v2167 = vsel %vm2155, %v2145, %v2148
        %v2168 = vsel %vm2158, %v2154, 1326507024
        %v2169 = vsel %vm2157, %v2151, %v2168
        %v2170 = vsel %vm2156, %v2167, %v2169
        %v2171 = vshll.u32 %v2131, 8
        %v2172 = vand.u32 %v2171, 65535
        %v2173 = vshrl.u32 %v2171, 16
        %v2174 = vand.u32 %v2170, 65535
        %v2175 = vshrl.u32 %v2170, 16
        %v2176 = vmul.u32 %v2172, %v2174
        %v2177 = vmul.u32 %v2172, %v2175
        %v2178 = vmul.u32 %v2173, %v2174
        %v2179 = vmul.u32 %v2173, %v2175
        %v2180 = vshll.u32 %v2177, 16
        %v2181 = vshrl.u32 %v2177, 16
        %v2182 = vshll.u32 %v2178, 16
        %v2183 = vshrl.u32 %v2178, 16
        %vm2184 = vc.u32 %v2176, %v2180
        %v2185 = vsel %vm2184, 1, 0
        %v2186 = vadd.s32 %v2176, %v2180
        %v2187 = vadd.s32 %v2179, %v2185
        %vm2188 = vc.u32 %v2186, %v2182
        %v2189 = vsel %vm2188, 1, 0
        %v2190 = vadd.s32 %v2186, %v2182
        %v2191 = vadd.s32 %v2187, %v2189
        %v2192 = vadd.s32 %v2191, %v2181
        %v2193 = vadd.s32 %v2192, %v2183
        %v2194 = vand.u32 %v2171, 65535
        %v2195 = vshrl.u32 %v2171, 16
        %v2196 = vand.u32 %v2166, 65535
        %v2197 = vshrl.u32 %v2166, 16
        %v2198 = vmul.u32 %v2194, %v2196
        %v2199 = vmul.u32 %v2194, %v2197
        %v2200 = vmul.u32 %v2195, %v2196
        %v2201 = vmul.u32 %v2195, %v2197
        %v2202 = vshll.u32 %v2199, 16
        %v2203 = vshrl.u32 %v2199, 16
        %v2204 = vshll.u32 %v2200, 16
        %v2205 = vshrl.u32 %v2200, 16
        %vm2206 = vc.u32 %v2198, %v2202
        %v2207 = vsel %vm2206, 1, 0
        %v2208 = vadd.s32 %v2198, %v2202
        %v2209 = vadd.s32 %v2201, %v2207
        %vm2210 = vc.u32 %v2208, %v2204
        %v2211 = vsel %vm2210, 1, 0
        %v2212 = vadd.s32 %v2208, %v2204
        %v2213 = vadd.s32 %v2209, %v2211
        %v2214 = vadd.s32 %v2213, %v2203
        %v2215 = vadd.s32 %v2214, %v2205
        %v2216 = vmul.u32 %v2171, %v2162
        %v2217 = vadd.s32 %v2193, %v2212
        %vm2218 = vc.u32 %v2193, %v2212
        %v2219 = vadd.s32 %v2215, 1
        %v2220 = vsel %vm2218, %v2219, %v2215
        %v2221 = vadd.s32 %v2216, %v2220
        %v2222 = vadd.s32 %v2221, 536870912
        %v2223 = vshrl.u32 %v2222, 30
        %v2224 = vshll.u32 %v2223, 30
        %v2225 = vsub.s32 %v2221, %v2224
        %vm2226 = vcmp.lt.s32.totalorder %v2225, 0
        %v2227 = vsub.s32 0, %v2225
        %v2228 = vsel %vm2226, %v2227, %v2225
        %v2229 = vclz %v2228
        %v2230 = vsub.s32 %v2229, 2
        %vm2231 = vcmp.gt.s32.totalorder 0, %v2230
        %v2232 = vsel %vm2231, 0, %v2230
        %v2233 = vsub.s32 32, %v2232
        %v2234 = vshll.u32 %v2225, %v2232
        %v2235 = vshrl.u32 %v2217, %v2233
        %v2236 = vor.u32 %v2234, %v2235
        %v2237 = vsub.s32 4294967266, %v2232
        %v2238 = vadd.s32 %v2237, 127
        %v2239 = vshll.u32 %v2238, 23
        %v2240 = vor.u32 4788187, %v2239
        %v2241 = vand.u32 2147483647, %v2240
        %v2243 = vcvt.s32.f32 %v2236
        %v2244 = vmul.f32 %v2243, %v2241
        %v2245 = vxor.u32 %v2244, 2147483648
        %v2246 = vsel %vm2125, %v2245, %v2244
        %v2247 = vsub.s32 4, %v2223
        %v2248 = vsel %vm2125, %v2247, %v2223
        %v2249 = vsel %vm2124, %v1191, %v2246
        %v2250 = vsel %vm2124, 0, %v2248
        %v2251 = vmul.f32 %v2249, %v2249
        %v2252 = vmul.f32 %v2251, -0.001358992
        %v2253 = vadd.f32 %v2252, 0.041655596
        %v2254 = vmul.f32 %v2251, %v2253
        %v2255 = vadd.f32 %v2254, -0.4999988
        %v2256 = vmul.f32 %v2251, %v2255
        %v2257 = vadd.f32 1.0, %v2256
        %v2258 = vmul.f32 %v2249, %v2249
        %v2259 = vmul.f32 %v2258, -0.00019511016
        %v2260 = vadd.f32 %v2259, 0.008332121
        %v2261 = vmul.f32 %v2258, %v2260
        %v2262 = vadd.f32 %v2261, -0.16666654
        %v2263 = vmul.f32 %v2258, %v2262
        %v2264 = vadd.f32 %v2263, 1.0
        %v2265 = vmul.f32 %v2264, %v2249
        %vm2266 = vweird.f32 %v1191
        %v2267 = vadd.s32 %v2250, 3
        %v2268 = vand.u32 %v2267, 3
        %vm2269 = vcmp.lt.s32.totalorder %v2268, 2
        %vm2270 = vcmp.eq.s32.totalorder %v2268, 0
        %v2271 = vxor.u32 %v2265, 2147483648
        %v2272 = vsel %vm2270, %v2257, %v2271
        %vm2273 = vcmp.eq.s32.totalorder %v2268, 2
        %v2274 = vxor.u32 %v2257, 2147483648
        %v2275 = vsel %vm2273, %v2274, %v2265
        %v2276 = vsel %vm2269, %v2272, %v2275
        %v2277 = vsel %vm2266, nan, %v2276
        %v2278 = vand.u32 2147483647, %v1192
        %vm2279 = vcmp.le.f32.partialorder %v2278, 0.7853982
        %vm2280 = vcmp.lt.s32.totalorder %v1192, 0
        %v2281 = vand.u32 %v1192, 2139095040
        %v2282 = vshrl.u32 %v2281, 23
        %v2283 = vsub.s32 %v2282, 127
        %v2284 = vand.u32 2147483647, %v1192
        %v2285 = vand.u32 %v2284, 8388607
        %v2286 = vor.u32 %v2285, 8388608
        %v2287 = vsub.s32 0, %v2286
        %v2288 = vadd.s32 %v2283, 1
        %vm2289 = vcmp.gt.s32.totalorder %v2288, 0
        %v2290 = vsel %vm2289, %v2288, 0
        %v2291 = vshrl.u32 %v2290, 5
        %v2292 = vand.u32 %v2290, 31
        %v2293 = vsub.s32 32, %v2292
        %v2294 = vshrl.u32 683565275, %v2293
        %v2295 = vshll.u32 683565275, %v2292
        %v2296 = vshrl.u32 2475754826, %v2293
        %v2297 = vor.u32 %v2295, %v2296
        %v2298 = vshll.u32 2475754826, %v2292
        %v2299 = vshrl.u32 2131351028, %v2293
        %v2300 = vor.u32 %v2298, %v2299
        %v2301 = vshll.u32 2131351028, %v2292
        %v2302 = vshrl.u32 2102212464, %v2293
        %v2303 = vor.u32 %v2301, %v2302
        %v2304 = vshll.u32 2102212464, %v2292
        %v2305 = vshrl.u32 920167782, %v2293
        %v2306 = vor.u32 %v2304, %v2305
        %v2307 = vshll.u32 920167782, %v2292
        %v2308 = vshrl.u32 1326507024, %v2293
        %v2309 = vor.u32 %v2307, %v2308
        %vm2310 = vcmp.lt.s32.totalorder %v2291, 1
        %vm2311 = vcmp.lt.s32.totalorder %v2291, 2
        %vm2312 = vcmp.lt.s32.totalorder %v2291, 3
        %vm2313 = vcmp.lt.s32.totalorder %v2291, 4
        %v2314 = vsel %vm2310, %v2294, %v2297
        %v2315 = vsel %vm2313, %v2303, 2102212464
        %v2316 = vsel %vm2312, %v2300, %v2315
        %v2317 = vsel %vm2311, %v2314, %v2316
        %v2318 = vsel %vm2310, %v2297, %v2300
        %v2319 = vsel %vm2313, %v2306, 920167782
        %v2320 = vsel %vm2312, %v2303, %v2319
        %v2321 = vsel %vm2311, %v2318, %v2320
        %v2322 = vsel %vm2310, %v2300, %v2303
        %v2323 = vsel %vm2313, %v2309, 1326507024
        %v2324 = vsel %vm2312, %v2306, %v2323
        %v2325 = vsel %vm2311, %v2322, %v2324
        %v2326 = vshll.u32 %v2286, 8
        %v2327 = vand.u32 %v2326, 65535
        %v2328 = vshrl.u32 %v2326, 16
        %v2329 = vand.u32 %v2325, 65535
        %v2330 = vshrl.u32 %v2325, 16
        %v2331 = vmul.u32 %v2327, %v2329
        %v2332 = vmul.u32 %v2327, %v2330
        %v2333 = vmul.u32 %v2328, %v2329
        %v2334 = vmul.u32 %v2328, %v2330
        %v2335 = vshll.u32 %v2332, 16
        %v2336 = vshrl.u32 %v2332, 16
        %v2337 = vshll.u32 %v2333, 16
        %v2338 = vshrl.u32 %v2333, 16
        %vm2339 = vc.u32 %v2331, %v2335
        %v2340 = vsel %vm2339, 1, 0
        %v2341 = vadd.s32 %v2331, %v2335
        %v2342 = vadd.s32 %v2334, %v2340
        %vm2343 = vc.u32 %v2341, %v2337
        %v2344 = vsel %vm2343, 1, 0
        %v2345 = vadd.s32 %v2341, %v2337
        %v2346 = vadd.s32 %v2342, %v2344
        %v2347 = vadd.s32 %v2346, %v2336
        %v2348 = vadd.s32 %v2347, %v2338
        %v2349 = vand.u32 %v2326, 65535
        %v2350 = vshrl.u32 %v2326, 16
        %v2351 = vand.u32 %v2321, 65535
        %v2352 = vshrl.u32 %v2321, 16
        %v2353 = vmul.u32 %v2349, %v2351
        %v2354 = vmul.u32 %v2349, %v2352
        %v2355 = vmul.u32 %v2350, %v2351
        %v2356 = vmul.u32 %v2350, %v2352
        %v2357 = vshll.u32 %v2354, 16
        %v2358 = vshrl.u32 %v2354, 16
        %v2359 = vshll.u32 %v2355, 16
        %v2360 = vshrl.u32 %v2355, 16
        %vm2361 = vc.u32 %v2353, %v2357
        %v2362 = vsel %vm2361, 1, 0
        %v2363 = vadd.s32 %v2353, %v2357
        %v2364 = vadd.s32 %v2356, %v2362
        %vm2365 = vc.u32 %v2363, %v2359
        %v2366 = vsel %vm2365, 1, 0
        %v2367 = vadd.s32 %v2363, %v2359
        %v2368 = vadd.s32 %v2364, %v2366
        %v2369 = vadd.s32 %v2368, %v2358
        %v2370 = vadd.s32 %v2369, %v2360
        %v2371 = vmul.u32 %v2326, %v2317
        %v2372 = vadd.s32 %v2348, %v2367
        %vm2373 = vc.u32 %v2348, %v2367
        %v2374 = vadd.s32 %v2370, 1
        %v2375 = vsel %vm2373, %v2374, %v2370
        %v2376 = vadd.s32 %v2371, %v2375
        %v2377 = vadd.s32 %v2376, 536870912
        %v2378 = vshrl.u32 %v2377, 30
        %v2379 = vshll.u32 %v2378, 30
        %v2380 = vsub.s32 %v2376, %v2379
        %vm2381 = vcmp.lt.s32.totalorder %v2380, 0
        %v2382 = vsub.s32 0, %v2380
        %v2383 = vsel %vm2381, %v2382, %v2380
        %v2384 = vclz %v2383
        %v2385 = vsub.s32 %v2384, 2
        %vm2386 = vcmp.gt.s32.totalorder 0, %v2385
        %v2387 = vsel %vm2386, 0, %v2385
        %v2388 = vsub.s32 32, %v2387
        %v2389 = vshll.u32 %v2380, %v2387
        %v2390 = vshrl.u32 %v2372, %v2388
        %v2391 = vor.u32 %v2389, %v2390
        %v2392 = vsub.s32 4294967266, %v2387
        %v2393 = vadd.s32 %v2392, 127
        %v2394 = vshll.u32 %v2393, 23
        %v2395 = vor.u32 4788187, %v2394
        %v2396 = vand.u32 2147483647, %v2395
        %v2398 = vcvt.s32.f32 %v2391
        %v2399 = vmul.f32 %v2398, %v2396
        %v2400 = vxor.u32 %v2399, 2147483648
        %v2401 = vsel %vm2280, %v2400, %v2399
        %v2402 = vsub.s32 4, %v2378
        %v2403 = vsel %vm2280, %v2402, %v2378
        %v2404 = vsel %vm2279, %v1192, %v2401
        %v2405 = vsel %vm2279, 0, %v2403
        %v2406 = vmul.f32 %v2404, %v2404
        %v2407 = vmul.f32 %v2406, -0.001358992
        %v2408 = vadd.f32 %v2407, 0.041655596
        %v2409 = vmul.f32 %v2406, %v2408
        %v2410 = vadd.f32 %v2409, -0.4999988
        %v2411 = vmul.f32 %v2406, %v2410
        %v2412 = vadd.f32 1.0, %v2411
        %v2413 = vmul.f32 %v2404, %v2404
        %v2414 = vmul.f32 %v2413, -0.00019511016
        %v2415 = vadd.f32 %v2414, 0.008332121
        %v2416 = vmul.f32 %v2413, %v2415
        %v2417 = vadd.f32 %v2416, -0.16666654
        %v2418 = vmul.f32 %v2413, %v2417
        %v2419 = vadd.f32 %v2418, 1.0
        %v2420 = vmul.f32 %v2419, %v2404
        %vm2421 = vweird.f32 %v1192
        %v2422 = vadd.s32 %v2405, 3
        %v2423 = vand.u32 %v2422, 3
        %vm2424 = vcmp.lt.s32.totalorder %v2423, 2
        %vm2425 = vcmp.eq.s32.totalorder %v2423, 0
        %v2426 = vxor.u32 %v2420, 2147483648
        %v2427 = vsel %vm2425, %v2412, %v2426
        %vm2428 = vcmp.eq.s32.totalorder %v2423, 2
        %v2429 = vxor.u32 %v2412, 2147483648
        %v2430 = vsel %vm2428, %v2429, %v2420
        %v2431 = vsel %vm2424, %v2427, %v2430
        %v2432 = vsel %vm2421, nan, %v2431
        %v2433 = vadd.f32 %v1347, %v1110
        %v2434 = vadd.f32 %v1502, %v1112
        %v2435 = vadd.f32 %v1657, %v1115
        %v2436 = vadd.f32 %v1812, %v1117
        %v2437 = vadd.f32 %v1967, %v1120
        %v2438 = vadd.f32 %v2122, %v1122
        %v2439 = vadd.f32 %v2277, %v1125
        %v2440 = vadd.f32 %v2432, %v1127
        %v2441 = vpack.c.bf16 %v2434, %v2433
        %v2442 = vpack.c.bf16 %v2436, %v2435
        %v2443 = vpack.c.bf16 %v2438, %v2437
        %v2444 = vpack.c.bf16 %v2440, %v2439
        %v2445 = vld [vmem:[#allocation7] sm:$0xff]
        %v2446 = vld [vmem:[#allocation7 + $0x8] sm:$0xff]
        %v2447 = vld [vmem:[#allocation7 + $0x10] sm:$0xff]
        %v2448 = vld [vmem:[#allocation7 + $0x18] sm:$0xff]
        %v2449 = vld [vmem:[#allocation7 + $0x20] sm:$0xff]
        %v2450 = vld [vmem:[#allocation7 + $0x28] sm:$0xff]
        %v2451 = vld [vmem:[#allocation7 + $0x30] sm:$0xff]
        %v2452 = vld [vmem:[#allocation7 + $0x38] sm:$0xff]
        %v2453 = vld [vmem:[#allocation7 + $0x40] sm:$0xff]
        %v2454 = vld [vmem:[#allocation7 + $0x48] sm:$0xff]
        %v2455 = vld [vmem:[#allocation7 + $0x50] sm:$0xff]
        %v2456 = vld [vmem:[#allocation7 + $0x58] sm:$0xff]
        %v2457 = vld [vmem:[#allocation7 + $0x60] sm:$0xff]
        %v2458 = vld [vmem:[#allocation7 + $0x68] sm:$0xff]
        %v2459 = vld [vmem:[#allocation7 + $0x70] sm:$0xff]
        %v2460 = vld [vmem:[#allocation7 + $0x78] sm:$0xff]
        %v2461 = vld [vmem:[#allocation5 + $0x4] sm:$0x3]
        %v2463 = vperm.slane %v2461, 0
        %v2464 = vperm.slane %v2461, 1
        %v2483 = vunpack.c.l.b16 %v2445
        %v2484 = vunpack.c.h.b16 %v2445
        %v2485 = vunpack.c.l.b16 %v2446
        %v2486 = vunpack.c.h.b16 %v2446
        %v2487 = vunpack.c.l.b16 %v2447
        %v2488 = vunpack.c.h.b16 %v2447
        %v2489 = vunpack.c.l.b16 %v2448
        %v2490 = vunpack.c.h.b16 %v2448
        %v2491 = vunpack.c.l.b16 %v2449
        %v2492 = vunpack.c.h.b16 %v2449
        %v2493 = vunpack.c.l.b16 %v2450
        %v2494 = vunpack.c.h.b16 %v2450
        %v2495 = vunpack.c.l.b16 %v2451
        %v2496 = vunpack.c.h.b16 %v2451
        %v2497 = vunpack.c.l.b16 %v2452
        %v2498 = vunpack.c.h.b16 %v2452
        %v2499 = vunpack.c.l.b16 %v2453
        %v2500 = vunpack.c.h.b16 %v2453
        %v2501 = vunpack.c.l.b16 %v2454
        %v2502 = vunpack.c.h.b16 %v2454
        %v2503 = vunpack.c.l.b16 %v2455
        %v2504 = vunpack.c.h.b16 %v2455
        %v2505 = vunpack.c.l.b16 %v2456
        %v2506 = vunpack.c.h.b16 %v2456
        %v2507 = vunpack.c.l.b16 %v2457
        %v2508 = vunpack.c.h.b16 %v2457
        %v2509 = vunpack.c.l.b16 %v2458
        %v2510 = vunpack.c.h.b16 %v2458
        %v2511 = vunpack.c.l.b16 %v2459
        %v2512 = vunpack.c.h.b16 %v2459
        %v2513 = vunpack.c.l.b16 %v2460
        %v2514 = vunpack.c.h.b16 %v2460
        %v2515 = vpack.c.b16 %v2485, %v2483
        %v2516 = vpack.c.b16 %v2486, %v2484
        %v2517 = vpack.c.b16 %v2489, %v2487
        %v2518 = vpack.c.b16 %v2490, %v2488
        %v2519 = vpack.c.b16 %v2493, %v2491
        %v2520 = vpack.c.b16 %v2494, %v2492
        %v2521 = vpack.c.b16 %v2497, %v2495
        %v2522 = vpack.c.b16 %v2498, %v2496
        %v2523 = vpack.c.b16 %v2501, %v2499
        %v2524 = vpack.c.b16 %v2502, %v2500
        %v2525 = vpack.c.b16 %v2505, %v2503
        %v2526 = vpack.c.b16 %v2506, %v2504
        %v2527 = vpack.c.b16 %v2509, %v2507
        %v2528 = vpack.c.b16 %v2510, %v2508
        %v2529 = vpack.c.b16 %v2513, %v2511
        %v2530 = vpack.c.b16 %v2514, %v2512
        %2547 = vmatpush.bf16.msra.mxu0 %v2529
        %2548 = vmatpush.bf16.msra.mxu0 %v2527
        %2549 = vmatpush.bf16.msra.mxu0 %v2525
        %2550 = vmatpush.bf16.msra.mxu0 %v2523
        %2551 = vmatpush.bf16.msra.mxu0 %v2521
        %2552 = vmatpush.bf16.msra.mxu0 %v2519
        %2553 = vmatpush.bf16.msra.mxu0 %v2517
        %2554 = vmatpush.bf16.msra.mxu0 %v2515
        %2555 = vmatmul.bf16.gmra.mxu0 %v2441
        %v2556 = vpop.f32.mrf.mxu0
        %v2557 = vadd.f32 %v2463, %v2556
        %v2558 = vpop.f32.mrf.mxu0
        %v2559 = vadd.f32 %v2463, %v2558
        %2560 = vmatmul.bf16.gmra.mxu0 %v2442
        %v2561 = vpop.f32.mrf.mxu0
        %v2562 = vadd.f32 %v2463, %v2561
        %v2563 = vpop.f32.mrf.mxu0
        %v2564 = vadd.f32 %v2463, %v2563
        %2565 = vmatmul.bf16.gmra.mxu0 %v2443
        %v2566 = vpop.f32.mrf.mxu0
        %v2567 = vadd.f32 %v2463, %v2566
        %v2568 = vpop.f32.mrf.mxu0
        %v2569 = vadd.f32 %v2463, %v2568
        %2570 = vmatmul.bf16.gmra.mxu0 %v2444
        %v2571 = vpop.f32.mrf.mxu0
        %v2572 = vadd.f32 %v2463, %v2571
        %v2573 = vpop.f32.mrf.mxu0
        %v2574 = vadd.f32 %v2463, %v2573
        %2575 = vdwg.mxu0
        %2576 = vmatpush.bf16.msra.mxu0 %v2530
        %2577 = vmatpush.bf16.msra.mxu0 %v2528
        %2578 = vmatpush.bf16.msra.mxu0 %v2526
        %2579 = vmatpush.bf16.msra.mxu0 %v2524
        %2580 = vmatpush.bf16.msra.mxu0 %v2522
        %2581 = vmatpush.bf16.msra.mxu0 %v2520
        %2582 = vmatpush.bf16.msra.mxu0 %v2518
        %2583 = vmatpush.bf16.msra.mxu0 %v2516
        %2584 = vmatmul.bf16.gmra.mxu0 %v2441
        %v2585 = vpop.f32.mrf.mxu0
        %v2586 = vadd.f32 %v2464, %v2585
        %v2587 = vpop.f32.mrf.mxu0
        %v2588 = vadd.f32 %v2464, %v2587
        %2589 = vmatmul.bf16.gmra.mxu0 %v2442
        %v2590 = vpop.f32.mrf.mxu0
        %v2591 = vadd.f32 %v2464, %v2590
        %v2592 = vpop.f32.mrf.mxu0
        %v2593 = vadd.f32 %v2464, %v2592
        %2594 = vmatmul.bf16.gmra.mxu0 %v2443
        %v2595 = vpop.f32.mrf.mxu0
        %v2596 = vadd.f32 %v2464, %v2595
        %v2597 = vpop.f32.mrf.mxu0
        %v2598 = vadd.f32 %v2464, %v2597
        %2599 = vmatmul.bf16.gmra.mxu0 %v2444
        %v2600 = vpop.f32.mrf.mxu0
        %v2601 = vadd.f32 %v2464, %v2600
        %v2602 = vpop.f32.mrf.mxu0
        %v2603 = vadd.f32 %v2464, %v2602
        %2604 = vdwg.mxu0
        %v2605 = vpack.c.bf16 %v2559, %v2557
        %v2606 = vpack.c.bf16 %v2588, %v2586
        %v2607 = vpack.c.bf16 %v2564, %v2562
        %v2608 = vpack.c.bf16 %v2593, %v2591
        %v2609 = vpack.c.bf16 %v2569, %v2567
        %v2610 = vpack.c.bf16 %v2598, %v2596
        %v2611 = vpack.c.bf16 %v2574, %v2572
        %v2612 = vpack.c.bf16 %v2603, %v2601
        %v2613 = vld [vmem:[%s9] sm:$0xff]
        %v2614 = vld [vmem:[%s9 + $0x8] sm:$0xff]
        %v2615 = vld [vmem:[%s9 + $0x10] sm:$0xff]
        %v2616 = vld [vmem:[%s9 + $0x18] sm:$0xff]
        %v2617 = vld [vmem:[%s9 + $0x20] sm:$0xff]
        %v2618 = vld [vmem:[%s9 + $0x28] sm:$0xff]
        %v2619 = vld [vmem:[%s9 + $0x30] sm:$0xff]
        %v2620 = vld [vmem:[%s9 + $0x38] sm:$0xff]
        %v2621 = vld [vmem:[%s9 + $0x40] sm:$0xff]
        %v2622 = vld [vmem:[%s9 + $0x48] sm:$0xff]
        %v2623 = vld [vmem:[%s9 + $0x50] sm:$0xff]
        %v2624 = vld [vmem:[%s9 + $0x58] sm:$0xff]
        %v2625 = vld [vmem:[%s9 + $0x60] sm:$0xff]
        %v2626 = vld [vmem:[%s9 + $0x68] sm:$0xff]
        %v2627 = vld [vmem:[%s9 + $0x70] sm:$0xff]
        %v2628 = vld [vmem:[%s9 + $0x78] sm:$0xff]
        %v2629 = vld [vmem:[%s9 + $0x80] sm:$0xff]
        %v2630 = vld [vmem:[%s9 + $0x88] sm:$0xff]
        %v2631 = vld [vmem:[%s9 + $0x90] sm:$0xff]
        %v2632 = vld [vmem:[%s9 + $0x98] sm:$0xff]
        %v2633 = vld [vmem:[%s9 + $0xa0] sm:$0xff]
        %v2634 = vld [vmem:[%s9 + $0xa8] sm:$0xff]
        %v2635 = vld [vmem:[%s9 + $0xb0] sm:$0xff]
        %v2636 = vld [vmem:[%s9 + $0xb8] sm:$0xff]
        %v2637 = vld [vmem:[%s9 + $0xc0] sm:$0xff]
        %v2638 = vld [vmem:[%s9 + $0xc8] sm:$0xff]
        %v2639 = vld [vmem:[%s9 + $0xd0] sm:$0xff]
        %v2640 = vld [vmem:[%s9 + $0xd8] sm:$0xff]
        %v2641 = vld [vmem:[%s9 + $0xe0] sm:$0xff]
        %v2642 = vld [vmem:[%s9 + $0xe8] sm:$0xff]
        %v2643 = vld [vmem:[%s9 + $0xf0] sm:$0xff]
        %v2644 = vld [vmem:[%s9 + $0xf8] sm:$0xff]
        %v2677 = vunpack.c.l.b16 %v2613
        %v2678 = vunpack.c.h.b16 %v2613
        %v2679 = vunpack.c.l.b16 %v2614
        %v2680 = vunpack.c.h.b16 %v2614
        %v2681 = vunpack.c.l.b16 %v2615
        %v2682 = vunpack.c.h.b16 %v2615
        %v2683 = vunpack.c.l.b16 %v2616
        %v2684 = vunpack.c.h.b16 %v2616
        %v2685 = vunpack.c.l.b16 %v2617
        %v2686 = vunpack.c.h.b16 %v2617
        %v2687 = vunpack.c.l.b16 %v2618
        %v2688 = vunpack.c.h.b16 %v2618
        %v2689 = vunpack.c.l.b16 %v2619
        %v2690 = vunpack.c.h.b16 %v2619
        %v2691 = vunpack.c.l.b16 %v2620
        %v2692 = vunpack.c.h.b16 %v2620
        %v2693 = vunpack.c.l.b16 %v2621
        %v2694 = vunpack.c.h.b16 %v2621
        %v2695 = vunpack.c.l.b16 %v2622
        %v2696 = vunpack.c.h.b16 %v2622
        %v2697 = vunpack.c.l.b16 %v2623
        %v2698 = vunpack.c.h.b16 %v2623
        %v2699 = vunpack.c.l.b16 %v2624
        %v2700 = vunpack.c.h.b16 %v2624
        %v2701 = vunpack.c.l.b16 %v2625
        %v2702 = vunpack.c.h.b16 %v2625
        %v2703 = vunpack.c.l.b16 %v2626
        %v2704 = vunpack.c.h.b16 %v2626
        %v2705 = vunpack.c.l.b16 %v2627
        %v2706 = vunpack.c.h.b16 %v2627
        %v2707 = vunpack.c.l.b16 %v2628
        %v2708 = vunpack.c.h.b16 %v2628
        %v2709 = vunpack.c.l.b16 %v2629
        %v2710 = vunpack.c.h.b16 %v2629
        %v2711 = vunpack.c.l.b16 %v2630
        %v2712 = vunpack.c.h.b16 %v2630
        %v2713 = vunpack.c.l.b16 %v2631
        %v2714 = vunpack.c.h.b16 %v2631
        %v2715 = vunpack.c.l.b16 %v2632
        %v2716 = vunpack.c.h.b16 %v2632
        %v2717 = vunpack.c.l.b16 %v2633
        %v2718 = vunpack.c.h.b16 %v2633
        %v2719 = vunpack.c.l.b16 %v2634
        %v2720 = vunpack.c.h.b16 %v2634
        %v2721 = vunpack.c.l.b16 %v2635
        %v2722 = vunpack.c.h.b16 %v2635
        %v2723 = vunpack.c.l.b16 %v2636
        %v2724 = vunpack.c.h.b16 %v2636
        %v2725 = vunpack.c.l.b16 %v2637
        %v2726 = vunpack.c.h.b16 %v2637
        %v2727 = vunpack.c.l.b16 %v2638
        %v2728 = vunpack.c.h.b16 %v2638
        %v2729 = vunpack.c.l.b16 %v2639
        %v2730 = vunpack.c.h.b16 %v2639
        %v2731 = vunpack.c.l.b16 %v2640
        %v2732 = vunpack.c.h.b16 %v2640
        %v2733 = vunpack.c.l.b16 %v2641
        %v2734 = vunpack.c.h.b16 %v2641
        %v2735 = vunpack.c.l.b16 %v2642
        %v2736 = vunpack.c.h.b16 %v2642
        %v2737 = vunpack.c.l.b16 %v2643
        %v2738 = vunpack.c.h.b16 %v2643
        %v2739 = vunpack.c.l.b16 %v2644
        %v2740 = vunpack.c.h.b16 %v2644
        %v2741 = vpack.c.b16 %v2679, %v2677
        %v2742 = vpack.c.b16 %v2680, %v2678
        %v2743 = vpack.c.b16 %v2683, %v2681
        %v2744 = vpack.c.b16 %v2684, %v2682
        %v2745 = vpack.c.b16 %v2687, %v2685
        %v2746 = vpack.c.b16 %v2688, %v2686
        %v2747 = vpack.c.b16 %v2691, %v2689
        %v2748 = vpack.c.b16 %v2692, %v2690
        %v2749 = vpack.c.b16 %v2695, %v2693
        %v2750 = vpack.c.b16 %v2696, %v2694
        %v2751 = vpack.c.b16 %v2699, %v2697
        %v2752 = vpack.c.b16 %v2700, %v2698
        %v2753 = vpack.c.b16 %v2703, %v2701
        %v2754 = vpack.c.b16 %v2704, %v2702
        %v2755 = vpack.c.b16 %v2707, %v2705
        %v2756 = vpack.c.b16 %v2708, %v2706
        %v2757 = vpack.c.b16 %v2711, %v2709
        %v2758 = vpack.c.b16 %v2712, %v2710
        %v2759 = vpack.c.b16 %v2715, %v2713
        %v2760 = vpack.c.b16 %v2716, %v2714
        %v2761 = vpack.c.b16 %v2719, %v2717
        %v2762 = vpack.c.b16 %v2720, %v2718
        %v2763 = vpack.c.b16 %v2723, %v2721
        %v2764 = vpack.c.b16 %v2724, %v2722
        %v2765 = vpack.c.b16 %v2727, %v2725
        %v2766 = vpack.c.b16 %v2728, %v2726
        %v2767 = vpack.c.b16 %v2731, %v2729
        %v2768 = vpack.c.b16 %v2732, %v2730
        %v2769 = vpack.c.b16 %v2735, %v2733
        %v2770 = vpack.c.b16 %v2736, %v2734
        %v2771 = vpack.c.b16 %v2739, %v2737
        %v2772 = vpack.c.b16 %v2740, %v2738
        %2805 = vmatpush.bf16.msra.mxu0 %v2755
        %2806 = vmatpush.bf16.msra.mxu0 %v2753
        %2807 = vmatpush.bf16.msra.mxu0 %v2751
        %2808 = vmatpush.bf16.msra.mxu0 %v2749
        %2809 = vmatpush.bf16.msra.mxu0 %v2747
        %2810 = vmatpush.bf16.msra.mxu0 %v2745
        %2811 = vmatpush.bf16.msra.mxu0 %v2743
        %2812 = vmatpush.bf16.msra.mxu0 %v2741
        %2813 = vmatmul.bf16.gmra.mxu0 %v2605
        %v2814 = vpop.f32.mrf.mxu0
        %v2815 = vadd.f32 0.0, %v2814
        %v2816 = vpop.f32.mrf.mxu0
        %v2817 = vadd.f32 0.0, %v2816
        %2818 = vmatmul.bf16.gmra.mxu0 %v2607
        %v2819 = vpop.f32.mrf.mxu0
        %v2820 = vadd.f32 0.0, %v2819
        %v2821 = vpop.f32.mrf.mxu0
        %v2822 = vadd.f32 0.0, %v2821
        %2823 = vmatmul.bf16.gmra.mxu0 %v2609
        %v2824 = vpop.f32.mrf.mxu0
        %v2825 = vadd.f32 0.0, %v2824
        %v2826 = vpop.f32.mrf.mxu0
        %v2827 = vadd.f32 0.0, %v2826
        %2828 = vmatmul.bf16.gmra.mxu0 %v2611
        %v2829 = vpop.f32.mrf.mxu0
        %v2830 = vadd.f32 0.0, %v2829
        %v2831 = vpop.f32.mrf.mxu0
        %v2832 = vadd.f32 0.0, %v2831
        %2833 = vdwg.mxu0
        %2834 = vmatpush.bf16.msra.mxu0 %v2771
        %2835 = vmatpush.bf16.msra.mxu0 %v2769
        %2836 = vmatpush.bf16.msra.mxu0 %v2767
        %2837 = vmatpush.bf16.msra.mxu0 %v2765
        %2838 = vmatpush.bf16.msra.mxu0 %v2763
        %2839 = vmatpush.bf16.msra.mxu0 %v2761
        %2840 = vmatpush.bf16.msra.mxu0 %v2759
        %2841 = vmatpush.bf16.msra.mxu0 %v2757
        %2842 = vmatmul.bf16.gmra.mxu0 %v2606
        %v2843 = vpop.f32.mrf.mxu0
        %v2844 = vadd.f32 %v2815, %v2843
        %v2845 = vpop.f32.mrf.mxu0
        %v2846 = vadd.f32 %v2817, %v2845
        %2847 = vmatmul.bf16.gmra.mxu0 %v2608
        %v2848 = vpop.f32.mrf.mxu0
        %v2849 = vadd.f32 %v2820, %v2848
        %v2850 = vpop.f32.mrf.mxu0
        %v2851 = vadd.f32 %v2822, %v2850
        %2852 = vmatmul.bf16.gmra.mxu0 %v2610
        %v2853 = vpop.f32.mrf.mxu0
        %v2854 = vadd.f32 %v2825, %v2853
        %v2855 = vpop.f32.mrf.mxu0
        %v2856 = vadd.f32 %v2827, %v2855
        %2857 = vmatmul.bf16.gmra.mxu0 %v2612
        %v2858 = vpop.f32.mrf.mxu0
        %v2859 = vadd.f32 %v2830, %v2858
        %v2860 = vpop.f32.mrf.mxu0
        %v2861 = vadd.f32 %v2832, %v2860
        %2862 = vdwg.mxu0
        %2863 = vmatpush.bf16.msra.mxu0 %v2756
        %2864 = vmatpush.bf16.msra.mxu0 %v2754
        %2865 = vmatpush.bf16.msra.mxu0 %v2752
        %2866 = vmatpush.bf16.msra.mxu0 %v2750
        %2867 = vmatpush.bf16.msra.mxu0 %v2748
        %2868 = vmatpush.bf16.msra.mxu0 %v2746
        %2869 = vmatpush.bf16.msra.mxu0 %v2744
        %2870 = vmatpush.bf16.msra.mxu0 %v2742
        %2871 = vmatmul.bf16.gmra.mxu0 %v2605
        %v2872 = vpop.f32.mrf.mxu0
        %v2873 = vadd.f32 0.0, %v2872
        %v2874 = vpop.f32.mrf.mxu0
        %v2875 = vadd.f32 0.0, %v2874
        %2876 = vmatmul.bf16.gmra.mxu0 %v2607
        %v2877 = vpop.f32.mrf.mxu0
        %v2878 = vadd.f32 0.0, %v2877
        %v2879 = vpop.f32.mrf.mxu0
        %v2880 = vadd.f32 0.0, %v2879
        %2881 = vmatmul.bf16.gmra.mxu0 %v2609
        %v2882 = vpop.f32.mrf.mxu0
        %v2883 = vadd.f32 0.0, %v2882
        %v2884 = vpop.f32.mrf.mxu0
        %v2885 = vadd.f32 0.0, %v2884
        %2886 = vmatmul.bf16.gmra.mxu0 %v2611
        %v2887 = vpop.f32.mrf.mxu0
        %v2888 = vadd.f32 0.0, %v2887
        %v2889 = vpop.f32.mrf.mxu0
        %v2890 = vadd.f32 0.0, %v2889
        %2891 = vdwg.mxu0
        %2892 = vmatpush.bf16.msra.mxu0 %v2772
        %2893 = vmatpush.bf16.msra.mxu0 %v2770
        %2894 = vmatpush.bf16.msra.mxu0 %v2768
        %2895 = vmatpush.bf16.msra.mxu0 %v2766
        %2896 = vmatpush.bf16.msra.mxu0 %v2764
        %2897 = vmatpush.bf16.msra.mxu0 %v2762
        %2898 = vmatpush.bf16.msra.mxu0 %v2760
        %2899 = vmatpush.bf16.msra.mxu0 %v2758
        %2900 = vmatmul.bf16.gmra.mxu0 %v2606
        %v2901 = vpop.f32.mrf.mxu0
        %v2902 = vadd.f32 %v2873, %v2901
        %v2903 = vpop.f32.mrf.mxu0
        %v2904 = vadd.f32 %v2875, %v2903
        %2905 = vmatmul.bf16.gmra.mxu0 %v2608
        %v2906 = vpop.f32.mrf.mxu0
        %v2907 = vadd.f32 %v2878, %v2906
        %v2908 = vpop.f32.mrf.mxu0
        %v2909 = vadd.f32 %v2880, %v2908
        %2910 = vmatmul.bf16.gmra.mxu0 %v2610
        %v2911 = vpop.f32.mrf.mxu0
        %v2912 = vadd.f32 %v2883, %v2911
        %v2913 = vpop.f32.mrf.mxu0
        %v2914 = vadd.f32 %v2885, %v2913
        %2915 = vmatmul.bf16.gmra.mxu0 %v2612
        %v2916 = vpop.f32.mrf.mxu0
        %v2917 = vadd.f32 %v2888, %v2916
        %v2918 = vpop.f32.mrf.mxu0
        %v2919 = vadd.f32 %v2890, %v2918
        %2920 = vdwg.mxu0
        %v2921 = vsub.f32 %v2557, %v2844
        %v2922 = vsub.f32 %v2586, %v2902
        %v2923 = vsub.f32 %v2559, %v2846
        %v2924 = vsub.f32 %v2588, %v2904
        %v2925 = vsub.f32 %v2562, %v2849
        %v2926 = vsub.f32 %v2591, %v2907
        %v2927 = vsub.f32 %v2564, %v2851
        %v2928 = vsub.f32 %v2593, %v2909
        %v2929 = vsub.f32 %v2567, %v2854
        %v2930 = vsub.f32 %v2596, %v2912
        %v2931 = vsub.f32 %v2569, %v2856
        %v2932 = vsub.f32 %v2598, %v2914
        %v2933 = vsub.f32 %v2572, %v2859
        %v2934 = vsub.f32 %v2601, %v2917
        %v2935 = vsub.f32 %v2574, %v2861
        %v2936 = vsub.f32 %v2603, %v2919
        %v2937 = vmul.f32 %v2921, %v2921
        %v2938 = vmul.f32 %v2922, %v2922
        %v2939 = vmul.f32 %v2923, %v2923
        %v2940 = vmul.f32 %v2924, %v2924
        %v2941 = vmul.f32 %v2925, %v2925
        %v2942 = vmul.f32 %v2926, %v2926
        %v2943 = vmul.f32 %v2927, %v2927
        %v2944 = vmul.f32 %v2928, %v2928
        %v2945 = vmul.f32 %v2929, %v2929
        %v2946 = vmul.f32 %v2930, %v2930
        %v2947 = vmul.f32 %v2931, %v2931
        %v2948 = vmul.f32 %v2932, %v2932
        %v2949 = vmul.f32 %v2933, %v2933
        %v2950 = vmul.f32 %v2934, %v2934
        %v2951 = vmul.f32 %v2935, %v2935
        %v2952 = vmul.f32 %v2936, %v2936
        %v2953 = vpack.c.bf16 %v2939, %v2937
        %v2954 = vpack.c.bf16 %v2940, %v2938
        %v2955 = vpack.c.bf16 %v2943, %v2941
        %v2956 = vpack.c.bf16 %v2944, %v2942
        %v2957 = vpack.c.bf16 %v2947, %v2945
        %v2958 = vpack.c.bf16 %v2948, %v2946
        %v2959 = vpack.c.bf16 %v2951, %v2949
        %v2960 = vpack.c.bf16 %v2952, %v2950
        %2961 = vmatpush.bf16.msra.mxu0 %v2755
        %2962 = vmatpush.bf16.msra.mxu0 %v2753
        %2963 = vmatpush.bf16.msra.mxu0 %v2751
        %2964 = vmatpush.bf16.msra.mxu0 %v2749
        %2965 = vmatpush.bf16.msra.mxu0 %v2747
        %2966 = vmatpush.bf16.msra.mxu0 %v2745
        %2967 = vmatpush.bf16.msra.mxu0 %v2743
        %2968 = vmatpush.bf16.msra.mxu0 %v2741
        %2969 = vmatmul.bf16.gmra.mxu0 %v2953
        %v2970 = vpop.f32.mrf.mxu0
        %v2971 = vadd.f32 1e-05, %v2970
        %v2972 = vpop.f32.mrf.mxu0
        %v2973 = vadd.f32 1e-05, %v2972
        %2974 = vmatmul.bf16.gmra.mxu0 %v2955
        %v2975 = vpop.f32.mrf.mxu0
        %v2976 = vadd.f32 1e-05, %v2975
        %v2977 = vpop.f32.mrf.mxu0
        %v2978 = vadd.f32 1e-05, %v2977
        %2979 = vmatmul.bf16.gmra.mxu0 %v2957
        %v2980 = vpop.f32.mrf.mxu0
        %v2981 = vadd.f32 1e-05, %v2980
        %v2982 = vpop.f32.mrf.mxu0
        %v2983 = vadd.f32 1e-05, %v2982
        %2984 = vmatmul.bf16.gmra.mxu0 %v2959
        %v2985 = vpop.f32.mrf.mxu0
        %v2986 = vadd.f32 1e-05, %v2985
        %v2987 = vpop.f32.mrf.mxu0
        %v2988 = vadd.f32 1e-05, %v2987
        %2989 = vdwg.mxu0
        %2990 = vmatpush.bf16.msra.mxu0 %v2771
        %2991 = vmatpush.bf16.msra.mxu0 %v2769
        %2992 = vmatpush.bf16.msra.mxu0 %v2767
        %2993 = vmatpush.bf16.msra.mxu0 %v2765
        %2994 = vmatpush.bf16.msra.mxu0 %v2763
        %2995 = vmatpush.bf16.msra.mxu0 %v2761
        %2996 = vmatpush.bf16.msra.mxu0 %v2759
        %2997 = vmatpush.bf16.msra.mxu0 %v2757
        %2998 = vmatmul.bf16.gmra.mxu0 %v2954
        %v2999 = vpop.f32.mrf.mxu0
        %v3000 = vadd.f32 %v2971, %v2999
        %v3001 = vpop.f32.mrf.mxu0
        %v3002 = vadd.f32 %v2973, %v3001
        %3003 = vmatmul.bf16.gmra.mxu0 %v2956
        %v3004 = vpop.f32.mrf.mxu0
        %v3005 = vadd.f32 %v2976, %v3004
        %v3006 = vpop.f32.mrf.mxu0
        %v3007 = vadd.f32 %v2978, %v3006
        %3008 = vmatmul.bf16.gmra.mxu0 %v2958
        %v3009 = vpop.f32.mrf.mxu0
        %v3010 = vadd.f32 %v2981, %v3009
        %v3011 = vpop.f32.mrf.mxu0
        %v3012 = vadd.f32 %v2983, %v3011
        %3013 = vmatmul.bf16.gmra.mxu0 %v2960
        %v3014 = vpop.f32.mrf.mxu0
        %v3015 = vadd.f32 %v2986, %v3014
        %v3016 = vpop.f32.mrf.mxu0
        %v3017 = vadd.f32 %v2988, %v3016
        %3018 = vdwg.mxu0
        %3019 = vmatpush.bf16.msra.mxu0 %v2756
        %3020 = vmatpush.bf16.msra.mxu0 %v2754
        %3021 = vmatpush.bf16.msra.mxu0 %v2752
        %3022 = vmatpush.bf16.msra.mxu0 %v2750
        %3023 = vmatpush.bf16.msra.mxu0 %v2748
        %3024 = vmatpush.bf16.msra.mxu0 %v2746
        %3025 = vmatpush.bf16.msra.mxu0 %v2744
        %3026 = vmatpush.bf16.msra.mxu0 %v2742
        %3027 = vmatmul.bf16.gmra.mxu0 %v2953
        %v3028 = vpop.f32.mrf.mxu0
        %v3029 = vadd.f32 1e-05, %v3028
        %v3030 = vpop.f32.mrf.mxu0
        %v3031 = vadd.f32 1e-05, %v3030
        %3032 = vmatmul.bf16.gmra.mxu0 %v2955
        %v3033 = vpop.f32.mrf.mxu0
        %v3034 = vadd.f32 1e-05, %v3033
        %v3035 = vpop.f32.mrf.mxu0
        %v3036 = vadd.f32 1e-05, %v3035
        %3037 = vmatmul.bf16.gmra.mxu0 %v2957
        %v3038 = vpop.f32.mrf.mxu0
        %v3039 = vadd.f32 1e-05, %v3038
        %v3040 = vpop.f32.mrf.mxu0
        %v3041 = vadd.f32 1e-05, %v3040
        %3042 = vmatmul.bf16.gmra.mxu0 %v2959
        %v3043 = vpop.f32.mrf.mxu0
        %v3044 = vadd.f32 1e-05, %v3043
        %v3045 = vpop.f32.mrf.mxu0
        %v3046 = vadd.f32 1e-05, %v3045
        %3047 = vdwg.mxu0
        %3048 = vmatpush.bf16.msra.mxu0 %v2772
        %3049 = vmatpush.bf16.msra.mxu0 %v2770
        %3050 = vmatpush.bf16.msra.mxu0 %v2768
        %3051 = vmatpush.bf16.msra.mxu0 %v2766
        %3052 = vmatpush.bf16.msra.mxu0 %v2764
        %3053 = vmatpush.bf16.msra.mxu0 %v2762
        %3054 = vmatpush.bf16.msra.mxu0 %v2760
        %3055 = vmatpush.bf16.msra.mxu0 %v2758
        %3056 = vmatmul.bf16.gmra.mxu0 %v2954
        %v3057 = vpop.f32.mrf.mxu0
        %v3058 = vadd.f32 %v3029, %v3057
        %v3059 = vpop.f32.mrf.mxu0
        %v3060 = vadd.f32 %v3031, %v3059
        %3061 = vmatmul.bf16.gmra.mxu0 %v2956
        %v3062 = vpop.f32.mrf.mxu0
        %v3063 = vadd.f32 %v3034, %v3062
        %v3064 = vpop.f32.mrf.mxu0
        %v3065 = vadd.f32 %v3036, %v3064
        %3066 = vmatmul.bf16.gmra.mxu0 %v2958
        %v3067 = vpop.f32.mrf.mxu0
        %v3068 = vadd.f32 %v3039, %v3067
        %v3069 = vpop.f32.mrf.mxu0
        %v3070 = vadd.f32 %v3041, %v3069
        %3071 = vmatmul.bf16.gmra.mxu0 %v2960
        %v3072 = vpop.f32.mrf.mxu0
        %v3073 = vadd.f32 %v3044, %v3072
        %v3074 = vpop.f32.mrf.mxu0
        %v3075 = vadd.f32 %v3046, %v3074
        %3076 = vdwg.mxu0
        %v3077 = vrsqrt.pop %v3000
        %v3078 = vmul.f32 %v3077, %v3000
        %v3079 = vmul.f32 %v3078, %v3077
        %v3080 = vmul.f32 0.5, %v3079
        %v3081 = vsub.f32 1.5, %v3080
        %v3082 = vmul.f32 %v3077, %v3081
        %vm3083 = vweird.f32 %v3000
        %vm3084 = vweird.f32 %v3077
        %vm3085 = vmor %vm3083, %vm3084
        %v3086 = vsel %vm3085, %v3077, %v3082
        %v3087 = vrsqrt.pop %v3058
        %v3088 = vmul.f32 %v3087, %v3058
        %v3089 = vmul.f32 %v3088, %v3087
        %v3090 = vmul.f32 0.5, %v3089
        %v3091 = vsub.f32 1.5, %v3090
        %v3092 = vmul.f32 %v3087, %v3091
        %vm3093 = vweird.f32 %v3058
        %vm3094 = vweird.f32 %v3087
        %vm3095 = vmor %vm3093, %vm3094
        %v3096 = vsel %vm3095, %v3087, %v3092
        %v3097 = vrsqrt.pop %v3002
        %v3098 = vmul.f32 %v3097, %v3002
        %v3099 = vmul.f32 %v3098, %v3097
        %v3100 = vmul.f32 0.5, %v3099
        %v3101 = vsub.f32 1.5, %v3100
        %v3102 = vmul.f32 %v3097, %v3101
        %vm3103 = vweird.f32 %v3002
        %vm3104 = vweird.f32 %v3097
        %vm3105 = vmor %vm3103, %vm3104
        %v3106 = vsel %vm3105, %v3097, %v3102
        %v3107 = vrsqrt.pop %v3060
        %v3108 = vmul.f32 %v3107, %v3060
        %v3109 = vmul.f32 %v3108, %v3107
        %v3110 = vmul.f32 0.5, %v3109
        %v3111 = vsub.f32 1.5, %v3110
        %v3112 = vmul.f32 %v3107, %v3111
        %vm3113 = vweird.f32 %v3060
        %vm3114 = vweird.f32 %v3107
        %vm3115 = vmor %vm3113, %vm3114
        %v3116 = vsel %vm3115, %v3107, %v3112
        %v3117 = vrsqrt.pop %v3005
        %v3118 = vmul.f32 %v3117, %v3005
        %v3119 = vmul.f32 %v3118, %v3117
        %v3120 = vmul.f32 0.5, %v3119
        %v3121 = vsub.f32 1.5, %v3120
        %v3122 = vmul.f32 %v3117, %v3121
        %vm3123 = vweird.f32 %v3005
        %vm3124 = vweird.f32 %v3117
        %vm3125 = vmor %vm3123, %vm3124
        %v3126 = vsel %vm3125, %v3117, %v3122
        %v3127 = vrsqrt.pop %v3063
        %v3128 = vmul.f32 %v3127, %v3063
        %v3129 = vmul.f32 %v3128, %v3127
        %v3130 = vmul.f32 0.5, %v3129
        %v3131 = vsub.f32 1.5, %v3130
        %v3132 = vmul.f32 %v3127, %v3131
        %vm3133 = vweird.f32 %v3063
        %vm3134 = vweird.f32 %v3127
        %vm3135 = vmor %vm3133, %vm3134
        %v3136 = vsel %vm3135, %v3127, %v3132
        %v3137 = vrsqrt.pop %v3007
        %v3138 = vmul.f32 %v3137, %v3007
        %v3139 = vmul.f32 %v3138, %v3137
        %v3140 = vmul.f32 0.5, %v3139
        %v3141 = vsub.f32 1.5, %v3140
        %v3142 = vmul.f32 %v3137, %v3141
        %vm3143 = vweird.f32 %v3007
        %vm3144 = vweird.f32 %v3137
        %vm3145 = vmor %vm3143, %vm3144
        %v3146 = vsel %vm3145, %v3137, %v3142
        %v3147 = vrsqrt.pop %v3065
        %v3148 = vmul.f32 %v3147, %v3065
        %v3149 = vmul.f32 %v3148, %v3147
        %v3150 = vmul.f32 0.5, %v3149
        %v3151 = vsub.f32 1.5, %v3150
        %v3152 = vmul.f32 %v3147, %v3151
        %vm3153 = vweird.f32 %v3065
        %vm3154 = vweird.f32 %v3147
        %vm3155 = vmor %vm3153, %vm3154
        %v3156 = vsel %vm3155, %v3147, %v3152
        %v3157 = vrsqrt.pop %v3010
        %v3158 = vmul.f32 %v3157, %v3010
        %v3159 = vmul.f32 %v3158, %v3157
        %v3160 = vmul.f32 0.5, %v3159
        %v3161 = vsub.f32 1.5, %v3160
        %v3162 = vmul.f32 %v3157, %v3161
        %vm3163 = vweird.f32 %v3010
        %vm3164 = vweird.f32 %v3157
        %vm3165 = vmor %vm3163, %vm3164
        %v3166 = vsel %vm3165, %v3157, %v3162
        %v3167 = vrsqrt.pop %v3068
        %v3168 = vmul.f32 %v3167, %v3068
        %v3169 = vmul.f32 %v3168, %v3167
        %v3170 = vmul.f32 0.5, %v3169
        %v3171 = vsub.f32 1.5, %v3170
        %v3172 = vmul.f32 %v3167, %v3171
        %vm3173 = vweird.f32 %v3068
        %vm3174 = vweird.f32 %v3167
        %vm3175 = vmor %vm3173, %vm3174
        %v3176 = vsel %vm3175, %v3167, %v3172
        %v3177 = vrsqrt.pop %v3012
        %v3178 = vmul.f32 %v3177, %v3012
        %v3179 = vmul.f32 %v3178, %v3177
        %v3180 = vmul.f32 0.5, %v3179
        %v3181 = vsub.f32 1.5, %v3180
        %v3182 = vmul.f32 %v3177, %v3181
        %vm3183 = vweird.f32 %v3012
        %vm3184 = vweird.f32 %v3177
        %vm3185 = vmor %vm3183, %vm3184
        %v3186 = vsel %vm3185, %v3177, %v3182
        %v3187 = vrsqrt.pop %v3070
        %v3188 = vmul.f32 %v3187, %v3070
        %v3189 = vmul.f32 %v3188, %v3187
        %v3190 = vmul.f32 0.5, %v3189
        %v3191 = vsub.f32 1.5, %v3190
        %v3192 = vmul.f32 %v3187, %v3191
        %vm3193 = vweird.f32 %v3070
        %vm3194 = vweird.f32 %v3187
        %vm3195 = vmor %vm3193, %vm3194
        %v3196 = vsel %vm3195, %v3187, %v3192
        %v3197 = vrsqrt.pop %v3015
        %v3198 = vmul.f32 %v3197, %v3015
        %v3199 = vmul.f32 %v3198, %v3197
        %v3200 = vmul.f32 0.5, %v3199
        %v3201 = vsub.f32 1.5, %v3200
        %v3202 = vmul.f32 %v3197, %v3201
        %vm3203 = vweird.f32 %v3015
        %vm3204 = vweird.f32 %v3197
        %vm3205 = vmor %vm3203, %vm3204
        %v3206 = vsel %vm3205, %v3197, %v3202
        %v3207 = vrsqrt.pop %v3073
        %v3208 = vmul.f32 %v3207, %v3073
        %v3209 = vmul.f32 %v3208, %v3207
        %v3210 = vmul.f32 0.5, %v3209
        %v3211 = vsub.f32 1.5, %v3210
        %v3212 = vmul.f32 %v3207, %v3211
        %vm3213 = vweird.f32 %v3073
        %vm3214 = vweird.f32 %v3207
        %vm3215 = vmor %vm3213, %vm3214
        %v3216 = vsel %vm3215, %v3207, %v3212
        %v3217 = vrsqrt.pop %v3017
        %v3218 = vmul.f32 %v3217, %v3017
        %v3219 = vmul.f32 %v3218, %v3217
        %v3220 = vmul.f32 0.5, %v3219
        %v3221 = vsub.f32 1.5, %v3220
        %v3222 = vmul.f32 %v3217, %v3221
        %vm3223 = vweird.f32 %v3017
        %vm3224 = vweird.f32 %v3217
        %vm3225 = vmor %vm3223, %vm3224
        %v3226 = vsel %vm3225, %v3217, %v3222
        %v3227 = vrsqrt.pop %v3075
        %v3228 = vmul.f32 %v3227, %v3075
        %v3229 = vmul.f32 %v3228, %v3227
        %v3230 = vmul.f32 0.5, %v3229
        %v3231 = vsub.f32 1.5, %v3230
        %v3232 = vmul.f32 %v3227, %v3231
        %vm3233 = vweird.f32 %v3075
        %vm3234 = vweird.f32 %v3227
        %vm3235 = vmor %vm3233, %vm3234
        %v3236 = vsel %vm3235, %v3227, %v3232
        %v3237 = vmul.f32 %v2921, %v3086
        %v3238 = vmul.f32 %v2922, %v3096
        %v3239 = vmul.f32 %v2923, %v3106
        %v3240 = vmul.f32 %v2924, %v3116
        %v3241 = vmul.f32 %v2925, %v3126
        %v3242 = vmul.f32 %v2926, %v3136
        %v3243 = vmul.f32 %v2927, %v3146
        %v3244 = vmul.f32 %v2928, %v3156
        %v3245 = vmul.f32 %v2929, %v3166
        %v3246 = vmul.f32 %v2930, %v3176
        %v3247 = vmul.f32 %v2931, %v3186
        %v3248 = vmul.f32 %v2932, %v3196
        %v3249 = vmul.f32 %v2933, %v3206
        %v3250 = vmul.f32 %v2934, %v3216
        %v3251 = vmul.f32 %v2935, %v3226
        %v3252 = vmul.f32 %v2936, %v3236
        %v3253 = vld [vmem:[#allocation5 + $0x6] sm:$0x3]
        %v3255 = vperm.slane %v3253, 0
        %v3256 = vperm.slane %v3253, 1
        %v3259 = vmul.f32 %v3237, %v3255
        %v3260 = vmul.f32 %v3238, %v3256
        %v3261 = vmul.f32 %v3239, %v3255
        %v3262 = vmul.f32 %v3240, %v3256
        %v3263 = vmul.f32 %v3241, %v3255
        %v3264 = vmul.f32 %v3242, %v3256
        %v3265 = vmul.f32 %v3243, %v3255
        %v3266 = vmul.f32 %v3244, %v3256
        %v3267 = vmul.f32 %v3245, %v3255
        %v3268 = vmul.f32 %v3246, %v3256
        %v3269 = vmul.f32 %v3247, %v3255
        %v3270 = vmul.f32 %v3248, %v3256
        %v3271 = vmul.f32 %v3249, %v3255
        %v3272 = vmul.f32 %v3250, %v3256
        %v3273 = vmul.f32 %v3251, %v3255
        %v3274 = vmul.f32 %v3252, %v3256
        %v3275 = vld [vmem:[#allocation5 + $0x8] sm:$0x3]
        %v3277 = vperm.slane %v3275, 0
        %v3278 = vperm.slane %v3275, 1
        %v3281 = vadd.f32 %v3259, %v3277
        %v3282 = vadd.f32 %v3260, %v3278
        %v3283 = vadd.f32 %v3261, %v3277
        %v3284 = vadd.f32 %v3262, %v3278
        %v3285 = vadd.f32 %v3263, %v3277
        %v3286 = vadd.f32 %v3264, %v3278
        %v3287 = vadd.f32 %v3265, %v3277
        %v3288 = vadd.f32 %v3266, %v3278
        %v3289 = vadd.f32 %v3267, %v3277
        %v3290 = vadd.f32 %v3268, %v3278
        %v3291 = vadd.f32 %v3269, %v3277
        %v3292 = vadd.f32 %v3270, %v3278
        %v3293 = vadd.f32 %v3271, %v3277
        %v3294 = vadd.f32 %v3272, %v3278
        %v3295 = vadd.f32 %v3273, %v3277
        %v3296 = vadd.f32 %v3274, %v3278
        %v3297 = vsub.f32 0.0, %v3281
        %v3298 = vsub.f32 0.0, %v3282
        %v3299 = vsub.f32 0.0, %v3283
        %v3300 = vsub.f32 0.0, %v3284
        %v3301 = vsub.f32 0.0, %v3285
        %v3302 = vsub.f32 0.0, %v3286
        %v3303 = vsub.f32 0.0, %v3287
        %v3304 = vsub.f32 0.0, %v3288
        %v3305 = vsub.f32 0.0, %v3289
        %v3306 = vsub.f32 0.0, %v3290
        %v3307 = vsub.f32 0.0, %v3291
        %v3308 = vsub.f32 0.0, %v3292
        %v3309 = vsub.f32 0.0, %v3293
        %v3310 = vsub.f32 0.0, %v3294
        %v3311 = vsub.f32 0.0, %v3295
        %v3312 = vsub.f32 0.0, %v3296
        %v3313 = vmul.f32 %v3297, 1.442695
        %v3314 = vpow.pop %v3313
        %v3315 = vmul.f32 %v3298, 1.442695
        %v3316 = vpow.pop %v3315
        %v3317 = vmul.f32 %v3299, 1.442695
        %v3318 = vpow.pop %v3317
        %v3319 = vmul.f32 %v3300, 1.442695
        %v3320 = vpow.pop %v3319
        %v3321 = vmul.f32 %v3301, 1.442695
        %v3322 = vpow.pop %v3321
        %v3323 = vmul.f32 %v3302, 1.442695
        %v3324 = vpow.pop %v3323
        %v3325 = vmul.f32 %v3303, 1.442695
        %v3326 = vpow.pop %v3325
        %v3327 = vmul.f32 %v3304, 1.442695
        %v3328 = vpow.pop %v3327
        %v3329 = vmul.f32 %v3305, 1.442695
        %v3330 = vpow.pop %v3329
        %v3331 = vmul.f32 %v3306, 1.442695
        %v3332 = vpow.pop %v3331
        %v3333 = vmul.f32 %v3307, 1.442695
        %v3334 = vpow.pop %v3333
        %v3335 = vmul.f32 %v3308, 1.442695
        %v3336 = vpow.pop %v3335
        %v3337 = vmul.f32 %v3309, 1.442695
        %v3338 = vpow.pop %v3337
        %v3339 = vmul.f32 %v3310, 1.442695
        %v3340 = vpow.pop %v3339
        %v3341 = vmul.f32 %v3311, 1.442695
        %v3342 = vpow.pop %v3341
        %v3343 = vmul.f32 %v3312, 1.442695
        %v3344 = vpow.pop %v3343
        %v3345 = vadd.f32 %v3314, 1.0
        %v3346 = vadd.f32 %v3316, 1.0
        %v3347 = vadd.f32 %v3318, 1.0
        %v3348 = vadd.f32 %v3320, 1.0
        %v3349 = vadd.f32 %v3322, 1.0
        %v3350 = vadd.f32 %v3324, 1.0
        %v3351 = vadd.f32 %v3326, 1.0
        %v3352 = vadd.f32 %v3328, 1.0
        %v3353 = vadd.f32 %v3330, 1.0
        %v3354 = vadd.f32 %v3332, 1.0
        %v3355 = vadd.f32 %v3334, 1.0
        %v3356 = vadd.f32 %v3336, 1.0
        %v3357 = vadd.f32 %v3338, 1.0
        %v3358 = vadd.f32 %v3340, 1.0
        %v3359 = vadd.f32 %v3342, 1.0
        %v3360 = vadd.f32 %v3344, 1.0
        %v3361 = vrcp.pop %v3345
        %v3362 = vrcp.pop %v3346
        %v3363 = vrcp.pop %v3347
        %v3364 = vrcp.pop %v3348
        %v3365 = vrcp.pop %v3349
        %v3366 = vrcp.pop %v3350
        %v3367 = vrcp.pop %v3351
        %v3368 = vrcp.pop %v3352
        %v3369 = vrcp.pop %v3353
        %v3370 = vrcp.pop %v3354
        %v3371 = vrcp.pop %v3355
        %v3372 = vrcp.pop %v3356
        %v3373 = vrcp.pop %v3357
        %v3374 = vrcp.pop %v3358
        %v3375 = vrcp.pop %v3359
        %v3376 = vrcp.pop %v3360
        %v3377 = vmul.f32 %v3281, %v3361
        %v3378 = vmul.f32 %v3282, %v3362
        %v3379 = vmul.f32 %v3283, %v3363
        %v3380 = vmul.f32 %v3284, %v3364
        %v3381 = vmul.f32 %v3285, %v3365
        %v3382 = vmul.f32 %v3286, %v3366
        %v3383 = vmul.f32 %v3287, %v3367
        %v3384 = vmul.f32 %v3288, %v3368
        %v3385 = vmul.f32 %v3289, %v3369
        %v3386 = vmul.f32 %v3290, %v3370
        %v3387 = vmul.f32 %v3291, %v3371
        %v3388 = vmul.f32 %v3292, %v3372
        %v3389 = vmul.f32 %v3293, %v3373
        %v3390 = vmul.f32 %v3294, %v3374
        %v3391 = vmul.f32 %v3295, %v3375
        %v3392 = vmul.f32 %v3296, %v3376
        %v3393 = vpack.c.bf16 %v3379, %v3377
        %v3394 = vpack.c.bf16 %v3380, %v3378
        %v3395 = vpack.c.bf16 %v3383, %v3381
        %v3396 = vpack.c.bf16 %v3384, %v3382
        %v3397 = vpack.c.bf16 %v3387, %v3385
        %v3398 = vpack.c.bf16 %v3388, %v3386
        %v3399 = vpack.c.bf16 %v3391, %v3389
        %v3400 = vpack.c.bf16 %v3392, %v3390
        %v3401 = vld [vmem:[#allocation8] sm:$0xf]
        %v3402 = vld [vmem:[#allocation8 + $0x4] sm:$0xf]
        %v3403 = vld [vmem:[#allocation8 + $0x8] sm:$0xf]
        %v3404 = vld [vmem:[#allocation8 + $0xc] sm:$0xf]
        %v3405 = vld [vmem:[#allocation8 + $0x10] sm:$0xf]
        %v3406 = vld [vmem:[#allocation8 + $0x14] sm:$0xf]
        %v3407 = vld [vmem:[#allocation8 + $0x18] sm:$0xf]
        %v3408 = vld [vmem:[#allocation8 + $0x1c] sm:$0xf]
        %v3409 = vld [vmem:[#allocation8 + $0x20] sm:$0xf]
        %v3410 = vld [vmem:[#allocation8 + $0x24] sm:$0xf]
        %v3411 = vld [vmem:[#allocation8 + $0x28] sm:$0xf]
        %v3412 = vld [vmem:[#allocation8 + $0x2c] sm:$0xf]
        %v3413 = vld [vmem:[#allocation8 + $0x30] sm:$0xf]
        %v3414 = vld [vmem:[#allocation8 + $0x34] sm:$0xf]
        %v3415 = vld [vmem:[#allocation8 + $0x38] sm:$0xf]
        %v3416 = vld [vmem:[#allocation8 + $0x3c] sm:$0xf]
        %v3417 = vld [vmem:[#allocation8 + $0x40] sm:$0xf]
        %v3418 = vld [vmem:[#allocation8 + $0x44] sm:$0xf]
        %v3419 = vld [vmem:[#allocation8 + $0x48] sm:$0xf]
        %v3420 = vld [vmem:[#allocation8 + $0x4c] sm:$0xf]
        %v3421 = vld [vmem:[#allocation8 + $0x50] sm:$0xf]
        %v3422 = vld [vmem:[#allocation8 + $0x54] sm:$0xf]
        %v3423 = vld [vmem:[#allocation8 + $0x58] sm:$0xf]
        %v3424 = vld [vmem:[#allocation8 + $0x5c] sm:$0xf]
        %v3425 = vld [vmem:[#allocation8 + $0x60] sm:$0xf]
        %v3426 = vld [vmem:[#allocation8 + $0x64] sm:$0xf]
        %v3427 = vld [vmem:[#allocation8 + $0x68] sm:$0xf]
        %v3428 = vld [vmem:[#allocation8 + $0x6c] sm:$0xf]
        %v3429 = vld [vmem:[#allocation8 + $0x70] sm:$0xf]
        %v3430 = vld [vmem:[#allocation8 + $0x74] sm:$0xf]
        %v3431 = vld [vmem:[#allocation8 + $0x78] sm:$0xf]
        %v3432 = vld [vmem:[#allocation8 + $0x7c] sm:$0xf]
        %v3433 = vld [vmem:[#allocation5 + $0xa] sm:$0x1]
        %v3435 = vperm.slane %v3433, 0
        %v3469 = vunpack.c.l.b16 %v3401
        %v3470 = vunpack.c.l.b16 %v3402
        %v3471 = vunpack.c.l.b16 %v3403
        %v3472 = vunpack.c.l.b16 %v3404
        %v3473 = vunpack.c.l.b16 %v3405
        %v3474 = vunpack.c.l.b16 %v3406
        %v3475 = vunpack.c.l.b16 %v3407
        %v3476 = vunpack.c.l.b16 %v3408
        %v3477 = vunpack.c.l.b16 %v3409
        %v3478 = vunpack.c.l.b16 %v3410
        %v3479 = vunpack.c.l.b16 %v3411
        %v3480 = vunpack.c.l.b16 %v3412
        %v3481 = vunpack.c.l.b16 %v3413
        %v3482 = vunpack.c.l.b16 %v3414
        %v3483 = vunpack.c.l.b16 %v3415
        %v3484 = vunpack.c.l.b16 %v3416
        %v3485 = vunpack.c.l.b16 %v3417
        %v3486 = vunpack.c.l.b16 %v3418
        %v3487 = vunpack.c.l.b16 %v3419
        %v3488 = vunpack.c.l.b16 %v3420
        %v3489 = vunpack.c.l.b16 %v3421
        %v3490 = vunpack.c.l.b16 %v3422
        %v3491 = vunpack.c.l.b16 %v3423
        %v3492 = vunpack.c.l.b16 %v3424
        %v3493 = vunpack.c.l.b16 %v3425
        %v3494 = vunpack.c.l.b16 %v3426
        %v3495 = vunpack.c.l.b16 %v3427
        %v3496 = vunpack.c.l.b16 %v3428
        %v3497 = vunpack.c.l.b16 %v3429
        %v3498 = vunpack.c.l.b16 %v3430
        %v3499 = vunpack.c.l.b16 %v3431
        %v3500 = vunpack.c.l.b16 %v3432
        %v3501 = vpack.c.b16 %v3470, %v3469
        %v3502 = vpack.c.b16 %v3472, %v3471
        %v3503 = vpack.c.b16 %v3474, %v3473
        %v3504 = vpack.c.b16 %v3476, %v3475
        %v3505 = vpack.c.b16 %v3478, %v3477
        %v3506 = vpack.c.b16 %v3480, %v3479
        %v3507 = vpack.c.b16 %v3482, %v3481
        %v3508 = vpack.c.b16 %v3484, %v3483
        %v3509 = vpack.c.b16 %v3486, %v3485
        %v3510 = vpack.c.b16 %v3488, %v3487
        %v3511 = vpack.c.b16 %v3490, %v3489
        %v3512 = vpack.c.b16 %v3492, %v3491
        %v3513 = vpack.c.b16 %v3494, %v3493
        %v3514 = vpack.c.b16 %v3496, %v3495
        %v3515 = vpack.c.b16 %v3498, %v3497
        %v3516 = vpack.c.b16 %v3500, %v3499
        %3533 = vmatpush.bf16.msra.mxu0 %v3508
        %3534 = vmatpush.bf16.msra.mxu0 %v3507
        %3535 = vmatpush.bf16.msra.mxu0 %v3506
        %3536 = vmatpush.bf16.msra.mxu0 %v3505
        %3537 = vmatpush.bf16.msra.mxu0 %v3504
        %3538 = vmatpush.bf16.msra.mxu0 %v3503
        %3539 = vmatpush.bf16.msra.mxu0 %v3502
        %3540 = vmatpush.bf16.msra.mxu0 %v3501
        %3541 = vmatmul.bf16.gmra.mxu0 %v3393
        %v3542 = vpop.f32.mrf.mxu0
        %v3543 = vadd.f32 %v3435, %v3542
        %v3544 = vpop.f32.mrf.mxu0
        %v3545 = vadd.f32 %v3435, %v3544
        %3546 = vmatmul.bf16.gmra.mxu0 %v3395
        %v3547 = vpop.f32.mrf.mxu0
        %v3548 = vadd.f32 %v3435, %v3547
        %v3549 = vpop.f32.mrf.mxu0
        %v3550 = vadd.f32 %v3435, %v3549
        %3551 = vmatmul.bf16.gmra.mxu0 %v3397
        %v3552 = vpop.f32.mrf.mxu0
        %v3553 = vadd.f32 %v3435, %v3552
        %v3554 = vpop.f32.mrf.mxu0
        %v3555 = vadd.f32 %v3435, %v3554
        %3556 = vmatmul.bf16.gmra.mxu0 %v3399
        %v3557 = vpop.f32.mrf.mxu0
        %v3558 = vadd.f32 %v3435, %v3557
        %v3559 = vpop.f32.mrf.mxu0
        %v3560 = vadd.f32 %v3435, %v3559
        %3561 = vdwg.mxu0
        %3562 = vmatpush.bf16.msra.mxu0 %v3516
        %3563 = vmatpush.bf16.msra.mxu0 %v3515
        %3564 = vmatpush.bf16.msra.mxu0 %v3514
        %3565 = vmatpush.bf16.msra.mxu0 %v3513
        %3566 = vmatpush.bf16.msra.mxu0 %v3512
        %3567 = vmatpush.bf16.msra.mxu0 %v3511
        %3568 = vmatpush.bf16.msra.mxu0 %v3510
        %3569 = vmatpush.bf16.msra.mxu0 %v3509
        %3570 = vmatmul.bf16.gmra.mxu0 %v3394
        %v3571 = vpop.f32.mrf.mxu0
        %v3572 = vadd.f32 %v3543, %v3571
        %v3573 = vpop.f32.mrf.mxu0
        %v3574 = vadd.f32 %v3545, %v3573
        %3575 = vmatmul.bf16.gmra.mxu0 %v3396
        %v3576 = vpop.f32.mrf.mxu0
        %v3577 = vadd.f32 %v3548, %v3576
        %v3578 = vpop.f32.mrf.mxu0
        %v3579 = vadd.f32 %v3550, %v3578
        %3580 = vmatmul.bf16.gmra.mxu0 %v3398
        %v3581 = vpop.f32.mrf.mxu0
        %v3582 = vadd.f32 %v3553, %v3581
        %v3583 = vpop.f32.mrf.mxu0
        %v3584 = vadd.f32 %v3555, %v3583
        %3585 = vmatmul.bf16.gmra.mxu0 %v3400
        %v3586 = vpop.f32.mrf.mxu0
        %v3587 = vadd.f32 %v3558, %v3586
        %v3588 = vpop.f32.mrf.mxu0
        %v3589 = vadd.f32 %v3560, %v3588
        %3590 = vdwg.mxu0
        %v3591 = vpack.c.bf16 %v1081, %v1081
        %v3592 = vpack.c.bf16 %v1083, %v1083
        %v3593 = vpack.c.bf16 %v1086, %v1086
        %v3594 = vpack.c.bf16 %v1088, %v1088
        %v3595 = vpack.c.bf16 %v1091, %v1091
        %v3596 = vpack.c.bf16 %v1093, %v1093
        %v3597 = vpack.c.bf16 %v1096, %v1096
        %v3598 = vpack.c.bf16 %v1098, %v1098
        %v3599 = vld [vmem:[#allocation11] sm:$0xf]
        %v3600 = vld [vmem:[#allocation11 + $0x4] sm:$0xf]
        %v3601 = vld [vmem:[#allocation11 + $0x8] sm:$0xf]
        %v3602 = vld [vmem:[#allocation11 + $0xc] sm:$0xf]
        %v3603 = vld [vmem:[#allocation11 + $0x10] sm:$0xf]
        %v3604 = vld [vmem:[#allocation11 + $0x14] sm:$0xf]
        %v3605 = vld [vmem:[#allocation11 + $0x18] sm:$0xf]
        %v3606 = vld [vmem:[#allocation11 + $0x1c] sm:$0xf]
        %v3607 = vld [vmem:[#allocation11 + $0x20] sm:$0xf]
        %v3608 = vld [vmem:[#allocation11 + $0x24] sm:$0xf]
        %v3609 = vld [vmem:[#allocation11 + $0x28] sm:$0xf]
        %v3610 = vld [vmem:[#allocation11 + $0x2c] sm:$0xf]
        %v3611 = vld [vmem:[#allocation11 + $0x30] sm:$0xf]
        %v3612 = vld [vmem:[#allocation11 + $0x34] sm:$0xf]
        %v3613 = vld [vmem:[#allocation11 + $0x38] sm:$0xf]
        %v3614 = vld [vmem:[#allocation11 + $0x3c] sm:$0xf]
        %v3623 = vunpack.c.l.b16 %v3591
        %v3624 = vunpack.c.l.b16 %v3592
        %v3625 = vunpack.c.l.b16 %v3593
        %v3626 = vunpack.c.l.b16 %v3594
        %v3627 = vunpack.c.l.b16 %v3595
        %v3628 = vunpack.c.l.b16 %v3596
        %v3629 = vunpack.c.l.b16 %v3597
        %v3630 = vunpack.c.l.b16 %v3598
        %v3631 = vpack.c.b16 %v3624, %v3623
        %v3632 = vpack.c.b16 %v3626, %v3625
        %v3633 = vpack.c.b16 %v3628, %v3627
        %v3634 = vpack.c.b16 %v3630, %v3629
        %v3655 = vunpack.c.l.b16 %v3599
        %v3656 = vunpack.c.l.b16 %v3600
        %v3657 = vunpack.c.l.b16 %v3601
        %v3658 = vunpack.c.l.b16 %v3602
        %v3659 = vunpack.c.l.b16 %v3603
        %v3660 = vunpack.c.l.b16 %v3604
        %v3661 = vunpack.c.l.b16 %v3605
        %v3662 = vunpack.c.l.b16 %v3606
        %v3663 = vunpack.c.l.b16 %v3607
        %v3664 = vunpack.c.l.b16 %v3608
        %v3665 = vunpack.c.l.b16 %v3609
        %v3666 = vunpack.c.l.b16 %v3610
        %v3667 = vunpack.c.l.b16 %v3611
        %v3668 = vunpack.c.l.b16 %v3612
        %v3669 = vunpack.c.l.b16 %v3613
        %v3670 = vunpack.c.l.b16 %v3614
        %v3671 = vpack.c.b16 %v3656, %v3655
        %v3672 = vpack.c.b16 %v3658, %v3657
        %v3673 = vpack.c.b16 %v3660, %v3659
        %v3674 = vpack.c.b16 %v3662, %v3661
        %v3675 = vpack.c.b16 %v3664, %v3663
        %v3676 = vpack.c.b16 %v3666, %v3665
        %v3677 = vpack.c.b16 %v3668, %v3667
        %v3678 = vpack.c.b16 %v3670, %v3669
        %3687 = vmatpush.bf16.msra.mxu0 %v3678
        %3688 = vmatpush.bf16.msra.mxu0 %v3677
        %3689 = vmatpush.bf16.msra.mxu0 %v3676
        %3690 = vmatpush.bf16.msra.mxu0 %v3675
        %3691 = vmatpush.bf16.msra.mxu0 %v3674
        %3692 = vmatpush.bf16.msra.mxu0 %v3673
        %3693 = vmatpush.bf16.msra.mxu0 %v3672
        %3694 = vmatpush.bf16.msra.mxu0 %v3671
        %3695 = vmatmul.bf16.gmra.mxu0 %v3631
        %v3696 = vpop.f32.mrf.mxu0
        %v3697 = vadd.f32 0.0, %v3696
        %v3698 = vpop.f32.mrf.mxu0
        %v3699 = vadd.f32 0.0, %v3698
        %3700 = vmatmul.bf16.gmra.mxu0 %v3632
        %v3701 = vpop.f32.mrf.mxu0
        %v3702 = vadd.f32 0.0, %v3701
        %v3703 = vpop.f32.mrf.mxu0
        %v3704 = vadd.f32 0.0, %v3703
        %3705 = vmatmul.bf16.gmra.mxu0 %v3633
        %v3706 = vpop.f32.mrf.mxu0
        %v3707 = vadd.f32 0.0, %v3706
        %v3708 = vpop.f32.mrf.mxu0
        %v3709 = vadd.f32 0.0, %v3708
        %3710 = vmatmul.bf16.gmra.mxu0 %v3634
        %v3711 = vpop.f32.mrf.mxu0
        %v3712 = vadd.f32 0.0, %v3711
        %v3713 = vpop.f32.mrf.mxu0
        %v3714 = vadd.f32 0.0, %v3713
        %3715 = vdwg.mxu0
        %v3716 = vsub.f32 %v1081, %v3697
        %v3717 = vsub.f32 %v1083, %v3699
        %v3718 = vsub.f32 %v1086, %v3702
        %v3719 = vsub.f32 %v1088, %v3704
        %v3720 = vsub.f32 %v1091, %v3707
        %v3721 = vsub.f32 %v1093, %v3709
        %v3722 = vsub.f32 %v1096, %v3712
        %v3723 = vsub.f32 %v1098, %v3714
        %v3724 = vmul.f32 %v3716, %v3716
        %v3725 = vmul.f32 %v3717, %v3717
        %v3726 = vmul.f32 %v3718, %v3718
        %v3727 = vmul.f32 %v3719, %v3719
        %v3728 = vmul.f32 %v3720, %v3720
        %v3729 = vmul.f32 %v3721, %v3721
        %v3730 = vmul.f32 %v3722, %v3722
        %v3731 = vmul.f32 %v3723, %v3723
        %v3732 = vpack.c.bf16 %v3725, %v3724
        %v3733 = vpack.c.bf16 %v3727, %v3726
        %v3734 = vpack.c.bf16 %v3729, %v3728
        %v3735 = vpack.c.bf16 %v3731, %v3730
        %3736 = vmatpush.bf16.msra.mxu0 %v3678
        %3737 = vmatpush.bf16.msra.mxu0 %v3677
        %3738 = vmatpush.bf16.msra.mxu0 %v3676
        %3739 = vmatpush.bf16.msra.mxu0 %v3675
        %3740 = vmatpush.bf16.msra.mxu0 %v3674
        %3741 = vmatpush.bf16.msra.mxu0 %v3673
        %3742 = vmatpush.bf16.msra.mxu0 %v3672
        %3743 = vmatpush.bf16.msra.mxu0 %v3671
        %3744 = vmatmul.bf16.gmra.mxu0 %v3732
        %v3745 = vpop.f32.mrf.mxu0
        %v3746 = vadd.f32 1e-05, %v3745
        %v3747 = vpop.f32.mrf.mxu0
        %v3748 = vadd.f32 1e-05, %v3747
        %3749 = vmatmul.bf16.gmra.mxu0 %v3733
        %v3750 = vpop.f32.mrf.mxu0
        %v3751 = vadd.f32 1e-05, %v3750
        %v3752 = vpop.f32.mrf.mxu0
        %v3753 = vadd.f32 1e-05, %v3752
        %3754 = vmatmul.bf16.gmra.mxu0 %v3734
        %v3755 = vpop.f32.mrf.mxu0
        %v3756 = vadd.f32 1e-05, %v3755
        %v3757 = vpop.f32.mrf.mxu0
        %v3758 = vadd.f32 1e-05, %v3757
        %3759 = vmatmul.bf16.gmra.mxu0 %v3735
        %v3760 = vpop.f32.mrf.mxu0
        %v3761 = vadd.f32 1e-05, %v3760
        %v3762 = vpop.f32.mrf.mxu0
        %v3763 = vadd.f32 1e-05, %v3762
        %3764 = vdwg.mxu0
        %v3765 = vrsqrt.pop %v3746
        %v3766 = vmul.f32 %v3765, %v3746
        %v3767 = vmul.f32 %v3766, %v3765
        %v3768 = vmul.f32 0.5, %v3767
        %v3769 = vsub.f32 1.5, %v3768
        %v3770 = vmul.f32 %v3765, %v3769
        %vm3771 = vweird.f32 %v3746
        %vm3772 = vweird.f32 %v3765
        %vm3773 = vmor %vm3771, %vm3772
        %v3774 = vsel %vm3773, %v3765, %v3770
        %v3775 = vrsqrt.pop %v3748
        %v3776 = vmul.f32 %v3775, %v3748
        %v3777 = vmul.f32 %v3776, %v3775
        %v3778 = vmul.f32 0.5, %v3777
        %v3779 = vsub.f32 1.5, %v3778
        %v3780 = vmul.f32 %v3775, %v3779
        %vm3781 = vweird.f32 %v3748
        %vm3782 = vweird.f32 %v3775
        %vm3783 = vmor %vm3781, %vm3782
        %v3784 = vsel %vm3783, %v3775, %v3780
        %v3785 = vrsqrt.pop %v3751
        %v3786 = vmul.f32 %v3785, %v3751
        %v3787 = vmul.f32 %v3786, %v3785
        %v3788 = vmul.f32 0.5, %v3787
        %v3789 = vsub.f32 1.5, %v3788
        %v3790 = vmul.f32 %v3785, %v3789
        %vm3791 = vweird.f32 %v3751
        %vm3792 = vweird.f32 %v3785
        %vm3793 = vmor %vm3791, %vm3792
        %v3794 = vsel %vm3793, %v3785, %v3790
        %v3795 = vrsqrt.pop %v3753
        %v3796 = vmul.f32 %v3795, %v3753
        %v3797 = vmul.f32 %v3796, %v3795
        %v3798 = vmul.f32 0.5, %v3797
        %v3799 = vsub.f32 1.5, %v3798
        %v3800 = vmul.f32 %v3795, %v3799
        %vm3801 = vweird.f32 %v3753
        %vm3802 = vweird.f32 %v3795
        %vm3803 = vmor %vm3801, %vm3802
        %v3804 = vsel %vm3803, %v3795, %v3800
        %v3805 = vrsqrt.pop %v3756
        %v3806 = vmul.f32 %v3805, %v3756
        %v3807 = vmul.f32 %v3806, %v3805
        %v3808 = vmul.f32 0.5, %v3807
        %v3809 = vsub.f32 1.5, %v3808
        %v3810 = vmul.f32 %v3805, %v3809
        %vm3811 = vweird.f32 %v3756
        %vm3812 = vweird.f32 %v3805
        %vm3813 = vmor %vm3811, %vm3812
        %v3814 = vsel %vm3813, %v3805, %v3810
        %v3815 = vrsqrt.pop %v3758
        %v3816 = vmul.f32 %v3815, %v3758
        %v3817 = vmul.f32 %v3816, %v3815
        %v3818 = vmul.f32 0.5, %v3817
        %v3819 = vsub.f32 1.5, %v3818
        %v3820 = vmul.f32 %v3815, %v3819
        %vm3821 = vweird.f32 %v3758
        %vm3822 = vweird.f32 %v3815
        %vm3823 = vmor %vm3821, %vm3822
        %v3824 = vsel %vm3823, %v3815, %v3820
        %v3825 = vrsqrt.pop %v3761
        %v3826 = vmul.f32 %v3825, %v3761
        %v3827 = vmul.f32 %v3826, %v3825
        %v3828 = vmul.f32 0.5, %v3827
        %v3829 = vsub.f32 1.5, %v3828
        %v3830 = vmul.f32 %v3825, %v3829
        %vm3831 = vweird.f32 %v3761
        %vm3832 = vweird.f32 %v3825
        %vm3833 = vmor %vm3831, %vm3832
        %v3834 = vsel %vm3833, %v3825, %v3830
        %v3835 = vrsqrt.pop %v3763
        %v3836 = vmul.f32 %v3835, %v3763
        %v3837 = vmul.f32 %v3836, %v3835
        %v3838 = vmul.f32 0.5, %v3837
        %v3839 = vsub.f32 1.5, %v3838
        %v3840 = vmul.f32 %v3835, %v3839
        %vm3841 = vweird.f32 %v3763
        %vm3842 = vweird.f32 %v3835
        %vm3843 = vmor %vm3841, %vm3842
        %v3844 = vsel %vm3843, %v3835, %v3840
        %v3845 = vmul.f32 %v3716, %v3774
        %v3846 = vmul.f32 %v3717, %v3784
        %v3847 = vmul.f32 %v3718, %v3794
        %v3848 = vmul.f32 %v3719, %v3804
        %v3849 = vmul.f32 %v3720, %v3814
        %v3850 = vmul.f32 %v3721, %v3824
        %v3851 = vmul.f32 %v3722, %v3834
        %v3852 = vmul.f32 %v3723, %v3844
        %v3853 = vld [vmem:[#allocation5 + $0xb] sm:$0x1]
        %v3855 = vperm.slane %v3853, 0
        %v3857 = vmul.f32 %v3845, %v3855
        %v3858 = vmul.f32 %v3846, %v3855
        %v3859 = vmul.f32 %v3847, %v3855
        %v3860 = vmul.f32 %v3848, %v3855
        %v3861 = vmul.f32 %v3849, %v3855
        %v3862 = vmul.f32 %v3850, %v3855
        %v3863 = vmul.f32 %v3851, %v3855
        %v3864 = vmul.f32 %v3852, %v3855
        %v3865 = vld [vmem:[#allocation5 + $0xc] sm:$0x1]
        %v3867 = vperm.slane %v3865, 0
        %v3869 = vadd.f32 %v3857, %v3867
        %v3870 = vadd.f32 %v3858, %v3867
        %v3871 = vadd.f32 %v3859, %v3867
        %v3872 = vadd.f32 %v3860, %v3867
        %v3873 = vadd.f32 %v3861, %v3867
        %v3874 = vadd.f32 %v3862, %v3867
        %v3875 = vadd.f32 %v3863, %v3867
        %v3876 = vadd.f32 %v3864, %v3867
        %v3877 = vsub.f32 0.0, %v3869
        %v3878 = vsub.f32 0.0, %v3870
        %v3879 = vsub.f32 0.0, %v3871
        %v3880 = vsub.f32 0.0, %v3872
        %v3881 = vsub.f32 0.0, %v3873
        %v3882 = vsub.f32 0.0, %v3874
        %v3883 = vsub.f32 0.0, %v3875
        %v3884 = vsub.f32 0.0, %v3876
        %v3885 = vmul.f32 %v3877, 1.442695
        %v3886 = vpow.pop %v3885
        %v3887 = vmul.f32 %v3878, 1.442695
        %v3888 = vpow.pop %v3887
        %v3889 = vmul.f32 %v3879, 1.442695
        %v3890 = vpow.pop %v3889
        %v3891 = vmul.f32 %v3880, 1.442695
        %v3892 = vpow.pop %v3891
        %v3893 = vmul.f32 %v3881, 1.442695
        %v3894 = vpow.pop %v3893
        %v3895 = vmul.f32 %v3882, 1.442695
        %v3896 = vpow.pop %v3895
        %v3897 = vmul.f32 %v3883, 1.442695
        %v3898 = vpow.pop %v3897
        %v3899 = vmul.f32 %v3884, 1.442695
        %v3900 = vpow.pop %v3899
        %v3901 = vadd.f32 %v3886, 1.0
        %v3902 = vadd.f32 %v3888, 1.0
        %v3903 = vadd.f32 %v3890, 1.0
        %v3904 = vadd.f32 %v3892, 1.0
        %v3905 = vadd.f32 %v3894, 1.0
        %v3906 = vadd.f32 %v3896, 1.0
        %v3907 = vadd.f32 %v3898, 1.0
        %v3908 = vadd.f32 %v3900, 1.0
        %v3909 = vrcp.pop %v3901
        %v3910 = vrcp.pop %v3902
        %v3911 = vrcp.pop %v3903
        %v3912 = vrcp.pop %v3904
        %v3913 = vrcp.pop %v3905
        %v3914 = vrcp.pop %v3906
        %v3915 = vrcp.pop %v3907
        %v3916 = vrcp.pop %v3908
        %v3917 = vmul.f32 %v3869, %v3909
        %v3918 = vmul.f32 %v3870, %v3910
        %v3919 = vmul.f32 %v3871, %v3911
        %v3920 = vmul.f32 %v3872, %v3912
        %v3921 = vmul.f32 %v3873, %v3913
        %v3922 = vmul.f32 %v3874, %v3914
        %v3923 = vmul.f32 %v3875, %v3915
        %v3924 = vmul.f32 %v3876, %v3916
        %v3925 = vpack.c.bf16 %v3917, %v3917
        %v3926 = vpack.c.bf16 %v3918, %v3918
        %v3927 = vpack.c.bf16 %v3919, %v3919
        %v3928 = vpack.c.bf16 %v3920, %v3920
        %v3929 = vpack.c.bf16 %v3921, %v3921
        %v3930 = vpack.c.bf16 %v3922, %v3922
        %v3931 = vpack.c.bf16 %v3923, %v3923
        %v3932 = vpack.c.bf16 %v3924, %v3924
        %v3933 = vpack.c.bf16 %v3572, %v3572
        %v3934 = vpack.c.bf16 %v3574, %v3574
        %v3935 = vpack.c.bf16 %v3577, %v3577
        %v3936 = vpack.c.bf16 %v3579, %v3579
        %v3937 = vpack.c.bf16 %v3582, %v3582
        %v3938 = vpack.c.bf16 %v3584, %v3584
        %v3939 = vpack.c.bf16 %v3587, %v3587
        %v3940 = vpack.c.bf16 %v3589, %v3589
        %v3949 = vunpack.c.l.b16 %v3925
        %v3950 = vunpack.c.l.b16 %v3926
        %v3951 = vunpack.c.l.b16 %v3927
        %v3952 = vunpack.c.l.b16 %v3928
        %v3953 = vunpack.c.l.b16 %v3929
        %v3954 = vunpack.c.l.b16 %v3930
        %v3955 = vunpack.c.l.b16 %v3931
        %v3956 = vunpack.c.l.b16 %v3932
        %v3957 = vpack.c.b16 %v3950, %v3949
        %v3958 = vpack.c.b16 %v3952, %v3951
        %v3959 = vpack.c.b16 %v3954, %v3953
        %v3960 = vpack.c.b16 %v3956, %v3955
        %v3973 = vunpack.c.l.b16 %v3933
        %v3974 = vunpack.c.l.b16 %v3934
        %v3975 = vunpack.c.l.b16 %v3935
        %v3976 = vunpack.c.l.b16 %v3936
        %v3977 = vunpack.c.l.b16 %v3937
        %v3978 = vunpack.c.l.b16 %v3938
        %v3979 = vunpack.c.l.b16 %v3939
        %v3980 = vunpack.c.l.b16 %v3940
        %v3981 = vpack.c.b16 %v3974, %v3973
        %v3982 = vpack.c.b16 %v3976, %v3975
        %v3983 = vpack.c.b16 %v3978, %v3977
        %v3984 = vpack.c.b16 %v3980, %v3979
        %v3989 = vld [vmem:[%s6] sm:$0xf]
        %v3990 = vld [vmem:[%s6 + $0x4] sm:$0xf]
        %v3991 = vld [vmem:[%s6 + $0x8] sm:$0xf]
        %v3992 = vld [vmem:[%s6 + $0xc] sm:$0xf]
        %v3993 = vld [vmem:[%s6 + $0x10] sm:$0xf]
        %v3994 = vld [vmem:[%s6 + $0x14] sm:$0xf]
        %v3995 = vld [vmem:[%s6 + $0x18] sm:$0xf]
        %v3996 = vld [vmem:[%s6 + $0x1c] sm:$0xf]
        %v3997 = vld [vmem:[%s6 + $0x20] sm:$0xf]
        %v3998 = vld [vmem:[%s6 + $0x24] sm:$0xf]
        %v3999 = vld [vmem:[%s6 + $0x28] sm:$0xf]
        %v4000 = vld [vmem:[%s6 + $0x2c] sm:$0xf]
        %v4001 = vld [vmem:[%s6 + $0x30] sm:$0xf]
        %v4002 = vld [vmem:[%s6 + $0x34] sm:$0xf]
        %v4003 = vld [vmem:[%s6 + $0x38] sm:$0xf]
        %v4004 = vld [vmem:[%s6 + $0x3c] sm:$0xf]
        %v4005 = vld [vmem:[%s6 + $0x40] sm:$0xf]
        %v4006 = vld [vmem:[%s6 + $0x44] sm:$0xf]
        %v4007 = vld [vmem:[%s6 + $0x48] sm:$0xf]
        %v4008 = vld [vmem:[%s6 + $0x4c] sm:$0xf]
        %v4009 = vld [vmem:[%s6 + $0x50] sm:$0xf]
        %v4010 = vld [vmem:[%s6 + $0x54] sm:$0xf]
        %v4011 = vld [vmem:[%s6 + $0x58] sm:$0xf]
        %v4012 = vld [vmem:[%s6 + $0x5c] sm:$0xf]
        %v4013 = vld [vmem:[%s6 + $0x60] sm:$0xf]
        %v4014 = vld [vmem:[%s6 + $0x64] sm:$0xf]
        %v4015 = vld [vmem:[%s6 + $0x68] sm:$0xf]
        %v4016 = vld [vmem:[%s6 + $0x6c] sm:$0xf]
        %v4017 = vld [vmem:[%s6 + $0x70] sm:$0xf]
        %v4018 = vld [vmem:[%s6 + $0x74] sm:$0xf]
        %v4019 = vld [vmem:[%s6 + $0x78] sm:$0xf]
        %v4020 = vld [vmem:[%s6 + $0x7c] sm:$0xf]
        %v4021 = vld [vmem:[#allocation5 + $0xd] sm:$0x1]
        %v4023 = vperm.slane %v4021, 0
        %v4057 = vunpack.c.l.b16 %v3989
        %v4058 = vunpack.c.l.b16 %v3990
        %v4059 = vunpack.c.l.b16 %v3991
        %v4060 = vunpack.c.l.b16 %v3992
        %v4061 = vunpack.c.l.b16 %v3993
        %v4062 = vunpack.c.l.b16 %v3994
        %v4063 = vunpack.c.l.b16 %v3995
        %v4064 = vunpack.c.l.b16 %v3996
        %v4065 = vunpack.c.l.b16 %v3997
        %v4066 = vunpack.c.l.b16 %v3998
        %v4067 = vunpack.c.l.b16 %v3999
        %v4068 = vunpack.c.l.b16 %v4000
        %v4069 = vunpack.c.l.b16 %v4001
        %v4070 = vunpack.c.l.b16 %v4002
        %v4071 = vunpack.c.l.b16 %v4003
        %v4072 = vunpack.c.l.b16 %v4004
        %v4073 = vunpack.c.l.b16 %v4005
        %v4074 = vunpack.c.l.b16 %v4006
        %v4075 = vunpack.c.l.b16 %v4007
        %v4076 = vunpack.c.l.b16 %v4008
        %v4077 = vunpack.c.l.b16 %v4009
        %v4078 = vunpack.c.l.b16 %v4010
        %v4079 = vunpack.c.l.b16 %v4011
        %v4080 = vunpack.c.l.b16 %v4012
        %v4081 = vunpack.c.l.b16 %v4013
        %v4082 = vunpack.c.l.b16 %v4014
        %v4083 = vunpack.c.l.b16 %v4015
        %v4084 = vunpack.c.l.b16 %v4016
        %v4085 = vunpack.c.l.b16 %v4017
        %v4086 = vunpack.c.l.b16 %v4018
        %v4087 = vunpack.c.l.b16 %v4019
        %v4088 = vunpack.c.l.b16 %v4020
        %v4089 = vpack.c.b16 %v4058, %v4057
        %v4090 = vpack.c.b16 %v4060, %v4059
        %v4091 = vpack.c.b16 %v4062, %v4061
        %v4092 = vpack.c.b16 %v4064, %v4063
        %v4093 = vpack.c.b16 %v4066, %v4065
        %v4094 = vpack.c.b16 %v4068, %v4067
        %v4095 = vpack.c.b16 %v4070, %v4069
        %v4096 = vpack.c.b16 %v4072, %v4071
        %v4097 = vpack.c.b16 %v4074, %v4073
        %v4098 = vpack.c.b16 %v4076, %v4075
        %v4099 = vpack.c.b16 %v4078, %v4077
        %v4100 = vpack.c.b16 %v4080, %v4079
        %v4101 = vpack.c.b16 %v4082, %v4081
        %v4102 = vpack.c.b16 %v4084, %v4083
        %v4103 = vpack.c.b16 %v4086, %v4085
        %v4104 = vpack.c.b16 %v4088, %v4087
        %4121 = vmatpush.bf16.msra.mxu0 %v4096
        %4122 = vmatpush.bf16.msra.mxu0 %v4095
        %4123 = vmatpush.bf16.msra.mxu0 %v4094
        %4124 = vmatpush.bf16.msra.mxu0 %v4093
        %4125 = vmatpush.bf16.msra.mxu0 %v4092
        %4126 = vmatpush.bf16.msra.mxu0 %v4091
        %4127 = vmatpush.bf16.msra.mxu0 %v4090
        %4128 = vmatpush.bf16.msra.mxu0 %v4089
        %4129 = vmatmul.bf16.gmra.mxu0 %v3957
        %v4130 = vpop.f32.mrf.mxu0
        %v4131 = vadd.f32 %v4023, %v4130
        %v4132 = vpop.f32.mrf.mxu0
        %v4133 = vadd.f32 %v4023, %v4132
        %4134 = vmatmul.bf16.gmra.mxu0 %v3958
        %v4135 = vpop.f32.mrf.mxu0
        %v4136 = vadd.f32 %v4023, %v4135
        %v4137 = vpop.f32.mrf.mxu0
        %v4138 = vadd.f32 %v4023, %v4137
        %4139 = vmatmul.bf16.gmra.mxu0 %v3959
        %v4140 = vpop.f32.mrf.mxu0
        %v4141 = vadd.f32 %v4023, %v4140
        %v4142 = vpop.f32.mrf.mxu0
        %v4143 = vadd.f32 %v4023, %v4142
        %4144 = vmatmul.bf16.gmra.mxu0 %v3960
        %v4145 = vpop.f32.mrf.mxu0
        %v4146 = vadd.f32 %v4023, %v4145
        %v4147 = vpop.f32.mrf.mxu0
        %v4148 = vadd.f32 %v4023, %v4147
        %4149 = vdwg.mxu0
        %4150 = vmatpush.bf16.msra.mxu0 %v4104
        %4151 = vmatpush.bf16.msra.mxu0 %v4103
        %4152 = vmatpush.bf16.msra.mxu0 %v4102
        %4153 = vmatpush.bf16.msra.mxu0 %v4101
        %4154 = vmatpush.bf16.msra.mxu0 %v4100
        %4155 = vmatpush.bf16.msra.mxu0 %v4099
        %4156 = vmatpush.bf16.msra.mxu0 %v4098
        %4157 = vmatpush.bf16.msra.mxu0 %v4097
        %4158 = vmatmul.bf16.gmra.mxu0 %v3981
        %v4159 = vpop.f32.mrf.mxu0
        %v4160 = vadd.f32 %v4131, %v4159
        %v4161 = vpop.f32.mrf.mxu0
        %v4162 = vadd.f32 %v4133, %v4161
        %4163 = vmatmul.bf16.gmra.mxu0 %v3982
        %v4164 = vpop.f32.mrf.mxu0
        %v4165 = vadd.f32 %v4136, %v4164
        %v4166 = vpop.f32.mrf.mxu0
        %v4167 = vadd.f32 %v4138, %v4166
        %4168 = vmatmul.bf16.gmra.mxu0 %v3983
        %v4169 = vpop.f32.mrf.mxu0
        %v4170 = vadd.f32 %v4141, %v4169
        %v4171 = vpop.f32.mrf.mxu0
        %v4172 = vadd.f32 %v4143, %v4171
        %4173 = vmatmul.bf16.gmra.mxu0 %v3984
        %v4174 = vpop.f32.mrf.mxu0
        %v4175 = vadd.f32 %v4146, %v4174
        %v4176 = vpop.f32.mrf.mxu0
        %v4177 = vadd.f32 %v4148, %v4176
        %4178 = vdwg.mxu0
        %v4179 = vpack.c.bf16 %v4162, %v4160
        %v4180 = vpack.c.bf16 %v4167, %v4165
        %v4181 = vpack.c.bf16 %v4172, %v4170
        %v4182 = vpack.c.bf16 %v4177, %v4175
        %v4183 = vld [vmem:[#allocation13] sm:$0xf]
        %v4184 = vld [vmem:[#allocation13 + $0x4] sm:$0xf]
        %v4185 = vld [vmem:[#allocation13 + $0x8] sm:$0xf]
        %v4186 = vld [vmem:[#allocation13 + $0xc] sm:$0xf]
        %v4187 = vld [vmem:[#allocation13 + $0x10] sm:$0xf]
        %v4188 = vld [vmem:[#allocation13 + $0x14] sm:$0xf]
        %v4189 = vld [vmem:[#allocation13 + $0x18] sm:$0xf]
        %v4190 = vld [vmem:[#allocation13 + $0x1c] sm:$0xf]
        %v4199 = vunpack.c.l.b16 %v4183
        %v4200 = vunpack.c.l.b16 %v4184
        %v4201 = vunpack.c.l.b16 %v4185
        %v4202 = vunpack.c.l.b16 %v4186
        %v4203 = vunpack.c.l.b16 %v4187
        %v4204 = vunpack.c.l.b16 %v4188
        %v4205 = vunpack.c.l.b16 %v4189
        %v4206 = vunpack.c.l.b16 %v4190
        %v4207 = vpack.c.b16 %v4200, %v4199
        %v4208 = vpack.c.b16 %v4202, %v4201
        %v4209 = vpack.c.b16 %v4204, %v4203
        %v4210 = vpack.c.b16 %v4206, %v4205
        %vm4215 = vcmask 523264
        %v4217 = vsel %vm4215, %v4179, 0
        %v4220 = vsel %vm4215, %v4180, 0
        %v4223 = vsel %vm4215, %v4181, 0
        %v4226 = vsel %vm4215, %v4182, 0
        %4228 = vmatpush.bf16.msra.mxu0 0
        %4229 = vmatpush.bf16.msra.mxu0 0
        %4230 = vmatpush.bf16.msra.mxu0 0
        %4231 = vmatpush.bf16.msra.mxu0 0
        %4232 = vmatpush.bf16.msra.mxu0 %v4210
        %4233 = vmatpush.bf16.msra.mxu0 %v4209
        %4234 = vmatpush.bf16.msra.mxu0 %v4208
        %4235 = vmatpush.bf16.msra.mxu0 %v4207
        %4236 = vmatmul.bf16.gmra.mxu0 %v4217
        %v4237 = vpop.f32.mrf.mxu0
        %v4238 = vadd.f32 0.0, %v4237
        %v4239 = vpop.f32.mrf.mxu0
        %v4240 = vadd.f32 0.0, %v4239
        %4241 = vmatmul.bf16.gmra.mxu0 %v4220
        %v4242 = vpop.f32.mrf.mxu0
        %v4243 = vadd.f32 0.0, %v4242
        %v4244 = vpop.f32.mrf.mxu0
        %v4245 = vadd.f32 0.0, %v4244
        %4246 = vmatmul.bf16.gmra.mxu0 %v4223
        %v4247 = vpop.f32.mrf.mxu0
        %v4248 = vadd.f32 0.0, %v4247
        %v4249 = vpop.f32.mrf.mxu0
        %v4250 = vadd.f32 0.0, %v4249
        %4251 = vmatmul.bf16.gmra.mxu0 %v4226
        %v4252 = vpop.f32.mrf.mxu0
        %v4253 = vadd.f32 0.0, %v4252
        %v4254 = vpop.f32.mrf.mxu0
        %v4255 = vadd.f32 0.0, %v4254
        %4256 = vdwg.mxu0
        %v4257 = vsub.f32 %v4160, %v4238
        %v4258 = vsub.f32 %v4162, %v4240
        %v4259 = vsub.f32 %v4165, %v4243
        %v4260 = vsub.f32 %v4167, %v4245
        %v4261 = vsub.f32 %v4170, %v4248
        %v4262 = vsub.f32 %v4172, %v4250
        %v4263 = vsub.f32 %v4175, %v4253
        %v4264 = vsub.f32 %v4177, %v4255
        %v4265 = vmul.f32 %v4257, %v4257
        %v4266 = vmul.f32 %v4258, %v4258
        %v4267 = vmul.f32 %v4259, %v4259
        %v4268 = vmul.f32 %v4260, %v4260
        %v4269 = vmul.f32 %v4261, %v4261
        %v4270 = vmul.f32 %v4262, %v4262
        %v4271 = vmul.f32 %v4263, %v4263
        %v4272 = vmul.f32 %v4264, %v4264
        %v4273 = vpack.c.bf16 %v4266, %v4265
        %v4274 = vpack.c.bf16 %v4268, %v4267
        %v4275 = vpack.c.bf16 %v4270, %v4269
        %v4276 = vpack.c.bf16 %v4272, %v4271
        %v4278 = vsel %vm4215, %v4273, 0
        %v4281 = vsel %vm4215, %v4274, 0
        %v4284 = vsel %vm4215, %v4275, 0
        %v4287 = vsel %vm4215, %v4276, 0
        %4289 = vmatpush.bf16.msra.mxu0 0
        %4290 = vmatpush.bf16.msra.mxu0 0
        %4291 = vmatpush.bf16.msra.mxu0 0
        %4292 = vmatpush.bf16.msra.mxu0 0
        %4293 = vmatpush.bf16.msra.mxu0 %v4210
        %4294 = vmatpush.bf16.msra.mxu0 %v4209
        %4295 = vmatpush.bf16.msra.mxu0 %v4208
        %4296 = vmatpush.bf16.msra.mxu0 %v4207
        %4297 = vmatmul.bf16.gmra.mxu0 %v4278
        %v4298 = vpop.f32.mrf.mxu0
        %v4299 = vadd.f32 1e-05, %v4298
        %v4300 = vpop.f32.mrf.mxu0
        %v4301 = vadd.f32 1e-05, %v4300
        %4302 = vmatmul.bf16.gmra.mxu0 %v4281
        %v4303 = vpop.f32.mrf.mxu0
        %v4304 = vadd.f32 1e-05, %v4303
        %v4305 = vpop.f32.mrf.mxu0
        %v4306 = vadd.f32 1e-05, %v4305
        %4307 = vmatmul.bf16.gmra.mxu0 %v4284
        %v4308 = vpop.f32.mrf.mxu0
        %v4309 = vadd.f32 1e-05, %v4308
        %v4310 = vpop.f32.mrf.mxu0
        %v4311 = vadd.f32 1e-05, %v4310
        %4312 = vmatmul.bf16.gmra.mxu0 %v4287
        %v4313 = vpop.f32.mrf.mxu0
        %v4314 = vadd.f32 1e-05, %v4313
        %v4315 = vpop.f32.mrf.mxu0
        %v4316 = vadd.f32 1e-05, %v4315
        %4317 = vdwg.mxu0
        %v4318 = vrsqrt.pop %v4299
        %v4319 = vmul.f32 %v4318, %v4299
        %v4320 = vmul.f32 %v4319, %v4318
        %v4321 = vmul.f32 0.5, %v4320
        %v4322 = vsub.f32 1.5, %v4321
        %v4323 = vmul.f32 %v4318, %v4322
        %vm4324 = vweird.f32 %v4299
        %vm4325 = vweird.f32 %v4318
        %vm4326 = vmor %vm4324, %vm4325
        %v4327 = vsel %vm4326, %v4318, %v4323
        %v4328 = vrsqrt.pop %v4301
        %v4329 = vmul.f32 %v4328, %v4301
        %v4330 = vmul.f32 %v4329, %v4328
        %v4331 = vmul.f32 0.5, %v4330
        %v4332 = vsub.f32 1.5, %v4331
        %v4333 = vmul.f32 %v4328, %v4332
        %vm4334 = vweird.f32 %v4301
        %vm4335 = vweird.f32 %v4328
        %vm4336 = vmor %vm4334, %vm4335
        %v4337 = vsel %vm4336, %v4328, %v4333
        %v4338 = vrsqrt.pop %v4304
        %v4339 = vmul.f32 %v4338, %v4304
        %v4340 = vmul.f32 %v4339, %v4338
        %v4341 = vmul.f32 0.5, %v4340
        %v4342 = vsub.f32 1.5, %v4341
        %v4343 = vmul.f32 %v4338, %v4342
        %vm4344 = vweird.f32 %v4304
        %vm4345 = vweird.f32 %v4338
        %vm4346 = vmor %vm4344, %vm4345
        %v4347 = vsel %vm4346, %v4338, %v4343
        %v4348 = vrsqrt.pop %v4306
        %v4349 = vmul.f32 %v4348, %v4306
        %v4350 = vmul.f32 %v4349, %v4348
        %v4351 = vmul.f32 0.5, %v4350
        %v4352 = vsub.f32 1.5, %v4351
        %v4353 = vmul.f32 %v4348, %v4352
        %vm4354 = vweird.f32 %v4306
        %vm4355 = vweird.f32 %v4348
        %vm4356 = vmor %vm4354, %vm4355
        %v4357 = vsel %vm4356, %v4348, %v4353
        %v4358 = vrsqrt.pop %v4309
        %v4359 = vmul.f32 %v4358, %v4309
        %v4360 = vmul.f32 %v4359, %v4358
        %v4361 = vmul.f32 0.5, %v4360
        %v4362 = vsub.f32 1.5, %v4361
        %v4363 = vmul.f32 %v4358, %v4362
        %vm4364 = vweird.f32 %v4309
        %vm4365 = vweird.f32 %v4358
        %vm4366 = vmor %vm4364, %vm4365
        %v4367 = vsel %vm4366, %v4358, %v4363
        %v4368 = vrsqrt.pop %v4311
        %v4369 = vmul.f32 %v4368, %v4311
        %v4370 = vmul.f32 %v4369, %v4368
        %v4371 = vmul.f32 0.5, %v4370
        %v4372 = vsub.f32 1.5, %v4371
        %v4373 = vmul.f32 %v4368, %v4372
        %vm4374 = vweird.f32 %v4311
        %vm4375 = vweird.f32 %v4368
        %vm4376 = vmor %vm4374, %vm4375
        %v4377 = vsel %vm4376, %v4368, %v4373
        %v4378 = vrsqrt.pop %v4314
        %v4379 = vmul.f32 %v4378, %v4314
        %v4380 = vmul.f32 %v4379, %v4378
        %v4381 = vmul.f32 0.5, %v4380
        %v4382 = vsub.f32 1.5, %v4381
        %v4383 = vmul.f32 %v4378, %v4382
        %vm4384 = vweird.f32 %v4314
        %vm4385 = vweird.f32 %v4378
        %vm4386 = vmor %vm4384, %vm4385
        %v4387 = vsel %vm4386, %v4378, %v4383
        %v4388 = vrsqrt.pop %v4316
        %v4389 = vmul.f32 %v4388, %v4316
        %v4390 = vmul.f32 %v4389, %v4388
        %v4391 = vmul.f32 0.5, %v4390
        %v4392 = vsub.f32 1.5, %v4391
        %v4393 = vmul.f32 %v4388, %v4392
        %vm4394 = vweird.f32 %v4316
        %vm4395 = vweird.f32 %v4388
        %vm4396 = vmor %vm4394, %vm4395
        %v4397 = vsel %vm4396, %v4388, %v4393
        %v4398 = vmul.f32 %v4257, %v4327
        %v4399 = vmul.f32 %v4258, %v4337
        %v4400 = vmul.f32 %v4259, %v4347
        %v4401 = vmul.f32 %v4260, %v4357
        %v4402 = vmul.f32 %v4261, %v4367
        %v4403 = vmul.f32 %v4262, %v4377
        %v4404 = vmul.f32 %v4263, %v4387
        %v4405 = vmul.f32 %v4264, %v4397
        %v4406 = vld [vmem:[#allocation5 + $0xe] sm:$0x1]
        %v4408 = vperm.slane %v4406, 0
        %v4410 = vmul.f32 %v4398, %v4408
        %v4411 = vmul.f32 %v4399, %v4408
        %v4412 = vmul.f32 %v4400, %v4408
        %v4413 = vmul.f32 %v4401, %v4408
        %v4414 = vmul.f32 %v4402, %v4408
        %v4415 = vmul.f32 %v4403, %v4408
        %v4416 = vmul.f32 %v4404, %v4408
        %v4417 = vmul.f32 %v4405, %v4408
        %v4418 = vld [vmem:[#allocation5 + $0xf] sm:$0x1]
        %v4420 = vperm.slane %v4418, 0
        %v4422 = vadd.f32 %v4410, %v4420
        %v4423 = vadd.f32 %v4411, %v4420
        %v4424 = vadd.f32 %v4412, %v4420
        %v4425 = vadd.f32 %v4413, %v4420
        %v4426 = vadd.f32 %v4414, %v4420
        %v4427 = vadd.f32 %v4415, %v4420
        %v4428 = vadd.f32 %v4416, %v4420
        %v4429 = vadd.f32 %v4417, %v4420
        %v4430 = vsub.f32 0.0, %v4422
        %v4431 = vsub.f32 0.0, %v4423
        %v4432 = vsub.f32 0.0, %v4424
        %v4433 = vsub.f32 0.0, %v4425
        %v4434 = vsub.f32 0.0, %v4426
        %v4435 = vsub.f32 0.0, %v4427
        %v4436 = vsub.f32 0.0, %v4428
        %v4437 = vsub.f32 0.0, %v4429
        %v4438 = vmul.f32 %v4430, 1.442695
        %v4439 = vpow.pop %v4438
        %v4440 = vmul.f32 %v4431, 1.442695
        %v4441 = vpow.pop %v4440
        %v4442 = vmul.f32 %v4432, 1.442695
        %v4443 = vpow.pop %v4442
        %v4444 = vmul.f32 %v4433, 1.442695
        %v4445 = vpow.pop %v4444
        %v4446 = vmul.f32 %v4434, 1.442695
        %v4447 = vpow.pop %v4446
        %v4448 = vmul.f32 %v4435, 1.442695
        %v4449 = vpow.pop %v4448
        %v4450 = vmul.f32 %v4436, 1.442695
        %v4451 = vpow.pop %v4450
        %v4452 = vmul.f32 %v4437, 1.442695
        %v4453 = vpow.pop %v4452
        %v4454 = vadd.f32 %v4439, 1.0
        %v4455 = vadd.f32 %v4441, 1.0
        %v4456 = vadd.f32 %v4443, 1.0
        %v4457 = vadd.f32 %v4445, 1.0
        %v4458 = vadd.f32 %v4447, 1.0
        %v4459 = vadd.f32 %v4449, 1.0
        %v4460 = vadd.f32 %v4451, 1.0
        %v4461 = vadd.f32 %v4453, 1.0
        %v4462 = vrcp.pop %v4454
        %v4463 = vrcp.pop %v4455
        %v4464 = vrcp.pop %v4456
        %v4465 = vrcp.pop %v4457
        %v4466 = vrcp.pop %v4458
        %v4467 = vrcp.pop %v4459
        %v4468 = vrcp.pop %v4460
        %v4469 = vrcp.pop %v4461
        %v4470 = vmul.f32 %v4422, %v4462
        %v4471 = vmul.f32 %v4423, %v4463
        %v4472 = vmul.f32 %v4424, %v4464
        %v4473 = vmul.f32 %v4425, %v4465
        %v4474 = vmul.f32 %v4426, %v4466
        %v4475 = vmul.f32 %v4427, %v4467
        %v4476 = vmul.f32 %v4428, %v4468
        %v4477 = vmul.f32 %v4429, %v4469
        %v4478 = vpack.c.bf16 %v4470, %v4470
        %v4479 = vpack.c.bf16 %v4471, %v4471
        %v4480 = vpack.c.bf16 %v4472, %v4472
        %v4481 = vpack.c.bf16 %v4473, %v4473
        %v4482 = vpack.c.bf16 %v4474, %v4474
        %v4483 = vpack.c.bf16 %v4475, %v4475
        %v4484 = vpack.c.bf16 %v4476, %v4476
        %v4485 = vpack.c.bf16 %v4477, %v4477
        %v4494 = vunpack.c.l.b16 %v4478
        %v4495 = vunpack.c.l.b16 %v4479
        %v4496 = vunpack.c.l.b16 %v4480
        %v4497 = vunpack.c.l.b16 %v4481
        %v4498 = vunpack.c.l.b16 %v4482
        %v4499 = vunpack.c.l.b16 %v4483
        %v4500 = vunpack.c.l.b16 %v4484
        %v4501 = vunpack.c.l.b16 %v4485
        %v4502 = vpack.c.b16 %v4495, %v4494
        %v4503 = vpack.c.b16 %v4497, %v4496
        %v4504 = vpack.c.b16 %v4499, %v4498
        %v4505 = vpack.c.b16 %v4501, %v4500
        %v4508 = vsel %vm4215, %v4502, 0
        %v4511 = vsel %vm4215, %v4503, 0
        %v4514 = vsel %vm4215, %v4504, 0
        %v4517 = vsel %vm4215, %v4505, 0
        %v4519 = vld [vmem:[%s7] sm:$0xf]
        %v4520 = vld [vmem:[%s7 + $0x4] sm:$0xf]
        %v4521 = vld [vmem:[%s7 + $0x8] sm:$0xf]
        %v4522 = vld [vmem:[%s7 + $0xc] sm:$0xf]
        %v4523 = vld [vmem:[%s7 + $0x10] sm:$0xf]
        %v4524 = vld [vmem:[%s7 + $0x14] sm:$0xf]
        %v4525 = vld [vmem:[%s7 + $0x18] sm:$0xf]
        %v4526 = vld [vmem:[%s7 + $0x1c] sm:$0xf]
        %v4527 = vld [vmem:[%s7 + $0x20] sm:$0xf]
        %v4528 = vld [vmem:[%s7 + $0x24] sm:$0xf]
        %v4529 = vld [vmem:[%s7 + $0x28] sm:$0xf]
        %v4530 = vld [vmem:[%s7 + $0x2c] sm:$0xf]
        %v4531 = vld [vmem:[%s7 + $0x30] sm:$0xf]
        %v4532 = vld [vmem:[%s7 + $0x34] sm:$0xf]
        %v4533 = vld [vmem:[%s7 + $0x38] sm:$0xf]
        %v4534 = vld [vmem:[%s7 + $0x3c] sm:$0xf]
        %v4535 = vld [vmem:[%s7 + $0x40] sm:$0xf]
        %v4536 = vld [vmem:[%s7 + $0x44] sm:$0xf]
        %v4537 = vld [vmem:[%s7 + $0x48] sm:$0xf]
        %v4538 = vld [vmem:[%s7 + $0x4c] sm:$0xf]
        %v4539 = vld [vmem:[%s7 + $0x50] sm:$0xf]
        %v4540 = vld [vmem:[%s7 + $0x54] sm:$0xf]
        %v4541 = vld [vmem:[%s7 + $0x58] sm:$0xf]
        %v4542 = vld [vmem:[%s7 + $0x5c] sm:$0xf]
        %v4543 = vld [vmem:[%s7 + $0x60] sm:$0xf]
        %v4544 = vld [vmem:[%s7 + $0x64] sm:$0xf]
        %v4545 = vld [vmem:[%s7 + $0x68] sm:$0xf]
        %v4546 = vld [vmem:[%s7 + $0x6c] sm:$0xf]
        %v4547 = vld [vmem:[%s7 + $0x70] sm:$0xf]
        %v4548 = vld [vmem:[%s7 + $0x74] sm:$0xf]
        %v4549 = vld [vmem:[%s7 + $0x78] sm:$0xf]
        %v4550 = vld [vmem:[%s7 + $0x7c] sm:$0xf]
        %v4551 = vld [vmem:[#allocation5 + $0x10] sm:$0x1]
        %v4553 = vperm.slane %v4551, 0
        %v4587 = vunpack.c.l.b16 %v4519
        %v4588 = vunpack.c.l.b16 %v4520
        %v4589 = vunpack.c.l.b16 %v4521
        %v4590 = vunpack.c.l.b16 %v4522
        %v4591 = vunpack.c.l.b16 %v4523
        %v4592 = vunpack.c.l.b16 %v4524
        %v4593 = vunpack.c.l.b16 %v4525
        %v4594 = vunpack.c.l.b16 %v4526
        %v4595 = vunpack.c.l.b16 %v4527
        %v4596 = vunpack.c.l.b16 %v4528
        %v4597 = vunpack.c.l.b16 %v4529
        %v4598 = vunpack.c.l.b16 %v4530
        %v4599 = vunpack.c.l.b16 %v4531
        %v4600 = vunpack.c.l.b16 %v4532
        %v4601 = vunpack.c.l.b16 %v4533
        %v4602 = vunpack.c.l.b16 %v4534
        %v4603 = vunpack.c.l.b16 %v4535
        %v4604 = vunpack.c.l.b16 %v4536
        %v4605 = vunpack.c.l.b16 %v4537
        %v4606 = vunpack.c.l.b16 %v4538
        %v4607 = vunpack.c.l.b16 %v4539
        %v4608 = vunpack.c.l.b16 %v4540
        %v4609 = vunpack.c.l.b16 %v4541
        %v4610 = vunpack.c.l.b16 %v4542
        %v4611 = vunpack.c.l.b16 %v4543
        %v4612 = vunpack.c.l.b16 %v4544
        %v4613 = vunpack.c.l.b16 %v4545
        %v4614 = vunpack.c.l.b16 %v4546
        %v4615 = vunpack.c.l.b16 %v4547
        %v4616 = vunpack.c.l.b16 %v4548
        %v4617 = vunpack.c.l.b16 %v4549
        %v4618 = vunpack.c.l.b16 %v4550
        %v4619 = vpack.c.b16 %v4588, %v4587
        %v4620 = vpack.c.b16 %v4590, %v4589
        %v4621 = vpack.c.b16 %v4592, %v4591
        %v4622 = vpack.c.b16 %v4594, %v4593
        %v4623 = vpack.c.b16 %v4596, %v4595
        %v4624 = vpack.c.b16 %v4598, %v4597
        %v4625 = vpack.c.b16 %v4600, %v4599
        %v4626 = vpack.c.b16 %v4602, %v4601
        %v4627 = vpack.c.b16 %v4604, %v4603
        %v4628 = vpack.c.b16 %v4606, %v4605
        %v4629 = vpack.c.b16 %v4608, %v4607
        %v4630 = vpack.c.b16 %v4610, %v4609
        %v4631 = vpack.c.b16 %v4612, %v4611
        %v4632 = vpack.c.b16 %v4614, %v4613
        %v4633 = vpack.c.b16 %v4616, %v4615
        %v4634 = vpack.c.b16 %v4618, %v4617
        %4651 = vmatpush.bf16.msra.mxu0 %v4626
        %4652 = vmatpush.bf16.msra.mxu0 %v4625
        %4653 = vmatpush.bf16.msra.mxu0 %v4624
        %4654 = vmatpush.bf16.msra.mxu0 %v4623
        %4655 = vmatpush.bf16.msra.mxu0 %v4622
        %4656 = vmatpush.bf16.msra.mxu0 %v4621
        %4657 = vmatpush.bf16.msra.mxu0 %v4620
        %4658 = vmatpush.bf16.msra.mxu0 %v4619
        %4659 = vmatmul.bf16.gmra.mxu0 %v4508
        %v4660 = vpop.f32.mrf.mxu0
        %v4661 = vadd.f32 %v4553, %v4660
        %v4662 = vpop.f32.mrf.mxu0
        %v4663 = vadd.f32 %v4553, %v4662
        %4664 = vmatmul.bf16.gmra.mxu0 %v4511
        %v4665 = vpop.f32.mrf.mxu0
        %v4666 = vadd.f32 %v4553, %v4665
        %v4667 = vpop.f32.mrf.mxu0
        %v4668 = vadd.f32 %v4553, %v4667
        %4669 = vmatmul.bf16.gmra.mxu0 %v4514
        %v4670 = vpop.f32.mrf.mxu0
        %v4671 = vadd.f32 %v4553, %v4670
        %v4672 = vpop.f32.mrf.mxu0
        %v4673 = vadd.f32 %v4553, %v4672
        %4674 = vmatmul.bf16.gmra.mxu0 %v4517
        %v4675 = vpop.f32.mrf.mxu0
        %v4676 = vadd.f32 %v4553, %v4675
        %v4677 = vpop.f32.mrf.mxu0
        %v4678 = vadd.f32 %v4553, %v4677
        %4679 = vdwg.mxu0
        %4680 = vmatpush.bf16.msra.mxu0 %v4634
        %4681 = vmatpush.bf16.msra.mxu0 %v4633
        %4682 = vmatpush.bf16.msra.mxu0 %v4632
        %4683 = vmatpush.bf16.msra.mxu0 %v4631
        %4684 = vmatpush.bf16.msra.mxu0 %v4630
        %4685 = vmatpush.bf16.msra.mxu0 %v4629
        %4686 = vmatpush.bf16.msra.mxu0 %v4628
        %4687 = vmatpush.bf16.msra.mxu0 %v4627
        %4688 = vmatmul.bf16.gmra.mxu0 %v3631
        %v4689 = vpop.f32.mrf.mxu0
        %v4690 = vadd.f32 %v4661, %v4689
        %v4691 = vpop.f32.mrf.mxu0
        %v4692 = vadd.f32 %v4663, %v4691
        %4693 = vmatmul.bf16.gmra.mxu0 %v3632
        %v4694 = vpop.f32.mrf.mxu0
        %v4695 = vadd.f32 %v4666, %v4694
        %v4696 = vpop.f32.mrf.mxu0
        %v4697 = vadd.f32 %v4668, %v4696
        %4698 = vmatmul.bf16.gmra.mxu0 %v3633
        %v4699 = vpop.f32.mrf.mxu0
        %v4700 = vadd.f32 %v4671, %v4699
        %v4701 = vpop.f32.mrf.mxu0
        %v4702 = vadd.f32 %v4673, %v4701
        %4703 = vmatmul.bf16.gmra.mxu0 %v3634
        %v4704 = vpop.f32.mrf.mxu0
        %v4705 = vadd.f32 %v4676, %v4704
        %v4706 = vpop.f32.mrf.mxu0
        %v4707 = vadd.f32 %v4678, %v4706
        %4708 = vdwg.mxu0
        %v4709 = vmul.f32 %v4690, 0.70710677
        %v4710 = vmul.f32 %v4692, 0.70710677
        %v4711 = vmul.f32 %v4695, 0.70710677
        %v4712 = vmul.f32 %v4697, 0.70710677
        %v4713 = vmul.f32 %v4700, 0.70710677
        %v4714 = vmul.f32 %v4702, 0.70710677
        %v4715 = vmul.f32 %v4705, 0.70710677
        %v4716 = vmul.f32 %v4707, 0.70710677
        %v4717 = vpack.c.bf16 %v4710, %v4709
        %v4718 = vpack.c.bf16 %v4712, %v4711
        %v4719 = vpack.c.bf16 %v4714, %v4713
        %v4720 = vpack.c.bf16 %v4716, %v4715
        %v4722 = vsel %vm4215, %v4717, 0
        %v4725 = vsel %vm4215, %v4718, 0
        %v4728 = vsel %vm4215, %v4719, 0
        %v4731 = vsel %vm4215, %v4720, 0
        %4733 = vmatpush.bf16.msra.mxu0 0
        %4734 = vmatpush.bf16.msra.mxu0 0
        %4735 = vmatpush.bf16.msra.mxu0 0
        %4736 = vmatpush.bf16.msra.mxu0 0
        %4737 = vmatpush.bf16.msra.mxu0 %v4210
        %4738 = vmatpush.bf16.msra.mxu0 %v4209
        %4739 = vmatpush.bf16.msra.mxu0 %v4208
        %4740 = vmatpush.bf16.msra.mxu0 %v4207
        %4741 = vmatmul.bf16.gmra.mxu0 %v4722
        %v4742 = vpop.f32.mrf.mxu0
        %v4743 = vadd.f32 0.0, %v4742
        %v4744 = vpop.f32.mrf.mxu0
        %v4745 = vadd.f32 0.0, %v4744
        %4746 = vmatmul.bf16.gmra.mxu0 %v4725
        %v4747 = vpop.f32.mrf.mxu0
        %v4748 = vadd.f32 0.0, %v4747
        %v4749 = vpop.f32.mrf.mxu0
        %v4750 = vadd.f32 0.0, %v4749
        %4751 = vmatmul.bf16.gmra.mxu0 %v4728
        %v4752 = vpop.f32.mrf.mxu0
        %v4753 = vadd.f32 0.0, %v4752
        %v4754 = vpop.f32.mrf.mxu0
        %v4755 = vadd.f32 0.0, %v4754
        %4756 = vmatmul.bf16.gmra.mxu0 %v4731
        %v4757 = vpop.f32.mrf.mxu0
        %v4758 = vadd.f32 0.0, %v4757
        %v4759 = vpop.f32.mrf.mxu0
        %v4760 = vadd.f32 0.0, %v4759
        %4761 = vdwg.mxu0
        %v4762 = vsub.f32 %v4709, %v4743
        %v4763 = vsub.f32 %v4710, %v4745
        %v4764 = vsub.f32 %v4711, %v4748
        %v4765 = vsub.f32 %v4712, %v4750
        %v4766 = vsub.f32 %v4713, %v4753
        %v4767 = vsub.f32 %v4714, %v4755
        %v4768 = vsub.f32 %v4715, %v4758
        %v4769 = vsub.f32 %v4716, %v4760
        %v4770 = vmul.f32 %v4762, %v4762
        %v4771 = vmul.f32 %v4763, %v4763
        %v4772 = vmul.f32 %v4764, %v4764
        %v4773 = vmul.f32 %v4765, %v4765
        %v4774 = vmul.f32 %v4766, %v4766
        %v4775 = vmul.f32 %v4767, %v4767
        %v4776 = vmul.f32 %v4768, %v4768
        %v4777 = vmul.f32 %v4769, %v4769
        %v4778 = vpack.c.bf16 %v4771, %v4770
        %v4779 = vpack.c.bf16 %v4773, %v4772
        %v4780 = vpack.c.bf16 %v4775, %v4774
        %v4781 = vpack.c.bf16 %v4777, %v4776
        %v4783 = vsel %vm4215, %v4778, 0
        %v4786 = vsel %vm4215, %v4779, 0
        %v4789 = vsel %vm4215, %v4780, 0
        %v4792 = vsel %vm4215, %v4781, 0
        %4794 = vmatpush.bf16.msra.mxu0 0
        %4795 = vmatpush.bf16.msra.mxu0 0
        %4796 = vmatpush.bf16.msra.mxu0 0
        %4797 = vmatpush.bf16.msra.mxu0 0
        %4798 = vmatpush.bf16.msra.mxu0 %v4210
        %4799 = vmatpush.bf16.msra.mxu0 %v4209
        %4800 = vmatpush.bf16.msra.mxu0 %v4208
        %4801 = vmatpush.bf16.msra.mxu0 %v4207
        %4802 = vmatmul.bf16.gmra.mxu0 %v4783
        %v4803 = vpop.f32.mrf.mxu0
        %v4804 = vadd.f32 1e-05, %v4803
        %v4805 = vpop.f32.mrf.mxu0
        %v4806 = vadd.f32 1e-05, %v4805
        %4807 = vmatmul.bf16.gmra.mxu0 %v4786
        %v4808 = vpop.f32.mrf.mxu0
        %v4809 = vadd.f32 1e-05, %v4808
        %v4810 = vpop.f32.mrf.mxu0
        %v4811 = vadd.f32 1e-05, %v4810
        %4812 = vmatmul.bf16.gmra.mxu0 %v4789
        %v4813 = vpop.f32.mrf.mxu0
        %v4814 = vadd.f32 1e-05, %v4813
        %v4815 = vpop.f32.mrf.mxu0
        %v4816 = vadd.f32 1e-05, %v4815
        %4817 = vmatmul.bf16.gmra.mxu0 %v4792
        %v4818 = vpop.f32.mrf.mxu0
        %v4819 = vadd.f32 1e-05, %v4818
        %v4820 = vpop.f32.mrf.mxu0
        %v4821 = vadd.f32 1e-05, %v4820
        %4822 = vdwg.mxu0
        %v4823 = vrsqrt.pop %v4804
        %v4824 = vmul.f32 %v4823, %v4804
        %v4825 = vmul.f32 %v4824, %v4823
        %v4826 = vmul.f32 0.5, %v4825
        %v4827 = vsub.f32 1.5, %v4826
        %v4828 = vmul.f32 %v4823, %v4827
        %vm4829 = vweird.f32 %v4804
        %vm4830 = vweird.f32 %v4823
        %vm4831 = vmor %vm4829, %vm4830
        %v4832 = vsel %vm4831, %v4823, %v4828
        %v4833 = vrsqrt.pop %v4806
        %v4834 = vmul.f32 %v4833, %v4806
        %v4835 = vmul.f32 %v4834, %v4833
        %v4836 = vmul.f32 0.5, %v4835
        %v4837 = vsub.f32 1.5, %v4836
        %v4838 = vmul.f32 %v4833, %v4837
        %vm4839 = vweird.f32 %v4806
        %vm4840 = vweird.f32 %v4833
        %vm4841 = vmor %vm4839, %vm4840
        %v4842 = vsel %vm4841, %v4833, %v4838
        %v4843 = vrsqrt.pop %v4809
        %v4844 = vmul.f32 %v4843, %v4809
        %v4845 = vmul.f32 %v4844, %v4843
        %v4846 = vmul.f32 0.5, %v4845
        %v4847 = vsub.f32 1.5, %v4846
        %v4848 = vmul.f32 %v4843, %v4847
        %vm4849 = vweird.f32 %v4809
        %vm4850 = vweird.f32 %v4843
        %vm4851 = vmor %vm4849, %vm4850
        %v4852 = vsel %vm4851, %v4843, %v4848
        %v4853 = vrsqrt.pop %v4811
        %v4854 = vmul.f32 %v4853, %v4811
        %v4855 = vmul.f32 %v4854, %v4853
        %v4856 = vmul.f32 0.5, %v4855
        %v4857 = vsub.f32 1.5, %v4856
        %v4858 = vmul.f32 %v4853, %v4857
        %vm4859 = vweird.f32 %v4811
        %vm4860 = vweird.f32 %v4853
        %vm4861 = vmor %vm4859, %vm4860
        %v4862 = vsel %vm4861, %v4853, %v4858
        %v4863 = vrsqrt.pop %v4814
        %v4864 = vmul.f32 %v4863, %v4814
        %v4865 = vmul.f32 %v4864, %v4863
        %v4866 = vmul.f32 0.5, %v4865
        %v4867 = vsub.f32 1.5, %v4866
        %v4868 = vmul.f32 %v4863, %v4867
        %vm4869 = vweird.f32 %v4814
        %vm4870 = vweird.f32 %v4863
        %vm4871 = vmor %vm4869, %vm4870
        %v4872 = vsel %vm4871, %v4863, %v4868
        %v4873 = vrsqrt.pop %v4816
        %v4874 = vmul.f32 %v4873, %v4816
        %v4875 = vmul.f32 %v4874, %v4873
        %v4876 = vmul.f32 0.5, %v4875
        %v4877 = vsub.f32 1.5, %v4876
        %v4878 = vmul.f32 %v4873, %v4877
        %vm4879 = vweird.f32 %v4816
        %vm4880 = vweird.f32 %v4873
        %vm4881 = vmor %vm4879, %vm4880
        %v4882 = vsel %vm4881, %v4873, %v4878
        %v4883 = vrsqrt.pop %v4819
        %v4884 = vmul.f32 %v4883, %v4819
        %v4885 = vmul.f32 %v4884, %v4883
        %v4886 = vmul.f32 0.5, %v4885
        %v4887 = vsub.f32 1.5, %v4886
        %v4888 = vmul.f32 %v4883, %v4887
        %vm4889 = vweird.f32 %v4819
        %vm4890 = vweird.f32 %v4883
        %vm4891 = vmor %vm4889, %vm4890
        %v4892 = vsel %vm4891, %v4883, %v4888
        %v4893 = vrsqrt.pop %v4821
        %v4894 = vmul.f32 %v4893, %v4821
        %v4895 = vmul.f32 %v4894, %v4893
        %v4896 = vmul.f32 0.5, %v4895
        %v4897 = vsub.f32 1.5, %v4896
        %v4898 = vmul.f32 %v4893, %v4897
        %vm4899 = vweird.f32 %v4821
        %vm4900 = vweird.f32 %v4893
        %vm4901 = vmor %vm4899, %vm4900
        %v4902 = vsel %vm4901, %v4893, %v4898
        %v4903 = vmul.f32 %v4762, %v4832
        %v4904 = vmul.f32 %v4763, %v4842
        %v4905 = vmul.f32 %v4764, %v4852
        %v4906 = vmul.f32 %v4765, %v4862
        %v4907 = vmul.f32 %v4766, %v4872
        %v4908 = vmul.f32 %v4767, %v4882
        %v4909 = vmul.f32 %v4768, %v4892
        %v4910 = vmul.f32 %v4769, %v4902
        %v4911 = vld [vmem:[#allocation5 + $0x11] sm:$0x1]
        %v4913 = vperm.slane %v4911, 0
        %v4915 = vmul.f32 %v4903, %v4913
        %v4916 = vmul.f32 %v4904, %v4913
        %v4917 = vmul.f32 %v4905, %v4913
        %v4918 = vmul.f32 %v4906, %v4913
        %v4919 = vmul.f32 %v4907, %v4913
        %v4920 = vmul.f32 %v4908, %v4913
        %v4921 = vmul.f32 %v4909, %v4913
        %v4922 = vmul.f32 %v4910, %v4913
        %v4923 = vld [vmem:[#allocation5 + $0x12] sm:$0x1]
        %v4925 = vperm.slane %v4923, 0
        %v4927 = vadd.f32 %v4915, %v4925
        %v4928 = vadd.f32 %v4916, %v4925
        %v4929 = vadd.f32 %v4917, %v4925
        %v4930 = vadd.f32 %v4918, %v4925
        %v4931 = vadd.f32 %v4919, %v4925
        %v4932 = vadd.f32 %v4920, %v4925
        %v4933 = vadd.f32 %v4921, %v4925
        %v4934 = vadd.f32 %v4922, %v4925
        %v4935 = vsub.f32 0.0, %v4927
        %v4936 = vsub.f32 0.0, %v4928
        %v4937 = vsub.f32 0.0, %v4929
        %v4938 = vsub.f32 0.0, %v4930
        %v4939 = vsub.f32 0.0, %v4931
        %v4940 = vsub.f32 0.0, %v4932
        %v4941 = vsub.f32 0.0, %v4933
        %v4942 = vsub.f32 0.0, %v4934
        %v4943 = vmul.f32 %v4935, 1.442695
        %v4944 = vpow.pop %v4943
        %v4945 = vmul.f32 %v4936, 1.442695
        %v4946 = vpow.pop %v4945
        %v4947 = vmul.f32 %v4937, 1.442695
        %v4948 = vpow.pop %v4947
        %v4949 = vmul.f32 %v4938, 1.442695
        %v4950 = vpow.pop %v4949
        %v4951 = vmul.f32 %v4939, 1.442695
        %v4952 = vpow.pop %v4951
        %v4953 = vmul.f32 %v4940, 1.442695
        %v4954 = vpow.pop %v4953
        %v4955 = vmul.f32 %v4941, 1.442695
        %v4956 = vpow.pop %v4955
        %v4957 = vmul.f32 %v4942, 1.442695
        %v4958 = vpow.pop %v4957
        %v4959 = vadd.f32 %v4944, 1.0
        %v4960 = vadd.f32 %v4946, 1.0
        %v4961 = vadd.f32 %v4948, 1.0
        %v4962 = vadd.f32 %v4950, 1.0
        %v4963 = vadd.f32 %v4952, 1.0
        %v4964 = vadd.f32 %v4954, 1.0
        %v4965 = vadd.f32 %v4956, 1.0
        %v4966 = vadd.f32 %v4958, 1.0
        %v4967 = vrcp.pop %v4959
        %v4968 = vrcp.pop %v4960
        %v4969 = vrcp.pop %v4961
        %v4970 = vrcp.pop %v4962
        %v4971 = vrcp.pop %v4963
        %v4972 = vrcp.pop %v4964
        %v4973 = vrcp.pop %v4965
        %v4974 = vrcp.pop %v4966
        %v4975 = vmul.f32 %v4927, %v4967
        %v4976 = vmul.f32 %v4928, %v4968
        %v4977 = vmul.f32 %v4929, %v4969
        %v4978 = vmul.f32 %v4930, %v4970
        %v4979 = vmul.f32 %v4931, %v4971
        %v4980 = vmul.f32 %v4932, %v4972
        %v4981 = vmul.f32 %v4933, %v4973
        %v4982 = vmul.f32 %v4934, %v4974
        %v4983 = vpack.c.bf16 %v4976, %v4975
        %v4984 = vpack.c.bf16 %v4978, %v4977
        %v4985 = vpack.c.bf16 %v4980, %v4979
        %v4986 = vpack.c.bf16 %v4982, %v4981
        %v4987 = vld [vmem:[#allocation10] sm:$0xf]
        %v4988 = vld [vmem:[#allocation10 + $0x4] sm:$0xf]
        %v4989 = vld [vmem:[#allocation10 + $0x8] sm:$0xf]
        %v4990 = vld [vmem:[#allocation10 + $0xc] sm:$0xf]
        %v4991 = vld [vmem:[#allocation10 + $0x10] sm:$0xf]
        %v4992 = vld [vmem:[#allocation10 + $0x14] sm:$0xf]
        %v4993 = vld [vmem:[#allocation10 + $0x18] sm:$0xf]
        %v4994 = vld [vmem:[#allocation10 + $0x1c] sm:$0xf]
        %v5003 = vunpack.c.l.b16 %v4987
        %v5004 = vunpack.c.l.b16 %v4988
        %v5005 = vunpack.c.l.b16 %v4989
        %v5006 = vunpack.c.l.b16 %v4990
        %v5007 = vunpack.c.l.b16 %v4991
        %v5008 = vunpack.c.l.b16 %v4992
        %v5009 = vunpack.c.l.b16 %v4993
        %v5010 = vunpack.c.l.b16 %v4994
        %v5011 = vpack.c.b16 %v5004, %v5003
        %v5012 = vpack.c.b16 %v5006, %v5005
        %v5013 = vpack.c.b16 %v5008, %v5007
        %v5014 = vpack.c.b16 %v5010, %v5009
        %v5020 = vsel %vm4215, %v4983, 0
        %v5023 = vsel %vm4215, %v4984, 0
        %v5026 = vsel %vm4215, %v4985, 0
        %v5029 = vsel %vm4215, %v4986, 0
        %5031 = vmatpush.bf16.msra.mxu0 0
        %5032 = vmatpush.bf16.msra.mxu0 0
        %5033 = vmatpush.bf16.msra.mxu0 0
        %5034 = vmatpush.bf16.msra.mxu0 0
        %5035 = vmatpush.bf16.msra.mxu0 %v5014
        %5036 = vmatpush.bf16.msra.mxu0 %v5013
        %5037 = vmatpush.bf16.msra.mxu0 %v5012
        %5038 = vmatpush.bf16.msra.mxu0 %v5011
        %5039 = vmatmul.bf16.gmra.mxu0 %v5020
        %v5040 = vpop.f32.mrf.mxu0
        %v5041 = vadd.f32 0.0, %v5040
        %v5042 = vpop.f32.mrf.mxu0
        %v5043 = vadd.f32 0.0, %v5042
        %5044 = vmatmul.bf16.gmra.mxu0 %v5023
        %v5045 = vpop.f32.mrf.mxu0
        %v5046 = vadd.f32 0.0, %v5045
        %v5047 = vpop.f32.mrf.mxu0
        %v5048 = vadd.f32 0.0, %v5047
        %5049 = vmatmul.bf16.gmra.mxu0 %v5026
        %v5050 = vpop.f32.mrf.mxu0
        %v5051 = vadd.f32 0.0, %v5050
        %v5052 = vpop.f32.mrf.mxu0
        %v5053 = vadd.f32 0.0, %v5052
        %5054 = vmatmul.bf16.gmra.mxu0 %v5029
        %v5055 = vpop.f32.mrf.mxu0
        %v5056 = vadd.f32 0.0, %v5055
        %v5057 = vpop.f32.mrf.mxu0
        %v5058 = vadd.f32 0.0, %v5057
        %5059 = vdwg.mxu0
        %v5060 = vsub.f32 %v5041, %v558
        %v5061 = vsub.f32 %v5043, %v561
        %v5062 = vsub.f32 %v5046, %v564
        %v5063 = vsub.f32 %v5048, %v567
        %v5064 = vsub.f32 %v5051, %v570
        %v5065 = vsub.f32 %v5053, %v573
        %v5066 = vsub.f32 %v5056, %v576
        %v5067 = vsub.f32 %v5058, %v579
        %v5068 = vmul.f32 %v5060, %v5060
        %v5069 = vmul.f32 %v5061, %v5061
        %v5070 = vmul.f32 %v5062, %v5062
        %v5071 = vmul.f32 %v5063, %v5063
        %v5072 = vmul.f32 %v5064, %v5064
        %v5073 = vmul.f32 %v5065, %v5065
        %v5074 = vmul.f32 %v5066, %v5066
        %v5075 = vmul.f32 %v5067, %v5067
        %5076 = vst [vmem:[%s547] sm:$0xff] %v5068
        %5077 = vst [vmem:[%s547 + $0x8] sm:$0xff] %v5069
        %5078 = vst [vmem:[%s547 + $0x10] sm:$0xff] %v5070
        %5079 = vst [vmem:[%s547 + $0x18] sm:$0xff] %v5071
        %5080 = vst [vmem:[%s547 + $0x20] sm:$0xff] %v5072
        %5081 = vst [vmem:[%s547 + $0x28] sm:$0xff] %v5073
        %5082 = vst [vmem:[%s547 + $0x30] sm:$0xff] %v5074
        %5083 = vst [vmem:[%s547 + $0x38] sm:$0xff] %v5075
        %s5084 = sand.u32 %s302, 1
        %s5085 = scalar_lea.sflag [#allocation4], %s5084
        %s5086 = sand.u32 %s302, 1
        %s5087 = smul.addr %s5086, 64
        %s5088 = scalar_lea.vmem [#allocation14], %s5087
        // Predicated region
        $region97: #{tpu_custom_call.1} parent=67 // pred_check
          %p5089 = pneg %p312
        $region98: #{tpu_custom_call.1} parent=67 // pred_check_branch
          %5091 = sbr.rel (%p5089) target = $region100
        $region99: #{tpu_custom_call.1} parent=67 // pred_region
          %s5092 = smul.u32 8, %s32
          %5094 = vsyncadd %s5085, 0
          %s5095 = smul.addr %s5092, 8
          %s5096 = scalar_lea.hbm %s12, %s5095
          %s5097 = sshll.u32 %s5088, 4
          %s5098 = int_to_ptr.vmem [resolvable:$true] %s5097
          %s5099 = sshll.u32 %s5096, 4
          %s5100 = int_to_ptr.hbm [resolvable:$true] %s5099
          %5105 = dma.vmem_to_hbm [thread:$0]  %s5098, 1024, %s5100, %s5085, 128, 128, 8
        $region100: #{tpu_custom_call.1} parent=67 // pred_fallthru
          _
      $region68: #{tpu_custom_call.1} parent=5 // pred_fallthru
        _
      %p5106 = scmp.le.s32.totalorder 2, %s27
      // Predicated region
      $region101: #{tpu_custom_call.1} parent=5 // pred_check
        %p5107 = pneg %p5106
      $region102: #{tpu_custom_call.1} parent=5 // pred_check_branch
        %5109 = sbr.rel (%p5107) target = $region104
      $region103: #{tpu_custom_call.1} parent=5 // pred_region
        %s5110 = ssub.s32 %s27, 2
        // Predicated region
        $region105: #{tpu_custom_call.1} parent=103 // pred_check
          %p5111 = pneg %p318
        $region106: #{tpu_custom_call.1} parent=103 // pred_check_branch
          %5113 = sbr.rel (%p5111) target = $region108
        $region107: #{tpu_custom_call.1} parent=103 // pred_region
          %s5114 = sand.u32 %s303, 1
          %s5115 = scalar_lea.sflag [#allocation4], %s5114
          %s5116 = sand.u32 %s303, 1
          %s5117 = smul.addr %s5116, 64
          %s5118 = scalar_lea.vmem [#allocation14], %s5117
          %5120 = dma.done %s5115, 1024
        $region108: #{tpu_custom_call.1} parent=103 // pred_fallthru
          _
      $region104: #{tpu_custom_call.1} parent=5 // pred_fallthru
        _
    $region6: #{tpu_custom_call.1} parent=1 // loop_footer
      %s31 = sadd.s32 1, %s27
    $region7: #{tpu_custom_call.1} parent=1 // loop_footer_branch
      %26 = sbr.rel target = $region3
    $region8: #{tpu_custom_call.1} parent=1 // loop_exit
      _
    %5121 = vsyncpa [#allocation3], 1
    %s5122 = scalar_lea.sflag [#allocation3], 1
    %5123 = vsyncpa %s5122, 1
    %5124 = vsyncpa [#allocation6], 1
    %5125 = vsyncpa [#allocation9], 1
    %5126 = vsyncpa [#allocation12], 1
    %5127 = vsyncpa [#allocation4], 1
    %s5128 = scalar_lea.sflag [#allocation4], 1
    %5129 = vsyncpa %s5128, 1

</llo_original>
